<compile_context>
chip_gen: v7x
topology: tpu7x:2x2x1
jax: 0.10.0
libtpu: 0.0.40
codegen_flags: <defaults>
</compile_context>

<pallas_src>
import math
import time

import numpy as np

import jax
import jax.numpy as jnp
from jax import lax
from jax.experimental import pallas as pl
from jax.experimental.pallas import tpu as pltpu

SCALE = 0.0472
INV_SCALE = 1.0 / SCALE
ZERO_POINT = 64
QMIN = 0.0
QMAX = 255.0

_VMEM_LIMIT = 32 * 1024 * 1024           # safe on v5e/v6e/v7x
_RELU_BLOCK_ROWS = 512                   # 512 x <=1024 lanes x 4B = <=2 MiB / in-block
_MAXPOOL_BLOCK_BUDGET = 2 * 1024 * 1024  # f32 input bytes per maxpool block (v7x-safe)


# ---------------------------------------------------------------------------
# Kernels
# ---------------------------------------------------------------------------
def quant_relu_kernel(x_ref, o_ref):
    # Quantized ReLU: relu(dequant(q)) requantized == clip(round(x/s)+zp, zp, 255).
    # (lower clip bound 0 is folded into the ReLU max with zp.)
    q = jnp.round(x_ref[...] * INV_SCALE) + ZERO_POINT
    q = jnp.clip(q, float(ZERO_POINT), QMAX)
    o_ref[...] = q.astype(jnp.int32).astype(jnp.uint8)


def quant_maxpool_kernel(rsel_ref, csel_ref, x_ref, o_ref):
    # MaxPool2d(kernel=3, stride=2, padding=1) fused with per-tensor quantize.
    #   rsel_ref: (3, Ho, H) bf16 0/1 row selectors   (channel-shared, resident)
    #   csel_ref: (3, W, Wo) bf16 0/1 column selectors (channel-shared, resident)
    #   x_ref:    (cb, H, W) f32 planes
    #   o_ref:    (cb, Ho, Wo) uint8 codes
    cb, H, W = x_ref.shape
    _, Ho, Wo = o_ref.shape

    # Quantize the whole tile once. Codes are exact small integers (0..255),
    # hence exactly representable in bf16 -> every matmul below is bit-exact.
    q = jnp.clip(jnp.round(x_ref[...] * INV_SCALE) + ZERO_POINT, QMIN, QMAX)
    qb = q.astype(jnp.bfloat16)                                    # (cb, H, W)

    # 3-tap max fused with the stride-2 downsample along H: each tap is a
    # 0/1 row-selection matmul on the otherwise-idle MXU (rows clamp(2i-1),
    # 2i, clamp(2i+1); clamping duplicates an in-window row at the border,
    # which is harmless under max).
    def rows(t):
        sel = jnp.broadcast_to(rsel_ref[t], (cb, Ho, H))
        return jnp.einsum("cih,chw->ciw", sel, qb,
                          preferred_element_type=jnp.float32)
    mh = jnp.maximum(jnp.maximum(rows(0), rows(1)), rows(2))        # (cb, Ho, W)
    mhb = mh.astype(jnp.bfloat16)                                   # still exact codes

    # Same trick along W (columns clamp(2j-1), 2j, clamp(2j+1)).
    def cols(t):
        sel = jnp.broadcast_to(csel_ref[t], (cb, W, Wo))
        return jnp.einsum("ciw,cwo->cio", mhb, sel,
                          preferred_element_type=jnp.float32)
    out = jnp.maximum(jnp.maximum(cols(0), cols(1)), cols(2))       # (cb, Ho, Wo)

    o_ref[...] = out.astype(jnp.int32).astype(jnp.uint8)


# ---------------------------------------------------------------------------
# Wrappers (glue)
# ---------------------------------------------------------------------------
def _relu_layout(total):
    """Pick a lane-dense (rows, lane) layout and a row tile."""
    lane = 128
    for cand in (1024, 512, 256, 128):
        if total % cand == 0:
            lane = cand
            break
    rows = pl.cdiv(total, lane)
    # Cap the row tile at 512 so large tensors get >=4 grid steps
    # (v7x 2-TC sharding + DMA overlap); small tensors stay single-block.
    tm = rows if rows <= _RELU_BLOCK_ROWS else _RELU_BLOCK_ROWS
    return lane, tm, rows


@jax.jit
def quantized_relu(x):
    """x: (N, C, H, W) float32 -> quint8-like uint8 of the same shape."""
    total = math.prod(x.shape)
    lane, tm, rows = _relu_layout(total)
    padded = rows * lane

    if padded == total:                 # the common path: zero copy passes
        x2 = x.reshape(rows, lane)
    else:                               # rare fallback; never hit for this module
        x2 = jnp.pad(x.reshape(-1), (0, padded - total)).reshape(rows, lane)

    out = pl.pallas_call(
        quant_relu_kernel,
        out_shape=jax.ShapeDtypeStruct((rows, lane), jnp.uint8),
        grid=(pl.cdiv(rows, tm),),      # partial last block is fine (masked stores)
        in_specs=[pl.BlockSpec((tm, lane), lambda m: (m, 0))],
        out_specs=pl.BlockSpec((tm, lane), lambda m: (m, 0)),
        compiler_params=pltpu.CompilerParams(
            dimension_semantics=("parallel",),
            vmem_limit_bytes=_VMEM_LIMIT,
        ),
    )(x2)

    if padded == total:
        return out.reshape(x.shape)
    return out.reshape(-1)[:total].reshape(x.shape)


def _pool_selectors(H, W, Ho, Wo):
    """Channel-shared 0/1 selection matrices for the 3 window taps (host consts)."""
    def taps(n_out, n_in):
        center = 2 * np.arange(n_out)
        t = np.stack([np.clip(center - 1, 0, n_in - 1),
                      center,
                      np.clip(center + 1, 0, n_in - 1)])            # (3, n_out)
        return (t[:, :, None] == np.arange(n_in)[None, None, :]).astype(np.float32)

    rsel = taps(Ho, H)                                  # (3, Ho, H): pick row tap
    csel = np.transpose(taps(Wo, W), (0, 2, 1))         # (3, W, Wo): pick col tap
    return jnp.asarray(rsel, jnp.bfloat16), jnp.asarray(csel, jnp.bfloat16)


@jax.jit
def quantized_maxpool_3x3_s2_p1(x):
    """x: (N, C, H, W) float32 -> quint8-like uint8 (N, C, Ho, Wo)."""
    N, C, H, W = x.shape
    Ho = (H - 1) // 2 + 1
    Wo = (W - 1) // 2 + 1
    P = N * C
    x3 = x.reshape(P, H, W)

    rsel, csel = _pool_selectors(H, W, Ho, Wo)          # trace-time constants

    # Batch as many planes per grid step as the (v7x-safe) VMEM budget allows;
    # a partial last block keeps cb at the cap for awkward plane counts.
    plane_bytes = H * W * 4
    cb = max(1, min(P, _MAXPOOL_BLOCK_BUDGET // plane_bytes))
    grid = (pl.cdiv(P, cb),)

    out = pl.pallas_call(
        quant_maxpool_kernel,
        out_shape=jax.ShapeDtypeStruct((P, Ho, Wo), jnp.uint8),
        grid=grid,
        in_specs=[
            pl.BlockSpec((3, Ho, H), lambda p: (0, 0, 0)),   # DMA'd once, resident
            pl.BlockSpec((3, W, Wo), lambda p: (0, 0, 0)),   # DMA'd once, resident
            pl.BlockSpec((cb, H, W), lambda p: (p, 0, 0)),
        ],
        out_specs=pl.BlockSpec((cb, Ho, Wo), lambda p: (p, 0, 0)),
        compiler_params=pltpu.CompilerParams(
            dimension_semantics=("parallel",),
            vmem_limit_bytes=_VMEM_LIMIT,
        ),
    )(rsel, csel, x3)
    return out.reshape(N, C, Ho, Wo)


# ---------------------------------------------------------------------------
# Module analogue
# ---------------------------------------------------------------------------
class ResNet18:
    """Mirror of the PyTorch latency-probe module (no learned weights).

    Shapes are scaled down from [B,64,112,112]... to keep the demo small,
    preserving the op semantics (quantize -> maxpool/relu on quint8 codes).
    """

    def __init__(self, batch_size=2):
        self.x1 = [batch_size, 8, 16, 16]
        self.OP1 = quantized_maxpool_3x3_s2_p1   # nn.MaxPool2d(3, 2, 1, 1)
        self.x3 = [batch_size, 8, 8, 8]
        self.OP3 = quantized_relu                # nn.ReLU()
        self.x6 = [batch_size, 8, 8, 8]
        self.OP6 = quantized_relu
        self.x9 = [batch_size, 16, 4, 4]
        self.OP9 = quantized_relu
        self.x13 = [batch_size, 16, 4, 4]
        self.OP13 = quantized_relu
        self.x16 = [batch_size, 32, 4, 4]
        self.OP16 = quantized_relu
        self.x20 = [batch_size, 32, 4, 4]
        self.OP20 = quantized_relu
        self.x23 = [batch_size, 64, 2, 2]
        self.OP23 = quantized_relu
        self.x27 = [batch_size, 64, 2, 2]
        self.OP27 = quantized_relu
        self.time = {}

    def forward(self, i, x=None):
        if hasattr(self, "OP{}".format(i)):
            shape = getattr(self, "x{}".format(i))
            if x is None:
                x = jax.random.uniform(jax.random.PRNGKey(i), tuple(shape),
                                       jnp.float32)
            op = getattr(self, "OP{}".format(i))
            start = time.time()
            out = jax.block_until_ready(op(x))
            stop = time.time()
            self.time["OP{}".format(i)] = stop - start
            return out
        print("no {}".format(i))
        return None


# ---------------------------------------------------------------------------
# Pure-JAX references for verification
# ---------------------------------------------------------------------------
def _ref_quant(x):
    return jnp.clip(jnp.round(x * INV_SCALE) + ZERO_POINT, QMIN, QMAX)


def _ref_relu(x):
    return jnp.maximum(_ref_quant(x), float(ZERO_POINT)).astype(jnp.uint8)


def _ref_maxpool(x):
    q = _ref_quant(x)
    pooled = lax.reduce_window(
        q, -jnp.inf, lax.max,
        window_dimensions=(1, 1, 3, 3),
        window_strides=(1, 1, 2, 2),
        padding=((0, 0), (0, 0), (1, 1), (1, 1)),
    )
    return pooled.astype(jnp.uint8)


if __name__ == "__main__":
    model = ResNet18(batch_size=2)

    key = jax.random.PRNGKey(0)
    inputs = {}
    for idx in (1, 3, 6, 9, 13, 16, 20, 23, 27):
        key, sub = jax.random.split(key)
        inputs[idx] = jax.random.uniform(
            sub, tuple(getattr(model, "x{}".format(idx))), jnp.float32
        )

    outputs = {}
    for idx, xin in inputs.items():
        outputs[idx] = model.forward(idx, xin)

    # Verify against pure-JAX references (bit-exact).
    ref1 = _ref_maxpool(inputs[1])
    assert outputs[1].shape == ref1.shape and outputs[1].dtype == jnp.uint8
    assert bool(jnp.array_equal(outputs[1], ref1)), "maxpool mismatch"
    for idx in (3, 6, 9, 13, 16, 20, 23, 27):
        ref = _ref_relu(inputs[idx])
        assert outputs[idx].shape == ref.shape and outputs[idx].dtype == jnp.uint8
        assert bool(jnp.array_equal(outputs[idx], ref)), f"relu mismatch for OP{idx}"

    print("KERNEL_OK")
</pallas_src>

<mosaic_0001>
module attributes {stable_mosaic.version = 11 : i64} {
  func.func @quant_maxpool_kernel(%arg0: i32, %arg1: memref<3x8x16xbf16, #tpu.memory_space<vmem>>, %arg2: memref<3x16x8xbf16, #tpu.memory_space<vmem>>, %arg3: memref<16x16x16xf32, #tpu.memory_space<vmem>>, %arg4: memref<16x8x8xi8, #tpu.memory_space<vmem>>) attributes {dimension_semantics = [#tpu.dimension_semantics<parallel>], iteration_bounds = array<i64: 1>, scalar_prefetch = 0 : i64, scratch_operands = 0 : i64, tpu.core_type = #tpu.core_type<tc>, window_params = [{pipeline_mode = #tpu.pipeline_mode<synchronous>, transform_indices = @transform_0, window_bounds = array<i64: 3, 8, 16>}, {pipeline_mode = #tpu.pipeline_mode<synchronous>, transform_indices = @transform_1, window_bounds = array<i64: 3, 16, 8>}, {transform_indices = @transform_2, window_bounds = array<i64: 16, 16, 16>}, {transform_indices = @transform_3, window_bounds = array<i64: 16, 8, 8>}]} {
    %c0 = arith.constant 0 : index
    %c0_0 = arith.constant 0 : index
    %c0_1 = arith.constant 0 : index
    %0 = vector.load %arg3[%c0, %c0_0, %c0_1] : memref<16x16x16xf32, #tpu.memory_space<vmem>>, vector<16x16x16xf32>
    %cst = arith.constant 21.1864414 : f32
    %1 = vector.broadcast %cst : f32 to vector<16x16x16xf32>
    %2 = arith.mulf %0, %1 : vector<16x16x16xf32>
    %3 = math.roundeven %2 : vector<16x16x16xf32>
    %cst_2 = arith.constant 6.400000e+01 : f32
    %4 = vector.broadcast %cst_2 : f32 to vector<16x16x16xf32>
    %5 = arith.addf %3, %4 : vector<16x16x16xf32>
    %cst_3 = arith.constant 0.000000e+00 : f32
    %cst_4 = arith.constant 2.550000e+02 : f32
    %6 = vector.broadcast %cst_3 : f32 to vector<16x16x16xf32>
    %7 = arith.maximumf %6, %5 : vector<16x16x16xf32>
    %8 = vector.broadcast %cst_4 : f32 to vector<16x16x16xf32>
    %9 = arith.minimumf %8, %7 : vector<16x16x16xf32>
    %10 = arith.truncf %9 : vector<16x16x16xf32> to vector<16x16x16xbf16>
    %c0_5 = arith.constant 0 : index
    %c0_6 = arith.constant 0 : index
    %c0_7 = arith.constant 0 : index
    %11 = vector.load %arg1[%c0_5, %c0_6, %c0_7] : memref<3x8x16xbf16, #tpu.memory_space<vmem>>, vector<1x8x16xbf16>
    %12 = vector.shape_cast %11 : vector<1x8x16xbf16> to vector<8x16xbf16>
    %13 = vector.shape_cast %12 : vector<8x16xbf16> to vector<1x8x16xbf16>
    %14 = vector.broadcast %13 : vector<1x8x16xbf16> to vector<16x8x16xbf16>
    "tpu.trace_start"() <{level = 10 : i32, message = "cih,chw->ciw"}> : () -> ()
    %cst_8 = arith.constant dense<0.000000e+00> : vector<16x8x16xf32>
    %15 = tpu.matmul %14, %10, %cst_8 {dimension_numbers = #tpu.dot_dimension_numbers<[2], [1], [1], [2], [0, 0, 0, 1, 1, 2], [0], [0]>} : vector<16x8x16xbf16>, vector<16x16x16xbf16>, vector<16x8x16xf32> -> vector<16x8x16xf32>
    "tpu.trace_stop"() : () -> ()
    %c1 = arith.constant 1 : index
    %c0_9 = arith.constant 0 : index
    %c0_10 = arith.constant 0 : index
    %16 = vector.load %arg1[%c1, %c0_9, %c0_10] : memref<3x8x16xbf16, #tpu.memory_space<vmem>>, vector<1x8x16xbf16>
    %17 = vector.shape_cast %16 : vector<1x8x16xbf16> to vector<8x16xbf16>
    %18 = vector.shape_cast %17 : vector<8x16xbf16> to vector<1x8x16xbf16>
    %19 = vector.broadcast %18 : vector<1x8x16xbf16> to vector<16x8x16xbf16>
    "tpu.trace_start"() <{level = 10 : i32, message = "cih,chw->ciw"}> : () -> ()
    %cst_11 = arith.constant dense<0.000000e+00> : vector<16x8x16xf32>
    %20 = tpu.matmul %19, %10, %cst_11 {dimension_numbers = #tpu.dot_dimension_numbers<[2], [1], [1], [2], [0, 0, 0, 1, 1, 2], [0], [0]>} : vector<16x8x16xbf16>, vector<16x16x16xbf16>, vector<16x8x16xf32> -> vector<16x8x16xf32>
    "tpu.trace_stop"() : () -> ()
    %21 = arith.maximumf %15, %20 : vector<16x8x16xf32>
    %c2 = arith.constant 2 : index
    %c0_12 = arith.constant 0 : index
    %c0_13 = arith.constant 0 : index
    %22 = vector.load %arg1[%c2, %c0_12, %c0_13] : memref<3x8x16xbf16, #tpu.memory_space<vmem>>, vector<1x8x16xbf16>
    %23 = vector.shape_cast %22 : vector<1x8x16xbf16> to vector<8x16xbf16>
    %24 = vector.shape_cast %23 : vector<8x16xbf16> to vector<1x8x16xbf16>
    %25 = vector.broadcast %24 : vector<1x8x16xbf16> to vector<16x8x16xbf16>
    "tpu.trace_start"() <{level = 10 : i32, message = "cih,chw->ciw"}> : () -> ()
    %cst_14 = arith.constant dense<0.000000e+00> : vector<16x8x16xf32>
    %26 = tpu.matmul %25, %10, %cst_14 {dimension_numbers = #tpu.dot_dimension_numbers<[2], [1], [1], [2], [0, 0, 0, 1, 1, 2], [0], [0]>} : vector<16x8x16xbf16>, vector<16x16x16xbf16>, vector<16x8x16xf32> -> vector<16x8x16xf32>
    "tpu.trace_stop"() : () -> ()
    %27 = arith.maximumf %21, %26 : vector<16x8x16xf32>
    %28 = arith.truncf %27 : vector<16x8x16xf32> to vector<16x8x16xbf16>
    %c0_15 = arith.constant 0 : index
    %c0_16 = arith.constant 0 : index
    %c0_17 = arith.constant 0 : index
    %29 = vector.load %arg2[%c0_15, %c0_16, %c0_17] : memref<3x16x8xbf16, #tpu.memory_space<vmem>>, vector<1x16x8xbf16>
    %30 = vector.shape_cast %29 : vector<1x16x8xbf16> to vector<16x8xbf16>
    %31 = vector.shape_cast %30 : vector<16x8xbf16> to vector<1x16x8xbf16>
    %32 = vector.broadcast %31 : vector<1x16x8xbf16> to vector<16x16x8xbf16>
    "tpu.trace_start"() <{level = 10 : i32, message = "ciw,cwo->cio"}> : () -> ()
    %cst_18 = arith.constant dense<0.000000e+00> : vector<16x8x8xf32>
    %33 = tpu.matmul %28, %32, %cst_18 {dimension_numbers = #tpu.dot_dimension_numbers<[2], [1], [1], [2], [0, 0, 0, 1, 1, 2], [0], [0]>} : vector<16x8x16xbf16>, vector<16x16x8xbf16>, vector<16x8x8xf32> -> vector<16x8x8xf32>
    "tpu.trace_stop"() : () -> ()
    %c1_19 = arith.constant 1 : index
    %c0_20 = arith.constant 0 : index
    %c0_21 = arith.constant 0 : index
    %34 = vector.load %arg2[%c1_19, %c0_20, %c0_21] : memref<3x16x8xbf16, #tpu.memory_space<vmem>>, vector<1x16x8xbf16>
    %35 = vector.shape_cast %34 : vector<1x16x8xbf16> to vector<16x8xbf16>
    %36 = vector.shape_cast %35 : vector<16x8xbf16> to vector<1x16x8xbf16>
    %37 = vector.broadcast %36 : vector<1x16x8xbf16> to vector<16x16x8xbf16>
    "tpu.trace_start"() <{level = 10 : i32, message = "ciw,cwo->cio"}> : () -> ()
    %cst_22 = arith.constant dense<0.000000e+00> : vector<16x8x8xf32>
    %38 = tpu.matmul %28, %37, %cst_22 {dimension_numbers = #tpu.dot_dimension_numbers<[2], [1], [1], [2], [0, 0, 0, 1, 1, 2], [0], [0]>} : vector<16x8x16xbf16>, vector<16x16x8xbf16>, vector<16x8x8xf32> -> vector<16x8x8xf32>
    "tpu.trace_stop"() : () -> ()
    %39 = arith.maximumf %33, %38 : vector<16x8x8xf32>
    %c2_23 = arith.constant 2 : index
    %c0_24 = arith.constant 0 : index
    %c0_25 = arith.constant 0 : index
    %40 = vector.load %arg2[%c2_23, %c0_24, %c0_25] : memref<3x16x8xbf16, #tpu.memory_space<vmem>>, vector<1x16x8xbf16>
    %41 = vector.shape_cast %40 : vector<1x16x8xbf16> to vector<16x8xbf16>
    %42 = vector.shape_cast %41 : vector<16x8xbf16> to vector<1x16x8xbf16>
    %43 = vector.broadcast %42 : vector<1x16x8xbf16> to vector<16x16x8xbf16>
    "tpu.trace_start"() <{level = 10 : i32, message = "ciw,cwo->cio"}> : () -> ()
    %cst_26 = arith.constant dense<0.000000e+00> : vector<16x8x8xf32>
    %44 = tpu.matmul %28, %43, %cst_26 {dimension_numbers = #tpu.dot_dimension_numbers<[2], [1], [1], [2], [0, 0, 0, 1, 1, 2], [0], [0]>} : vector<16x8x16xbf16>, vector<16x16x8xbf16>, vector<16x8x8xf32> -> vector<16x8x8xf32>
    "tpu.trace_stop"() : () -> ()
    %45 = arith.maximumf %39, %44 : vector<16x8x8xf32>
    %46 = arith.fptosi %45 : vector<16x8x8xf32> to vector<16x8x8xi32>
    %47 = arith.trunci %46 : vector<16x8x8xi32> to vector<16x8x8xi8>
    %c0_27 = arith.constant 0 : index
    %c0_28 = arith.constant 0 : index
    %c0_29 = arith.constant 0 : index
    %48 = vector.load %arg4[%c0_27, %c0_28, %c0_29] : memref<16x8x8xi8, #tpu.memory_space<vmem>>, vector<16x8x8xi8>
    tpu.vector_store %arg4[%c0_27, %c0_28, %c0_29], %47 {strides = array<i32>} : memref<16x8x8xi8, #tpu.memory_space<vmem>>, vector<16x8x8xi8>,
    return
  }
  func.func @transform_0(%arg0: i32) -> (i32, i32, i32) {
    %c0_i32 = arith.constant 0 : i32
    %c0_i32_0 = arith.constant 0 : i32
    %c0_i32_1 = arith.constant 0 : i32
    %c0_i32_2 = arith.constant 0 : i32
    return %c0_i32, %c0_i32_0, %c0_i32_1 : i32, i32, i32
  }
  func.func @transform_1(%arg0: i32) -> (i32, i32, i32) {
    %c0_i32 = arith.constant 0 : i32
    %c0_i32_0 = arith.constant 0 : i32
    %c0_i32_1 = arith.constant 0 : i32
    %c0_i32_2 = arith.constant 0 : i32
    return %c0_i32, %c0_i32_0, %c0_i32_1 : i32, i32, i32
  }
  func.func @transform_2(%arg0: i32) -> (i32, i32, i32) {
    %c0_i32 = arith.constant 0 : i32
    %c0_i32_0 = arith.constant 0 : i32
    %c0_i32_1 = arith.constant 0 : i32
    return %arg0, %c0_i32, %c0_i32_0 : i32, i32, i32
  }
  func.func @transform_3(%arg0: i32) -> (i32, i32, i32) {
    %c0_i32 = arith.constant 0 : i32
    %c0_i32_0 = arith.constant 0 : i32
    %c0_i32_1 = arith.constant 0 : i32
    return %arg0, %c0_i32, %c0_i32_0 : i32, i32, i32
  }
}

</mosaic_0001>

<llo_original>
// kernel: quantized_maxpool_3x3_s2_p1.1
$region0: #{quantized_maxpool_3x3_s2_p1.1}
  #allocation0 [shape = 'u32[]', space=smem, size = 0x4, offset = 0x4, fixed_abs, tag = 'smem constant byte address 0x4 - core index']
  #allocation1 [shape = 'u32[144,128]{1,0:T(1,128)}', space=vmem, size = 0x12000, scoped, tag = 'internal scratch']
  %s0 = inlined_call_operand.hbm [shape: bf16[3,8,16], index: 0, kind: input, shape index: {}]
  %s1 = inlined_call_operand.hbm [shape: bf16[3,16,8], index: 1, kind: input, shape index: {}]
  %s2 = inlined_call_operand.hbm [shape: f32[16,16,16], index: 2, kind: input, shape index: {}]
  %s3 = inlined_call_operand.hbm [shape: u8[16,8,8], index: 3, kind: output, shape index: {}]
  %s4 = sld [smem:[#allocation0]]
  $region34: #{quantized_maxpool_3x3_s2_p1.1} parent=0
    _
  %s6 = ssub.s32 1, %s4
  %s7 = scalar_select 0, %s6, %s4
  $region1: #{quantized_maxpool_3x3_s2_p1.1} parent=0
    #allocation2 [shape = 'u8[6144]{0}', space=vmem, size = 0x1800, scoped, tag = 'input window, operand 0, single buffered']
    #allocation3 [shape = 's32[1]{0}', space=sflag, size = 0x4, scoped, tag = 'scoped memory for quantized_maxpool_3x3_s2_p1.1']
    #allocation4 [shape = 's32[1]{0}', space=sflag, size = 0x4, scoped, tag = 'scoped memory for quantized_maxpool_3x3_s2_p1.1']
    #allocation5 [shape = 'u8[12288]{0}', space=vmem, size = 0x3000, scoped, tag = 'input window, operand 1, single buffered']
    #allocation6 [shape = 's32[1]{0}', space=sflag, size = 0x4, scoped, tag = 'scoped memory for quantized_maxpool_3x3_s2_p1.1']
    #allocation7 [shape = 'u8[131072]{0}', space=vmem, size = 0x20000, scoped, tag = 'input window, operand 2, single buffered']
    #allocation8 [shape = 'u8[16384]{0}', space=vmem, size = 0x4000, scoped, tag = 'output window, operand 0, single buffered']
    %8 = vsyncpa [#allocation3], 0
    %9 = vsyncpa [#allocation6], 0
    %10 = vsyncpa [#allocation4], 0
    // Predicated region
    $region2: #{quantized_maxpool_3x3_s2_p1.1} parent=1 // pred_check
      _
    $region3: #{quantized_maxpool_3x3_s2_p1.1} parent=1 // pred_check_branch
      %12 = sbr.rel (0) target = $region5
    $region4: #{quantized_maxpool_3x3_s2_p1.1} parent=1 // pred_region
      %s14 = ssub.s32 192, 192
      %15 = vsyncadd [#allocation3], %s14
      %s16 = sshll.u32 [#allocation2], 4
      %s17 = int_to_ptr.vmem [resolvable:$true] %s16
      %22 = dma.hbm_to_vmem [thread:$0]  %s0, 192, %s17, [#allocation3], 64, 64, 4
    $region5: #{quantized_maxpool_3x3_s2_p1.1} parent=1 // pred_fallthru
      _
    // Predicated region
    $region6: #{quantized_maxpool_3x3_s2_p1.1} parent=1 // pred_check
      _
    $region7: #{quantized_maxpool_3x3_s2_p1.1} parent=1 // pred_check_branch
      %24 = sbr.rel (0) target = $region9
    $region8: #{quantized_maxpool_3x3_s2_p1.1} parent=1 // pred_region
      %s26 = ssub.s32 384, 384
      %27 = vsyncadd [#allocation6], %s26
      %s28 = sshll.u32 [#allocation5], 4
      %s29 = int_to_ptr.vmem [resolvable:$true] %s28
      %34 = dma.hbm_to_vmem [thread:$0]  %s1, 384, %s29, [#allocation6], 64, 64, 4
    $region9: #{quantized_maxpool_3x3_s2_p1.1} parent=1 // pred_fallthru
      _
    // Predicated region
    $region10: #{quantized_maxpool_3x3_s2_p1.1} parent=1 // pred_check
      _
    $region11: #{quantized_maxpool_3x3_s2_p1.1} parent=1 // pred_check_branch
      %36 = sbr.rel (0) target = $region13
    $region12: #{quantized_maxpool_3x3_s2_p1.1} parent=1 // pred_region
      %s38 = ssub.s32 4096, 4096
      %39 = vsyncadd [#allocation6], %s38
      %s40 = sshll.u32 [#allocation7], 4
      %s41 = int_to_ptr.vmem [resolvable:$true] %s40
      %46 = dma.hbm_to_vmem [thread:$0]  %s2, 4096, %s41, [#allocation6], 128, 128, 8
    $region13: #{quantized_maxpool_3x3_s2_p1.1} parent=1 // pred_fallthru
      _
    // Predicated region
    $region14: #{quantized_maxpool_3x3_s2_p1.1} parent=1 // pred_check
      _
    $region15: #{quantized_maxpool_3x3_s2_p1.1} parent=1 // pred_check_branch
      %48 = sbr.rel (0) target = $region17
    $region16: #{quantized_maxpool_3x3_s2_p1.1} parent=1 // pred_region
      %49 = dma.done [#allocation3], 192
    $region17: #{quantized_maxpool_3x3_s2_p1.1} parent=1 // pred_fallthru
      _
    // Predicated region
    $region18: #{quantized_maxpool_3x3_s2_p1.1} parent=1 // pred_check
      _
    $region19: #{quantized_maxpool_3x3_s2_p1.1} parent=1 // pred_check_branch
      %51 = sbr.rel (0) target = $region21
    $region20: #{quantized_maxpool_3x3_s2_p1.1} parent=1 // pred_region
      %52 = dma.done [#allocation6], 384
    $region21: #{quantized_maxpool_3x3_s2_p1.1} parent=1 // pred_fallthru
      _
    // Predicated region
    $region22: #{quantized_maxpool_3x3_s2_p1.1} parent=1 // pred_check
      _
    $region23: #{quantized_maxpool_3x3_s2_p1.1} parent=1 // pred_check_branch
      %54 = sbr.rel (0) target = $region25
    $region24: #{quantized_maxpool_3x3_s2_p1.1} parent=1 // pred_region
      %55 = dma.done [#allocation6], 4096
    $region25: #{quantized_maxpool_3x3_s2_p1.1} parent=1 // pred_fallthru
      _
    %v57 = vld [vmem:[#allocation7] sm:$0xff]
    %v58 = vld [vmem:[#allocation7 + $0x8] sm:$0xff]
    %v59 = vld [vmem:[#allocation7 + $0x10] sm:$0xff]
    %v60 = vld [vmem:[#allocation7 + $0x18] sm:$0xff]
    %v61 = vld [vmem:[#allocation7 + $0x20] sm:$0xff]
    %v62 = vld [vmem:[#allocation7 + $0x28] sm:$0xff]
    %v63 = vld [vmem:[#allocation7 + $0x30] sm:$0xff]
    %v64 = vld [vmem:[#allocation7 + $0x38] sm:$0xff]
    %v65 = vld [vmem:[#allocation7 + $0x40] sm:$0xff]
    %v66 = vld [vmem:[#allocation7 + $0x48] sm:$0xff]
    %v67 = vld [vmem:[#allocation7 + $0x50] sm:$0xff]
    %v68 = vld [vmem:[#allocation7 + $0x58] sm:$0xff]
    %v69 = vld [vmem:[#allocation7 + $0x60] sm:$0xff]
    %v70 = vld [vmem:[#allocation7 + $0x68] sm:$0xff]
    %v71 = vld [vmem:[#allocation7 + $0x70] sm:$0xff]
    %v72 = vld [vmem:[#allocation7 + $0x78] sm:$0xff]
    %v73 = vld [vmem:[#allocation7 + $0x80] sm:$0xff]
    %v74 = vld [vmem:[#allocation7 + $0x88] sm:$0xff]
    %v75 = vld [vmem:[#allocation7 + $0x90] sm:$0xff]
    %v76 = vld [vmem:[#allocation7 + $0x98] sm:$0xff]
    %v77 = vld [vmem:[#allocation7 + $0xa0] sm:$0xff]
    %v78 = vld [vmem:[#allocation7 + $0xa8] sm:$0xff]
    %v79 = vld [vmem:[#allocation7 + $0xb0] sm:$0xff]
    %v80 = vld [vmem:[#allocation7 + $0xb8] sm:$0xff]
    %v81 = vld [vmem:[#allocation7 + $0xc0] sm:$0xff]
    %v82 = vld [vmem:[#allocation7 + $0xc8] sm:$0xff]
    %v83 = vld [vmem:[#allocation7 + $0xd0] sm:$0xff]
    %v84 = vld [vmem:[#allocation7 + $0xd8] sm:$0xff]
    %v85 = vld [vmem:[#allocation7 + $0xe0] sm:$0xff]
    %v86 = vld [vmem:[#allocation7 + $0xe8] sm:$0xff]
    %v87 = vld [vmem:[#allocation7 + $0xf0] sm:$0xff]
    %v88 = vld [vmem:[#allocation7 + $0xf8] sm:$0xff]
    %v89 = vmul.f32 %v57, 21.186441
    %v90 = vmul.f32 %v58, 21.186441
    %v91 = vmul.f32 %v59, 21.186441
    %v92 = vmul.f32 %v60, 21.186441
    %v93 = vmul.f32 %v61, 21.186441
    %v94 = vmul.f32 %v62, 21.186441
    %v95 = vmul.f32 %v63, 21.186441
    %v96 = vmul.f32 %v64, 21.186441
    %v97 = vmul.f32 %v65, 21.186441
    %v98 = vmul.f32 %v66, 21.186441
    %v99 = vmul.f32 %v67, 21.186441
    %v100 = vmul.f32 %v68, 21.186441
    %v101 = vmul.f32 %v69, 21.186441
    %v102 = vmul.f32 %v70, 21.186441
    %v103 = vmul.f32 %v71, 21.186441
    %v104 = vmul.f32 %v72, 21.186441
    %v105 = vmul.f32 %v73, 21.186441
    %v106 = vmul.f32 %v74, 21.186441
    %v107 = vmul.f32 %v75, 21.186441
    %v108 = vmul.f32 %v76, 21.186441
    %v109 = vmul.f32 %v77, 21.186441
    %v110 = vmul.f32 %v78, 21.186441
    %v111 = vmul.f32 %v79, 21.186441
    %v112 = vmul.f32 %v80, 21.186441
    %v113 = vmul.f32 %v81, 21.186441
    %v114 = vmul.f32 %v82, 21.186441
    %v115 = vmul.f32 %v83, 21.186441
    %v116 = vmul.f32 %v84, 21.186441
    %v117 = vmul.f32 %v85, 21.186441
    %v118 = vmul.f32 %v86, 21.186441
    %v119 = vmul.f32 %v87, 21.186441
    %v120 = vmul.f32 %v88, 21.186441
    %v121 = vround.ne.pseudo %v89
    %v122 = vround.ne.pseudo %v90
    %v123 = vround.ne.pseudo %v91
    %v124 = vround.ne.pseudo %v92
    %v125 = vround.ne.pseudo %v93
    %v126 = vround.ne.pseudo %v94
    %v127 = vround.ne.pseudo %v95
    %v128 = vround.ne.pseudo %v96
    %v129 = vround.ne.pseudo %v97
    %v130 = vround.ne.pseudo %v98
    %v131 = vround.ne.pseudo %v99
    %v132 = vround.ne.pseudo %v100
    %v133 = vround.ne.pseudo %v101
    %v134 = vround.ne.pseudo %v102
    %v135 = vround.ne.pseudo %v103
    %v136 = vround.ne.pseudo %v104
    %v137 = vround.ne.pseudo %v105
    %v138 = vround.ne.pseudo %v106
    %v139 = vround.ne.pseudo %v107
    %v140 = vround.ne.pseudo %v108
    %v141 = vround.ne.pseudo %v109
    %v142 = vround.ne.pseudo %v110
    %v143 = vround.ne.pseudo %v111
    %v144 = vround.ne.pseudo %v112
    %v145 = vround.ne.pseudo %v113
    %v146 = vround.ne.pseudo %v114
    %v147 = vround.ne.pseudo %v115
    %v148 = vround.ne.pseudo %v116
    %v149 = vround.ne.pseudo %v117
    %v150 = vround.ne.pseudo %v118
    %v151 = vround.ne.pseudo %v119
    %v152 = vround.ne.pseudo %v120
    %v153 = vadd.f32 %v121, 64.0
    %v154 = vadd.f32 %v122, 64.0
    %v155 = vadd.f32 %v123, 64.0
    %v156 = vadd.f32 %v124, 64.0
    %v157 = vadd.f32 %v125, 64.0
    %v158 = vadd.f32 %v126, 64.0
    %v159 = vadd.f32 %v127, 64.0
    %v160 = vadd.f32 %v128, 64.0
    %v161 = vadd.f32 %v129, 64.0
    %v162 = vadd.f32 %v130, 64.0
    %v163 = vadd.f32 %v131, 64.0
    %v164 = vadd.f32 %v132, 64.0
    %v165 = vadd.f32 %v133, 64.0
    %v166 = vadd.f32 %v134, 64.0
    %v167 = vadd.f32 %v135, 64.0
    %v168 = vadd.f32 %v136, 64.0
    %v169 = vadd.f32 %v137, 64.0
    %v170 = vadd.f32 %v138, 64.0
    %v171 = vadd.f32 %v139, 64.0
    %v172 = vadd.f32 %v140, 64.0
    %v173 = vadd.f32 %v141, 64.0
    %v174 = vadd.f32 %v142, 64.0
    %v175 = vadd.f32 %v143, 64.0
    %v176 = vadd.f32 %v144, 64.0
    %v177 = vadd.f32 %v145, 64.0
    %v178 = vadd.f32 %v146, 64.0
    %v179 = vadd.f32 %v147, 64.0
    %v180 = vadd.f32 %v148, 64.0
    %v181 = vadd.f32 %v149, 64.0
    %v182 = vadd.f32 %v150, 64.0
    %v183 = vadd.f32 %v151, 64.0
    %v184 = vadd.f32 %v152, 64.0
    %v185 = vmax.f32 %v153, 0.0
    %v186 = vmax.f32 %v154, 0.0
    %v187 = vmax.f32 %v155, 0.0
    %v188 = vmax.f32 %v156, 0.0
    %v189 = vmax.f32 %v157, 0.0
    %v190 = vmax.f32 %v158, 0.0
    %v191 = vmax.f32 %v159, 0.0
    %v192 = vmax.f32 %v160, 0.0
    %v193 = vmax.f32 %v161, 0.0
    %v194 = vmax.f32 %v162, 0.0
    %v195 = vmax.f32 %v163, 0.0
    %v196 = vmax.f32 %v164, 0.0
    %v197 = vmax.f32 %v165, 0.0
    %v198 = vmax.f32 %v166, 0.0
    %v199 = vmax.f32 %v167, 0.0
    %v200 = vmax.f32 %v168, 0.0
    %v201 = vmax.f32 %v169, 0.0
    %v202 = vmax.f32 %v170, 0.0
    %v203 = vmax.f32 %v171, 0.0
    %v204 = vmax.f32 %v172, 0.0
    %v205 = vmax.f32 %v173, 0.0
    %v206 = vmax.f32 %v174, 0.0
    %v207 = vmax.f32 %v175, 0.0
    %v208 = vmax.f32 %v176, 0.0
    %v209 = vmax.f32 %v177, 0.0
    %v210 = vmax.f32 %v178, 0.0
    %v211 = vmax.f32 %v179, 0.0
    %v212 = vmax.f32 %v180, 0.0
    %v213 = vmax.f32 %v181, 0.0
    %v214 = vmax.f32 %v182, 0.0
    %v215 = vmax.f32 %v183, 0.0
    %v216 = vmax.f32 %v184, 0.0
    %v217 = vmin.f32 %v185, 255.0
    %v218 = vmin.f32 %v186, 255.0
    %v219 = vmin.f32 %v187, 255.0
    %v220 = vmin.f32 %v188, 255.0
    %v221 = vmin.f32 %v189, 255.0
    %v222 = vmin.f32 %v190, 255.0
    %v223 = vmin.f32 %v191, 255.0
    %v224 = vmin.f32 %v192, 255.0
    %v225 = vmin.f32 %v193, 255.0
    %v226 = vmin.f32 %v194, 255.0
    %v227 = vmin.f32 %v195, 255.0
    %v228 = vmin.f32 %v196, 255.0
    %v229 = vmin.f32 %v197, 255.0
    %v230 = vmin.f32 %v198, 255.0
    %v231 = vmin.f32 %v199, 255.0
    %v232 = vmin.f32 %v200, 255.0
    %v233 = vmin.f32 %v201, 255.0
    %v234 = vmin.f32 %v202, 255.0
    %v235 = vmin.f32 %v203, 255.0
    %v236 = vmin.f32 %v204, 255.0
    %v237 = vmin.f32 %v205, 255.0
    %v238 = vmin.f32 %v206, 255.0
    %v239 = vmin.f32 %v207, 255.0
    %v240 = vmin.f32 %v208, 255.0
    %v241 = vmin.f32 %v209, 255.0
    %v242 = vmin.f32 %v210, 255.0
    %v243 = vmin.f32 %v211, 255.0
    %v244 = vmin.f32 %v212, 255.0
    %v245 = vmin.f32 %v213, 255.0
    %v246 = vmin.f32 %v214, 255.0
    %v247 = vmin.f32 %v215, 255.0
    %v248 = vmin.f32 %v216, 255.0
    %v249 = vpack.c.bf16 %v218, %v217
    %v250 = vpack.c.bf16 %v220, %v219
    %v251 = vpack.c.bf16 %v222, %v221
    %v252 = vpack.c.bf16 %v224, %v223
    %v253 = vpack.c.bf16 %v226, %v225
    %v254 = vpack.c.bf16 %v228, %v227
    %v255 = vpack.c.bf16 %v230, %v229
    %v256 = vpack.c.bf16 %v232, %v231
    %v257 = vpack.c.bf16 %v234, %v233
    %v258 = vpack.c.bf16 %v236, %v235
    %v259 = vpack.c.bf16 %v238, %v237
    %v260 = vpack.c.bf16 %v240, %v239
    %v261 = vpack.c.bf16 %v242, %v241
    %v262 = vpack.c.bf16 %v244, %v243
    %v263 = vpack.c.bf16 %v246, %v245
    %v264 = vpack.c.bf16 %v248, %v247
    %v265 = vld [vmem:[#allocation2] sm:$0xf]
    %vm266 = vcmask 130048
    %v268 = vsel %vm266, %v265, 0
    %270 = vmatprep.subr.bf16.mxu0 0
    %271 = vmatpush1.bf16.msra.mxu0 %v249
    %272 = vmatprep.subr.bf16.mxu0 0
    %273 = vmatpush1.bf16.msra.mxu0 0
    %274 = vmatprep.subr.bf16.mxu0 0
    %275 = vmatpush1.bf16.msra.mxu0 0
    %276 = vmatprep.subr.bf16.mxu0 0
    %277 = vmatpush1.bf16.msra.mxu0 0
    %278 = vmatprep.subr.bf16.mxu0 0
    %279 = vmatpush1.bf16.msra.mxu0 0
    %280 = vmatprep.subr.bf16.mxu0 0
    %281 = vmatpush1.bf16.msra.mxu0 0
    %282 = vmatprep.subr.bf16.mxu0 0
    %283 = vmatpush1.bf16.msra.mxu0 0
    %284 = vmatprep.subr.bf16.mxu0 0
    %285 = vmatpush1.bf16.msra.mxu0 0
    %286 = vmatprep.subr.bf16.mxu0 0
    %287 = vmatpush1.bf16.msra.mxu0 0
    %288 = vmatprep.subr.bf16.mxu0 0
    %289 = vmatpush1.bf16.msra.mxu0 0
    %290 = vmatprep.subr.bf16.mxu0 0
    %291 = vmatpush1.bf16.msra.mxu0 0
    %292 = vmatprep.subr.bf16.mxu0 0
    %293 = vmatpush1.bf16.msra.mxu0 0
    %294 = vmatprep.subr.bf16.mxu0 0
    %295 = vmatpush1.bf16.msra.mxu0 0
    %296 = vmatprep.subr.bf16.mxu0 0
    %297 = vmatpush1.bf16.msra.mxu0 0
    %298 = vmatprep.subr.bf16.mxu0 0
    %299 = vmatpush1.bf16.msra.mxu0 0
    %300 = vmatprep.subr.bf16.mxu0 0
    %301 = vmatpush1.bf16.msra.mxu0 0
    %302 = vmatprep.mubr.bf16.mxu0 0
    %303 = vmatmul.mubr.bf16.gmra.mrb[0].mxu0 %v268
    %v304 = vpop.f32.mrb[0].mxu0
    %v305 = vadd.f32 0.0, %v304
    %v306 = vpop.f32.mrb[0].mxu0
    %v307 = vpop.f32.mrb[0].mxu0
    %v308 = vpop.f32.mrb[0].mxu0
    %309 = vdwg.mxu0
    %310 = vmatprep.subr.bf16.mxu0 0
    %311 = vmatpush1.bf16.msra.mxu0 %v250
    %312 = vmatprep.subr.bf16.mxu0 0
    %313 = vmatpush1.bf16.msra.mxu0 0
    %314 = vmatprep.subr.bf16.mxu0 0
    %315 = vmatpush1.bf16.msra.mxu0 0
    %316 = vmatprep.subr.bf16.mxu0 0
    %317 = vmatpush1.bf16.msra.mxu0 0
    %318 = vmatprep.subr.bf16.mxu0 0
    %319 = vmatpush1.bf16.msra.mxu0 0
    %320 = vmatprep.subr.bf16.mxu0 0
    %321 = vmatpush1.bf16.msra.mxu0 0
    %322 = vmatprep.subr.bf16.mxu0 0
    %323 = vmatpush1.bf16.msra.mxu0 0
    %324 = vmatprep.subr.bf16.mxu0 0
    %325 = vmatpush1.bf16.msra.mxu0 0
    %326 = vmatprep.subr.bf16.mxu0 0
    %327 = vmatpush1.bf16.msra.mxu0 0
    %328 = vmatprep.subr.bf16.mxu0 0
    %329 = vmatpush1.bf16.msra.mxu0 0
    %330 = vmatprep.subr.bf16.mxu0 0
    %331 = vmatpush1.bf16.msra.mxu0 0
    %332 = vmatprep.subr.bf16.mxu0 0
    %333 = vmatpush1.bf16.msra.mxu0 0
    %334 = vmatprep.subr.bf16.mxu0 0
    %335 = vmatpush1.bf16.msra.mxu0 0
    %336 = vmatprep.subr.bf16.mxu0 0
    %337 = vmatpush1.bf16.msra.mxu0 0
    %338 = vmatprep.subr.bf16.mxu0 0
    %339 = vmatpush1.bf16.msra.mxu0 0
    %340 = vmatprep.subr.bf16.mxu0 0
    %341 = vmatpush1.bf16.msra.mxu0 0
    %342 = vmatprep.mubr.bf16.mxu0 0
    %343 = vmatmul.mubr.bf16.gmra.mrb[0].mxu0 %v268
    %v344 = vpop.f32.mrb[0].mxu0
    %v345 = vadd.f32 0.0, %v344
    %v346 = vpop.f32.mrb[0].mxu0
    %v347 = vpop.f32.mrb[0].mxu0
    %v348 = vpop.f32.mrb[0].mxu0
    %349 = vdwg.mxu0
    %350 = vmatprep.subr.bf16.mxu0 0
    %351 = vmatpush1.bf16.msra.mxu0 %v251
    %352 = vmatprep.subr.bf16.mxu0 0
    %353 = vmatpush1.bf16.msra.mxu0 0
    %354 = vmatprep.subr.bf16.mxu0 0
    %355 = vmatpush1.bf16.msra.mxu0 0
    %356 = vmatprep.subr.bf16.mxu0 0
    %357 = vmatpush1.bf16.msra.mxu0 0
    %358 = vmatprep.subr.bf16.mxu0 0
    %359 = vmatpush1.bf16.msra.mxu0 0
    %360 = vmatprep.subr.bf16.mxu0 0
    %361 = vmatpush1.bf16.msra.mxu0 0
    %362 = vmatprep.subr.bf16.mxu0 0
    %363 = vmatpush1.bf16.msra.mxu0 0
    %364 = vmatprep.subr.bf16.mxu0 0
    %365 = vmatpush1.bf16.msra.mxu0 0
    %366 = vmatprep.subr.bf16.mxu0 0
    %367 = vmatpush1.bf16.msra.mxu0 0
    %368 = vmatprep.subr.bf16.mxu0 0
    %369 = vmatpush1.bf16.msra.mxu0 0
    %370 = vmatprep.subr.bf16.mxu0 0
    %371 = vmatpush1.bf16.msra.mxu0 0
    %372 = vmatprep.subr.bf16.mxu0 0
    %373 = vmatpush1.bf16.msra.mxu0 0
    %374 = vmatprep.subr.bf16.mxu0 0
    %375 = vmatpush1.bf16.msra.mxu0 0
    %376 = vmatprep.subr.bf16.mxu0 0
    %377 = vmatpush1.bf16.msra.mxu0 0
    %378 = vmatprep.subr.bf16.mxu0 0
    %379 = vmatpush1.bf16.msra.mxu0 0
    %380 = vmatprep.subr.bf16.mxu0 0
    %381 = vmatpush1.bf16.msra.mxu0 0
    %382 = vmatprep.mubr.bf16.mxu0 0
    %383 = vmatmul.mubr.bf16.gmra.mrb[0].mxu0 %v268
    %v384 = vpop.f32.mrb[0].mxu0
    %v385 = vadd.f32 0.0, %v384
    %v386 = vpop.f32.mrb[0].mxu0
    %v387 = vpop.f32.mrb[0].mxu0
    %v388 = vpop.f32.mrb[0].mxu0
    %389 = vdwg.mxu0
    %390 = vmatprep.subr.bf16.mxu0 0
    %391 = vmatpush1.bf16.msra.mxu0 %v252
    %392 = vmatprep.subr.bf16.mxu0 0
    %393 = vmatpush1.bf16.msra.mxu0 0
    %394 = vmatprep.subr.bf16.mxu0 0
    %395 = vmatpush1.bf16.msra.mxu0 0
    %396 = vmatprep.subr.bf16.mxu0 0
    %397 = vmatpush1.bf16.msra.mxu0 0
    %398 = vmatprep.subr.bf16.mxu0 0
    %399 = vmatpush1.bf16.msra.mxu0 0
    %400 = vmatprep.subr.bf16.mxu0 0
    %401 = vmatpush1.bf16.msra.mxu0 0
    %402 = vmatprep.subr.bf16.mxu0 0
    %403 = vmatpush1.bf16.msra.mxu0 0
    %404 = vmatprep.subr.bf16.mxu0 0
    %405 = vmatpush1.bf16.msra.mxu0 0
    %406 = vmatprep.subr.bf16.mxu0 0
    %407 = vmatpush1.bf16.msra.mxu0 0
    %408 = vmatprep.subr.bf16.mxu0 0
    %409 = vmatpush1.bf16.msra.mxu0 0
    %410 = vmatprep.subr.bf16.mxu0 0
    %411 = vmatpush1.bf16.msra.mxu0 0
    %412 = vmatprep.subr.bf16.mxu0 0
    %413 = vmatpush1.bf16.msra.mxu0 0
    %414 = vmatprep.subr.bf16.mxu0 0
    %415 = vmatpush1.bf16.msra.mxu0 0
    %416 = vmatprep.subr.bf16.mxu0 0
    %417 = vmatpush1.bf16.msra.mxu0 0
    %418 = vmatprep.subr.bf16.mxu0 0
    %419 = vmatpush1.bf16.msra.mxu0 0
    %420 = vmatprep.subr.bf16.mxu0 0
    %421 = vmatpush1.bf16.msra.mxu0 0
    %422 = vmatprep.mubr.bf16.mxu0 0
    %423 = vmatmul.mubr.bf16.gmra.mrb[0].mxu0 %v268
    %v424 = vpop.f32.mrb[0].mxu0
    %v425 = vadd.f32 0.0, %v424
    %v426 = vpop.f32.mrb[0].mxu0
    %v427 = vpop.f32.mrb[0].mxu0
    %v428 = vpop.f32.mrb[0].mxu0
    %429 = vdwg.mxu0
    %430 = vmatprep.subr.bf16.mxu0 0
    %431 = vmatpush1.bf16.msra.mxu0 %v253
    %432 = vmatprep.subr.bf16.mxu0 0
    %433 = vmatpush1.bf16.msra.mxu0 0
    %434 = vmatprep.subr.bf16.mxu0 0
    %435 = vmatpush1.bf16.msra.mxu0 0
    %436 = vmatprep.subr.bf16.mxu0 0
    %437 = vmatpush1.bf16.msra.mxu0 0
    %438 = vmatprep.subr.bf16.mxu0 0
    %439 = vmatpush1.bf16.msra.mxu0 0
    %440 = vmatprep.subr.bf16.mxu0 0
    %441 = vmatpush1.bf16.msra.mxu0 0
    %442 = vmatprep.subr.bf16.mxu0 0
    %443 = vmatpush1.bf16.msra.mxu0 0
    %444 = vmatprep.subr.bf16.mxu0 0
    %445 = vmatpush1.bf16.msra.mxu0 0
    %446 = vmatprep.subr.bf16.mxu0 0
    %447 = vmatpush1.bf16.msra.mxu0 0
    %448 = vmatprep.subr.bf16.mxu0 0
    %449 = vmatpush1.bf16.msra.mxu0 0
    %450 = vmatprep.subr.bf16.mxu0 0
    %451 = vmatpush1.bf16.msra.mxu0 0
    %452 = vmatprep.subr.bf16.mxu0 0
    %453 = vmatpush1.bf16.msra.mxu0 0
    %454 = vmatprep.subr.bf16.mxu0 0
    %455 = vmatpush1.bf16.msra.mxu0 0
    %456 = vmatprep.subr.bf16.mxu0 0
    %457 = vmatpush1.bf16.msra.mxu0 0
    %458 = vmatprep.subr.bf16.mxu0 0
    %459 = vmatpush1.bf16.msra.mxu0 0
    %460 = vmatprep.subr.bf16.mxu0 0
    %461 = vmatpush1.bf16.msra.mxu0 0
    %462 = vmatprep.mubr.bf16.mxu0 0
    %463 = vmatmul.mubr.bf16.gmra.mrb[0].mxu0 %v268
    %v464 = vpop.f32.mrb[0].mxu0
    %v465 = vadd.f32 0.0, %v464
    %v466 = vpop.f32.mrb[0].mxu0
    %v467 = vpop.f32.mrb[0].mxu0
    %v468 = vpop.f32.mrb[0].mxu0
    %469 = vdwg.mxu0
    %470 = vmatprep.subr.bf16.mxu0 0
    %471 = vmatpush1.bf16.msra.mxu0 %v254
    %472 = vmatprep.subr.bf16.mxu0 0
    %473 = vmatpush1.bf16.msra.mxu0 0
    %474 = vmatprep.subr.bf16.mxu0 0
    %475 = vmatpush1.bf16.msra.mxu0 0
    %476 = vmatprep.subr.bf16.mxu0 0
    %477 = vmatpush1.bf16.msra.mxu0 0
    %478 = vmatprep.subr.bf16.mxu0 0
    %479 = vmatpush1.bf16.msra.mxu0 0
    %480 = vmatprep.subr.bf16.mxu0 0
    %481 = vmatpush1.bf16.msra.mxu0 0
    %482 = vmatprep.subr.bf16.mxu0 0
    %483 = vmatpush1.bf16.msra.mxu0 0
    %484 = vmatprep.subr.bf16.mxu0 0
    %485 = vmatpush1.bf16.msra.mxu0 0
    %486 = vmatprep.subr.bf16.mxu0 0
    %487 = vmatpush1.bf16.msra.mxu0 0
    %488 = vmatprep.subr.bf16.mxu0 0
    %489 = vmatpush1.bf16.msra.mxu0 0
    %490 = vmatprep.subr.bf16.mxu0 0
    %491 = vmatpush1.bf16.msra.mxu0 0
    %492 = vmatprep.subr.bf16.mxu0 0
    %493 = vmatpush1.bf16.msra.mxu0 0
    %494 = vmatprep.subr.bf16.mxu0 0
    %495 = vmatpush1.bf16.msra.mxu0 0
    %496 = vmatprep.subr.bf16.mxu0 0
    %497 = vmatpush1.bf16.msra.mxu0 0
    %498 = vmatprep.subr.bf16.mxu0 0
    %499 = vmatpush1.bf16.msra.mxu0 0
    %500 = vmatprep.subr.bf16.mxu0 0
    %501 = vmatpush1.bf16.msra.mxu0 0
    %502 = vmatprep.mubr.bf16.mxu0 0
    %503 = vmatmul.mubr.bf16.gmra.mrb[0].mxu0 %v268
    %v504 = vpop.f32.mrb[0].mxu0
    %v505 = vadd.f32 0.0, %v504
    %v506 = vpop.f32.mrb[0].mxu0
    %v507 = vpop.f32.mrb[0].mxu0
    %v508 = vpop.f32.mrb[0].mxu0
    %509 = vdwg.mxu0
    %510 = vmatprep.subr.bf16.mxu0 0
    %511 = vmatpush1.bf16.msra.mxu0 %v255
    %512 = vmatprep.subr.bf16.mxu0 0
    %513 = vmatpush1.bf16.msra.mxu0 0
    %514 = vmatprep.subr.bf16.mxu0 0
    %515 = vmatpush1.bf16.msra.mxu0 0
    %516 = vmatprep.subr.bf16.mxu0 0
    %517 = vmatpush1.bf16.msra.mxu0 0
    %518 = vmatprep.subr.bf16.mxu0 0
    %519 = vmatpush1.bf16.msra.mxu0 0
    %520 = vmatprep.subr.bf16.mxu0 0
    %521 = vmatpush1.bf16.msra.mxu0 0
    %522 = vmatprep.subr.bf16.mxu0 0
    %523 = vmatpush1.bf16.msra.mxu0 0
    %524 = vmatprep.subr.bf16.mxu0 0
    %525 = vmatpush1.bf16.msra.mxu0 0
    %526 = vmatprep.subr.bf16.mxu0 0
    %527 = vmatpush1.bf16.msra.mxu0 0
    %528 = vmatprep.subr.bf16.mxu0 0
    %529 = vmatpush1.bf16.msra.mxu0 0
    %530 = vmatprep.subr.bf16.mxu0 0
    %531 = vmatpush1.bf16.msra.mxu0 0
    %532 = vmatprep.subr.bf16.mxu0 0
    %533 = vmatpush1.bf16.msra.mxu0 0
    %534 = vmatprep.subr.bf16.mxu0 0
    %535 = vmatpush1.bf16.msra.mxu0 0
    %536 = vmatprep.subr.bf16.mxu0 0
    %537 = vmatpush1.bf16.msra.mxu0 0
    %538 = vmatprep.subr.bf16.mxu0 0
    %539 = vmatpush1.bf16.msra.mxu0 0
    %540 = vmatprep.subr.bf16.mxu0 0
    %541 = vmatpush1.bf16.msra.mxu0 0
    %542 = vmatprep.mubr.bf16.mxu0 0
    %543 = vmatmul.mubr.bf16.gmra.mrb[0].mxu0 %v268
    %v544 = vpop.f32.mrb[0].mxu0
    %v545 = vadd.f32 0.0, %v544
    %v546 = vpop.f32.mrb[0].mxu0
    %v547 = vpop.f32.mrb[0].mxu0
    %v548 = vpop.f32.mrb[0].mxu0
    %549 = vdwg.mxu0
    %550 = vmatprep.subr.bf16.mxu0 0
    %551 = vmatpush1.bf16.msra.mxu0 %v256
    %552 = vmatprep.subr.bf16.mxu0 0
    %553 = vmatpush1.bf16.msra.mxu0 0
    %554 = vmatprep.subr.bf16.mxu0 0
    %555 = vmatpush1.bf16.msra.mxu0 0
    %556 = vmatprep.subr.bf16.mxu0 0
    %557 = vmatpush1.bf16.msra.mxu0 0
    %558 = vmatprep.subr.bf16.mxu0 0
    %559 = vmatpush1.bf16.msra.mxu0 0
    %560 = vmatprep.subr.bf16.mxu0 0
    %561 = vmatpush1.bf16.msra.mxu0 0
    %562 = vmatprep.subr.bf16.mxu0 0
    %563 = vmatpush1.bf16.msra.mxu0 0
    %564 = vmatprep.subr.bf16.mxu0 0
    %565 = vmatpush1.bf16.msra.mxu0 0
    %566 = vmatprep.subr.bf16.mxu0 0
    %567 = vmatpush1.bf16.msra.mxu0 0
    %568 = vmatprep.subr.bf16.mxu0 0
    %569 = vmatpush1.bf16.msra.mxu0 0
    %570 = vmatprep.subr.bf16.mxu0 0
    %571 = vmatpush1.bf16.msra.mxu0 0
    %572 = vmatprep.subr.bf16.mxu0 0
    %573 = vmatpush1.bf16.msra.mxu0 0
    %574 = vmatprep.subr.bf16.mxu0 0
    %575 = vmatpush1.bf16.msra.mxu0 0
    %576 = vmatprep.subr.bf16.mxu0 0
    %577 = vmatpush1.bf16.msra.mxu0 0
    %578 = vmatprep.subr.bf16.mxu0 0
    %579 = vmatpush1.bf16.msra.mxu0 0
    %580 = vmatprep.subr.bf16.mxu0 0
    %581 = vmatpush1.bf16.msra.mxu0 0
    %582 = vmatprep.mubr.bf16.mxu0 0
    %583 = vmatmul.mubr.bf16.gmra.mrb[0].mxu0 %v268
    %v584 = vpop.f32.mrb[0].mxu0
    %v585 = vadd.f32 0.0, %v584
    %v586 = vpop.f32.mrb[0].mxu0
    %v587 = vpop.f32.mrb[0].mxu0
    %v588 = vpop.f32.mrb[0].mxu0
    %589 = vdwg.mxu0
    %590 = vmatprep.subr.bf16.mxu0 0
    %591 = vmatpush1.bf16.msra.mxu0 %v257
    %592 = vmatprep.subr.bf16.mxu0 0
    %593 = vmatpush1.bf16.msra.mxu0 0
    %594 = vmatprep.subr.bf16.mxu0 0
    %595 = vmatpush1.bf16.msra.mxu0 0
    %596 = vmatprep.subr.bf16.mxu0 0
    %597 = vmatpush1.bf16.msra.mxu0 0
    %598 = vmatprep.subr.bf16.mxu0 0
    %599 = vmatpush1.bf16.msra.mxu0 0
    %600 = vmatprep.subr.bf16.mxu0 0
    %601 = vmatpush1.bf16.msra.mxu0 0
    %602 = vmatprep.subr.bf16.mxu0 0
    %603 = vmatpush1.bf16.msra.mxu0 0
    %604 = vmatprep.subr.bf16.mxu0 0
    %605 = vmatpush1.bf16.msra.mxu0 0
    %606 = vmatprep.subr.bf16.mxu0 0
    %607 = vmatpush1.bf16.msra.mxu0 0
    %608 = vmatprep.subr.bf16.mxu0 0
    %609 = vmatpush1.bf16.msra.mxu0 0
    %610 = vmatprep.subr.bf16.mxu0 0
    %611 = vmatpush1.bf16.msra.mxu0 0
    %612 = vmatprep.subr.bf16.mxu0 0
    %613 = vmatpush1.bf16.msra.mxu0 0
    %614 = vmatprep.subr.bf16.mxu0 0
    %615 = vmatpush1.bf16.msra.mxu0 0
    %616 = vmatprep.subr.bf16.mxu0 0
    %617 = vmatpush1.bf16.msra.mxu0 0
    %618 = vmatprep.subr.bf16.mxu0 0
    %619 = vmatpush1.bf16.msra.mxu0 0
    %620 = vmatprep.subr.bf16.mxu0 0
    %621 = vmatpush1.bf16.msra.mxu0 0
    %622 = vmatprep.mubr.bf16.mxu0 0
    %623 = vmatmul.mubr.bf16.gmra.mrb[0].mxu0 %v268
    %v624 = vpop.f32.mrb[0].mxu0
    %v625 = vadd.f32 0.0, %v624
    %v626 = vpop.f32.mrb[0].mxu0
    %v627 = vpop.f32.mrb[0].mxu0
    %v628 = vpop.f32.mrb[0].mxu0
    %629 = vdwg.mxu0
    %630 = vmatprep.subr.bf16.mxu0 0
    %631 = vmatpush1.bf16.msra.mxu0 %v258
    %632 = vmatprep.subr.bf16.mxu0 0
    %633 = vmatpush1.bf16.msra.mxu0 0
    %634 = vmatprep.subr.bf16.mxu0 0
    %635 = vmatpush1.bf16.msra.mxu0 0
    %636 = vmatprep.subr.bf16.mxu0 0
    %637 = vmatpush1.bf16.msra.mxu0 0
    %638 = vmatprep.subr.bf16.mxu0 0
    %639 = vmatpush1.bf16.msra.mxu0 0
    %640 = vmatprep.subr.bf16.mxu0 0
    %641 = vmatpush1.bf16.msra.mxu0 0
    %642 = vmatprep.subr.bf16.mxu0 0
    %643 = vmatpush1.bf16.msra.mxu0 0
    %644 = vmatprep.subr.bf16.mxu0 0
    %645 = vmatpush1.bf16.msra.mxu0 0
    %646 = vmatprep.subr.bf16.mxu0 0
    %647 = vmatpush1.bf16.msra.mxu0 0
    %648 = vmatprep.subr.bf16.mxu0 0
    %649 = vmatpush1.bf16.msra.mxu0 0
    %650 = vmatprep.subr.bf16.mxu0 0
    %651 = vmatpush1.bf16.msra.mxu0 0
    %652 = vmatprep.subr.bf16.mxu0 0
    %653 = vmatpush1.bf16.msra.mxu0 0
    %654 = vmatprep.subr.bf16.mxu0 0
    %655 = vmatpush1.bf16.msra.mxu0 0
    %656 = vmatprep.subr.bf16.mxu0 0
    %657 = vmatpush1.bf16.msra.mxu0 0
    %658 = vmatprep.subr.bf16.mxu0 0
    %659 = vmatpush1.bf16.msra.mxu0 0
    %660 = vmatprep.subr.bf16.mxu0 0
    %661 = vmatpush1.bf16.msra.mxu0 0
    %662 = vmatprep.mubr.bf16.mxu0 0
    %663 = vmatmul.mubr.bf16.gmra.mrb[0].mxu0 %v268
    %v664 = vpop.f32.mrb[0].mxu0
    %v665 = vadd.f32 0.0, %v664
    %v666 = vpop.f32.mrb[0].mxu0
    %v667 = vpop.f32.mrb[0].mxu0
    %v668 = vpop.f32.mrb[0].mxu0
    %669 = vdwg.mxu0
    %670 = vmatprep.subr.bf16.mxu0 0
    %671 = vmatpush1.bf16.msra.mxu0 %v259
    %672 = vmatprep.subr.bf16.mxu0 0
    %673 = vmatpush1.bf16.msra.mxu0 0
    %674 = vmatprep.subr.bf16.mxu0 0
    %675 = vmatpush1.bf16.msra.mxu0 0
    %676 = vmatprep.subr.bf16.mxu0 0
    %677 = vmatpush1.bf16.msra.mxu0 0
    %678 = vmatprep.subr.bf16.mxu0 0
    %679 = vmatpush1.bf16.msra.mxu0 0
    %680 = vmatprep.subr.bf16.mxu0 0
    %681 = vmatpush1.bf16.msra.mxu0 0
    %682 = vmatprep.subr.bf16.mxu0 0
    %683 = vmatpush1.bf16.msra.mxu0 0
    %684 = vmatprep.subr.bf16.mxu0 0
    %685 = vmatpush1.bf16.msra.mxu0 0
    %686 = vmatprep.subr.bf16.mxu0 0
    %687 = vmatpush1.bf16.msra.mxu0 0
    %688 = vmatprep.subr.bf16.mxu0 0
    %689 = vmatpush1.bf16.msra.mxu0 0
    %690 = vmatprep.subr.bf16.mxu0 0
    %691 = vmatpush1.bf16.msra.mxu0 0
    %692 = vmatprep.subr.bf16.mxu0 0
    %693 = vmatpush1.bf16.msra.mxu0 0
    %694 = vmatprep.subr.bf16.mxu0 0
    %695 = vmatpush1.bf16.msra.mxu0 0
    %696 = vmatprep.subr.bf16.mxu0 0
    %697 = vmatpush1.bf16.msra.mxu0 0
    %698 = vmatprep.subr.bf16.mxu0 0
    %699 = vmatpush1.bf16.msra.mxu0 0
    %700 = vmatprep.subr.bf16.mxu0 0
    %701 = vmatpush1.bf16.msra.mxu0 0
    %702 = vmatprep.mubr.bf16.mxu0 0
    %703 = vmatmul.mubr.bf16.gmra.mrb[0].mxu0 %v268
    %v704 = vpop.f32.mrb[0].mxu0
    %v705 = vadd.f32 0.0, %v704
    %v706 = vpop.f32.mrb[0].mxu0
    %v707 = vpop.f32.mrb[0].mxu0
    %v708 = vpop.f32.mrb[0].mxu0
    %709 = vdwg.mxu0
    %710 = vmatprep.subr.bf16.mxu0 0
    %711 = vmatpush1.bf16.msra.mxu0 %v260
    %712 = vmatprep.subr.bf16.mxu0 0
    %713 = vmatpush1.bf16.msra.mxu0 0
    %714 = vmatprep.subr.bf16.mxu0 0
    %715 = vmatpush1.bf16.msra.mxu0 0
    %716 = vmatprep.subr.bf16.mxu0 0
    %717 = vmatpush1.bf16.msra.mxu0 0
    %718 = vmatprep.subr.bf16.mxu0 0
    %719 = vmatpush1.bf16.msra.mxu0 0
    %720 = vmatprep.subr.bf16.mxu0 0
    %721 = vmatpush1.bf16.msra.mxu0 0
    %722 = vmatprep.subr.bf16.mxu0 0
    %723 = vmatpush1.bf16.msra.mxu0 0
    %724 = vmatprep.subr.bf16.mxu0 0
    %725 = vmatpush1.bf16.msra.mxu0 0
    %726 = vmatprep.subr.bf16.mxu0 0
    %727 = vmatpush1.bf16.msra.mxu0 0
    %728 = vmatprep.subr.bf16.mxu0 0
    %729 = vmatpush1.bf16.msra.mxu0 0
    %730 = vmatprep.subr.bf16.mxu0 0
    %731 = vmatpush1.bf16.msra.mxu0 0
    %732 = vmatprep.subr.bf16.mxu0 0
    %733 = vmatpush1.bf16.msra.mxu0 0
    %734 = vmatprep.subr.bf16.mxu0 0
    %735 = vmatpush1.bf16.msra.mxu0 0
    %736 = vmatprep.subr.bf16.mxu0 0
    %737 = vmatpush1.bf16.msra.mxu0 0
    %738 = vmatprep.subr.bf16.mxu0 0
    %739 = vmatpush1.bf16.msra.mxu0 0
    %740 = vmatprep.subr.bf16.mxu0 0
    %741 = vmatpush1.bf16.msra.mxu0 0
    %742 = vmatprep.mubr.bf16.mxu0 0
    %743 = vmatmul.mubr.bf16.gmra.mrb[0].mxu0 %v268
    %v744 = vpop.f32.mrb[0].mxu0
    %v745 = vadd.f32 0.0, %v744
    %v746 = vpop.f32.mrb[0].mxu0
    %v747 = vpop.f32.mrb[0].mxu0
    %v748 = vpop.f32.mrb[0].mxu0
    %749 = vdwg.mxu0
    %750 = vmatprep.subr.bf16.mxu0 0
    %751 = vmatpush1.bf16.msra.mxu0 %v261
    %752 = vmatprep.subr.bf16.mxu0 0
    %753 = vmatpush1.bf16.msra.mxu0 0
    %754 = vmatprep.subr.bf16.mxu0 0
    %755 = vmatpush1.bf16.msra.mxu0 0
    %756 = vmatprep.subr.bf16.mxu0 0
    %757 = vmatpush1.bf16.msra.mxu0 0
    %758 = vmatprep.subr.bf16.mxu0 0
    %759 = vmatpush1.bf16.msra.mxu0 0
    %760 = vmatprep.subr.bf16.mxu0 0
    %761 = vmatpush1.bf16.msra.mxu0 0
    %762 = vmatprep.subr.bf16.mxu0 0
    %763 = vmatpush1.bf16.msra.mxu0 0
    %764 = vmatprep.subr.bf16.mxu0 0
    %765 = vmatpush1.bf16.msra.mxu0 0
    %766 = vmatprep.subr.bf16.mxu0 0
    %767 = vmatpush1.bf16.msra.mxu0 0
    %768 = vmatprep.subr.bf16.mxu0 0
    %769 = vmatpush1.bf16.msra.mxu0 0
    %770 = vmatprep.subr.bf16.mxu0 0
    %771 = vmatpush1.bf16.msra.mxu0 0
    %772 = vmatprep.subr.bf16.mxu0 0
    %773 = vmatpush1.bf16.msra.mxu0 0
    %774 = vmatprep.subr.bf16.mxu0 0
    %775 = vmatpush1.bf16.msra.mxu0 0
    %776 = vmatprep.subr.bf16.mxu0 0
    %777 = vmatpush1.bf16.msra.mxu0 0
    %778 = vmatprep.subr.bf16.mxu0 0
    %779 = vmatpush1.bf16.msra.mxu0 0
    %780 = vmatprep.subr.bf16.mxu0 0
    %781 = vmatpush1.bf16.msra.mxu0 0
    %782 = vmatprep.mubr.bf16.mxu0 0
    %783 = vmatmul.mubr.bf16.gmra.mrb[0].mxu0 %v268
    %v784 = vpop.f32.mrb[0].mxu0
    %v785 = vadd.f32 0.0, %v784
    %v786 = vpop.f32.mrb[0].mxu0
    %v787 = vpop.f32.mrb[0].mxu0
    %v788 = vpop.f32.mrb[0].mxu0
    %789 = vdwg.mxu0
    %790 = vmatprep.subr.bf16.mxu0 0
    %791 = vmatpush1.bf16.msra.mxu0 %v262
    %792 = vmatprep.subr.bf16.mxu0 0
    %793 = vmatpush1.bf16.msra.mxu0 0
    %794 = vmatprep.subr.bf16.mxu0 0
    %795 = vmatpush1.bf16.msra.mxu0 0
    %796 = vmatprep.subr.bf16.mxu0 0
    %797 = vmatpush1.bf16.msra.mxu0 0
    %798 = vmatprep.subr.bf16.mxu0 0
    %799 = vmatpush1.bf16.msra.mxu0 0
    %800 = vmatprep.subr.bf16.mxu0 0
    %801 = vmatpush1.bf16.msra.mxu0 0
    %802 = vmatprep.subr.bf16.mxu0 0
    %803 = vmatpush1.bf16.msra.mxu0 0
    %804 = vmatprep.subr.bf16.mxu0 0
    %805 = vmatpush1.bf16.msra.mxu0 0
    %806 = vmatprep.subr.bf16.mxu0 0
    %807 = vmatpush1.bf16.msra.mxu0 0
    %808 = vmatprep.subr.bf16.mxu0 0
    %809 = vmatpush1.bf16.msra.mxu0 0
    %810 = vmatprep.subr.bf16.mxu0 0
    %811 = vmatpush1.bf16.msra.mxu0 0
    %812 = vmatprep.subr.bf16.mxu0 0
    %813 = vmatpush1.bf16.msra.mxu0 0
    %814 = vmatprep.subr.bf16.mxu0 0
    %815 = vmatpush1.bf16.msra.mxu0 0
    %816 = vmatprep.subr.bf16.mxu0 0
    %817 = vmatpush1.bf16.msra.mxu0 0
    %818 = vmatprep.subr.bf16.mxu0 0
    %819 = vmatpush1.bf16.msra.mxu0 0
    %820 = vmatprep.subr.bf16.mxu0 0
    %821 = vmatpush1.bf16.msra.mxu0 0
    %822 = vmatprep.mubr.bf16.mxu0 0
    %823 = vmatmul.mubr.bf16.gmra.mrb[0].mxu0 %v268
    %v824 = vpop.f32.mrb[0].mxu0
    %v825 = vadd.f32 0.0, %v824
    %v826 = vpop.f32.mrb[0].mxu0
    %v827 = vpop.f32.mrb[0].mxu0
    %v828 = vpop.f32.mrb[0].mxu0
    %829 = vdwg.mxu0
    %830 = vmatprep.subr.bf16.mxu0 0
    %831 = vmatpush1.bf16.msra.mxu0 %v263
    %832 = vmatprep.subr.bf16.mxu0 0
    %833 = vmatpush1.bf16.msra.mxu0 0
    %834 = vmatprep.subr.bf16.mxu0 0
    %835 = vmatpush1.bf16.msra.mxu0 0
    %836 = vmatprep.subr.bf16.mxu0 0
    %837 = vmatpush1.bf16.msra.mxu0 0
    %838 = vmatprep.subr.bf16.mxu0 0
    %839 = vmatpush1.bf16.msra.mxu0 0
    %840 = vmatprep.subr.bf16.mxu0 0
    %841 = vmatpush1.bf16.msra.mxu0 0
    %842 = vmatprep.subr.bf16.mxu0 0
    %843 = vmatpush1.bf16.msra.mxu0 0
    %844 = vmatprep.subr.bf16.mxu0 0
    %845 = vmatpush1.bf16.msra.mxu0 0
    %846 = vmatprep.subr.bf16.mxu0 0
    %847 = vmatpush1.bf16.msra.mxu0 0
    %848 = vmatprep.subr.bf16.mxu0 0
    %849 = vmatpush1.bf16.msra.mxu0 0
    %850 = vmatprep.subr.bf16.mxu0 0
    %851 = vmatpush1.bf16.msra.mxu0 0
    %852 = vmatprep.subr.bf16.mxu0 0
    %853 = vmatpush1.bf16.msra.mxu0 0
    %854 = vmatprep.subr.bf16.mxu0 0
    %855 = vmatpush1.bf16.msra.mxu0 0
    %856 = vmatprep.subr.bf16.mxu0 0
    %857 = vmatpush1.bf16.msra.mxu0 0
    %858 = vmatprep.subr.bf16.mxu0 0
    %859 = vmatpush1.bf16.msra.mxu0 0
    %860 = vmatprep.subr.bf16.mxu0 0
    %861 = vmatpush1.bf16.msra.mxu0 0
    %862 = vmatprep.mubr.bf16.mxu0 0
    %863 = vmatmul.mubr.bf16.gmra.mrb[0].mxu0 %v268
    %v864 = vpop.f32.mrb[0].mxu0
    %v865 = vadd.f32 0.0, %v864
    %v866 = vpop.f32.mrb[0].mxu0
    %v867 = vpop.f32.mrb[0].mxu0
    %v868 = vpop.f32.mrb[0].mxu0
    %869 = vdwg.mxu0
    %870 = vmatprep.subr.bf16.mxu0 0
    %871 = vmatpush1.bf16.msra.mxu0 %v264
    %872 = vmatprep.subr.bf16.mxu0 0
    %873 = vmatpush1.bf16.msra.mxu0 0
    %874 = vmatprep.subr.bf16.mxu0 0
    %875 = vmatpush1.bf16.msra.mxu0 0
    %876 = vmatprep.subr.bf16.mxu0 0
    %877 = vmatpush1.bf16.msra.mxu0 0
    %878 = vmatprep.subr.bf16.mxu0 0
    %879 = vmatpush1.bf16.msra.mxu0 0
    %880 = vmatprep.subr.bf16.mxu0 0
    %881 = vmatpush1.bf16.msra.mxu0 0
    %882 = vmatprep.subr.bf16.mxu0 0
    %883 = vmatpush1.bf16.msra.mxu0 0
    %884 = vmatprep.subr.bf16.mxu0 0
    %885 = vmatpush1.bf16.msra.mxu0 0
    %886 = vmatprep.subr.bf16.mxu0 0
    %887 = vmatpush1.bf16.msra.mxu0 0
    %888 = vmatprep.subr.bf16.mxu0 0
    %889 = vmatpush1.bf16.msra.mxu0 0
    %890 = vmatprep.subr.bf16.mxu0 0
    %891 = vmatpush1.bf16.msra.mxu0 0
    %892 = vmatprep.subr.bf16.mxu0 0
    %893 = vmatpush1.bf16.msra.mxu0 0
    %894 = vmatprep.subr.bf16.mxu0 0
    %895 = vmatpush1.bf16.msra.mxu0 0
    %896 = vmatprep.subr.bf16.mxu0 0
    %897 = vmatpush1.bf16.msra.mxu0 0
    %898 = vmatprep.subr.bf16.mxu0 0
    %899 = vmatpush1.bf16.msra.mxu0 0
    %900 = vmatprep.subr.bf16.mxu0 0
    %901 = vmatpush1.bf16.msra.mxu0 0
    %902 = vmatprep.mubr.bf16.mxu0 0
    %903 = vmatmul.mubr.bf16.gmra.mrb[0].mxu0 %v268
    %v904 = vpop.f32.mrb[0].mxu0
    %v905 = vadd.f32 0.0, %v904
    %v906 = vpop.f32.mrb[0].mxu0
    %v907 = vpop.f32.mrb[0].mxu0
    %v908 = vpop.f32.mrb[0].mxu0
    %909 = vdwg.mxu0
    %s910 = scalar_lea.vmem [#allocation2], 4
    %v911 = vld [vmem:[%s910] sm:$0xf]
    %v913 = vsel %vm266, %v911, 0
    %915 = vmatprep.subr.bf16.mxu0 0
    %916 = vmatpush1.bf16.msra.mxu0 %v249
    %917 = vmatprep.subr.bf16.mxu0 0
    %918 = vmatpush1.bf16.msra.mxu0 0
    %919 = vmatprep.subr.bf16.mxu0 0
    %920 = vmatpush1.bf16.msra.mxu0 0
    %921 = vmatprep.subr.bf16.mxu0 0
    %922 = vmatpush1.bf16.msra.mxu0 0
    %923 = vmatprep.subr.bf16.mxu0 0
    %924 = vmatpush1.bf16.msra.mxu0 0
    %925 = vmatprep.subr.bf16.mxu0 0
    %926 = vmatpush1.bf16.msra.mxu0 0
    %927 = vmatprep.subr.bf16.mxu0 0
    %928 = vmatpush1.bf16.msra.mxu0 0
    %929 = vmatprep.subr.bf16.mxu0 0
    %930 = vmatpush1.bf16.msra.mxu0 0
    %931 = vmatprep.subr.bf16.mxu0 0
    %932 = vmatpush1.bf16.msra.mxu0 0
    %933 = vmatprep.subr.bf16.mxu0 0
    %934 = vmatpush1.bf16.msra.mxu0 0
    %935 = vmatprep.subr.bf16.mxu0 0
    %936 = vmatpush1.bf16.msra.mxu0 0
    %937 = vmatprep.subr.bf16.mxu0 0
    %938 = vmatpush1.bf16.msra.mxu0 0
    %939 = vmatprep.subr.bf16.mxu0 0
    %940 = vmatpush1.bf16.msra.mxu0 0
    %941 = vmatprep.subr.bf16.mxu0 0
    %942 = vmatpush1.bf16.msra.mxu0 0
    %943 = vmatprep.subr.bf16.mxu0 0
    %944 = vmatpush1.bf16.msra.mxu0 0
    %945 = vmatprep.subr.bf16.mxu0 0
    %946 = vmatpush1.bf16.msra.mxu0 0
    %947 = vmatprep.mubr.bf16.mxu0 0
    %948 = vmatmul.mubr.bf16.gmra.mrb[0].mxu0 %v913
    %v949 = vpop.f32.mrb[0].mxu0
    %v950 = vadd.f32 0.0, %v949
    %v951 = vpop.f32.mrb[0].mxu0
    %v952 = vpop.f32.mrb[0].mxu0
    %v953 = vpop.f32.mrb[0].mxu0
    %954 = vdwg.mxu0
    %955 = vmatprep.subr.bf16.mxu0 0
    %956 = vmatpush1.bf16.msra.mxu0 %v250
    %957 = vmatprep.subr.bf16.mxu0 0
    %958 = vmatpush1.bf16.msra.mxu0 0
    %959 = vmatprep.subr.bf16.mxu0 0
    %960 = vmatpush1.bf16.msra.mxu0 0
    %961 = vmatprep.subr.bf16.mxu0 0
    %962 = vmatpush1.bf16.msra.mxu0 0
    %963 = vmatprep.subr.bf16.mxu0 0
    %964 = vmatpush1.bf16.msra.mxu0 0
    %965 = vmatprep.subr.bf16.mxu0 0
    %966 = vmatpush1.bf16.msra.mxu0 0
    %967 = vmatprep.subr.bf16.mxu0 0
    %968 = vmatpush1.bf16.msra.mxu0 0
    %969 = vmatprep.subr.bf16.mxu0 0
    %970 = vmatpush1.bf16.msra.mxu0 0
    %971 = vmatprep.subr.bf16.mxu0 0
    %972 = vmatpush1.bf16.msra.mxu0 0
    %973 = vmatprep.subr.bf16.mxu0 0
    %974 = vmatpush1.bf16.msra.mxu0 0
    %975 = vmatprep.subr.bf16.mxu0 0
    %976 = vmatpush1.bf16.msra.mxu0 0
    %977 = vmatprep.subr.bf16.mxu0 0
    %978 = vmatpush1.bf16.msra.mxu0 0
    %979 = vmatprep.subr.bf16.mxu0 0
    %980 = vmatpush1.bf16.msra.mxu0 0
    %981 = vmatprep.subr.bf16.mxu0 0
    %982 = vmatpush1.bf16.msra.mxu0 0
    %983 = vmatprep.subr.bf16.mxu0 0
    %984 = vmatpush1.bf16.msra.mxu0 0
    %985 = vmatprep.subr.bf16.mxu0 0
    %986 = vmatpush1.bf16.msra.mxu0 0
    %987 = vmatprep.mubr.bf16.mxu0 0
    %988 = vmatmul.mubr.bf16.gmra.mrb[0].mxu0 %v913
    %v989 = vpop.f32.mrb[0].mxu0
    %v990 = vadd.f32 0.0, %v989
    %v991 = vpop.f32.mrb[0].mxu0
    %v992 = vpop.f32.mrb[0].mxu0
    %v993 = vpop.f32.mrb[0].mxu0
    %994 = vdwg.mxu0
    %995 = vmatprep.subr.bf16.mxu0 0
    %996 = vmatpush1.bf16.msra.mxu0 %v251
    %997 = vmatprep.subr.bf16.mxu0 0
    %998 = vmatpush1.bf16.msra.mxu0 0
    %999 = vmatprep.subr.bf16.mxu0 0
    %1000 = vmatpush1.bf16.msra.mxu0 0
    %1001 = vmatprep.subr.bf16.mxu0 0
    %1002 = vmatpush1.bf16.msra.mxu0 0
    %1003 = vmatprep.subr.bf16.mxu0 0
    %1004 = vmatpush1.bf16.msra.mxu0 0
    %1005 = vmatprep.subr.bf16.mxu0 0
    %1006 = vmatpush1.bf16.msra.mxu0 0
    %1007 = vmatprep.subr.bf16.mxu0 0
    %1008 = vmatpush1.bf16.msra.mxu0 0
    %1009 = vmatprep.subr.bf16.mxu0 0
    %1010 = vmatpush1.bf16.msra.mxu0 0
    %1011 = vmatprep.subr.bf16.mxu0 0
    %1012 = vmatpush1.bf16.msra.mxu0 0
    %1013 = vmatprep.subr.bf16.mxu0 0
    %1014 = vmatpush1.bf16.msra.mxu0 0
    %1015 = vmatprep.subr.bf16.mxu0 0
    %1016 = vmatpush1.bf16.msra.mxu0 0
    %1017 = vmatprep.subr.bf16.mxu0 0
    %1018 = vmatpush1.bf16.msra.mxu0 0
    %1019 = vmatprep.subr.bf16.mxu0 0
    %1020 = vmatpush1.bf16.msra.mxu0 0
    %1021 = vmatprep.subr.bf16.mxu0 0
    %1022 = vmatpush1.bf16.msra.mxu0 0
    %1023 = vmatprep.subr.bf16.mxu0 0
    %1024 = vmatpush1.bf16.msra.mxu0 0
    %1025 = vmatprep.subr.bf16.mxu0 0
    %1026 = vmatpush1.bf16.msra.mxu0 0
    %1027 = vmatprep.mubr.bf16.mxu0 0
    %1028 = vmatmul.mubr.bf16.gmra.mrb[0].mxu0 %v913
    %v1029 = vpop.f32.mrb[0].mxu0
    %v1030 = vadd.f32 0.0, %v1029
    %v1031 = vpop.f32.mrb[0].mxu0
    %v1032 = vpop.f32.mrb[0].mxu0
    %v1033 = vpop.f32.mrb[0].mxu0
    %1034 = vdwg.mxu0
    %1035 = vmatprep.subr.bf16.mxu0 0
    %1036 = vmatpush1.bf16.msra.mxu0 %v252
    %1037 = vmatprep.subr.bf16.mxu0 0
    %1038 = vmatpush1.bf16.msra.mxu0 0
    %1039 = vmatprep.subr.bf16.mxu0 0
    %1040 = vmatpush1.bf16.msra.mxu0 0
    %1041 = vmatprep.subr.bf16.mxu0 0
    %1042 = vmatpush1.bf16.msra.mxu0 0
    %1043 = vmatprep.subr.bf16.mxu0 0
    %1044 = vmatpush1.bf16.msra.mxu0 0
    %1045 = vmatprep.subr.bf16.mxu0 0
    %1046 = vmatpush1.bf16.msra.mxu0 0
    %1047 = vmatprep.subr.bf16.mxu0 0
    %1048 = vmatpush1.bf16.msra.mxu0 0
    %1049 = vmatprep.subr.bf16.mxu0 0
    %1050 = vmatpush1.bf16.msra.mxu0 0
    %1051 = vmatprep.subr.bf16.mxu0 0
    %1052 = vmatpush1.bf16.msra.mxu0 0
    %1053 = vmatprep.subr.bf16.mxu0 0
    %1054 = vmatpush1.bf16.msra.mxu0 0
    %1055 = vmatprep.subr.bf16.mxu0 0
    %1056 = vmatpush1.bf16.msra.mxu0 0
    %1057 = vmatprep.subr.bf16.mxu0 0
    %1058 = vmatpush1.bf16.msra.mxu0 0
    %1059 = vmatprep.subr.bf16.mxu0 0
    %1060 = vmatpush1.bf16.msra.mxu0 0
    %1061 = vmatprep.subr.bf16.mxu0 0
    %1062 = vmatpush1.bf16.msra.mxu0 0
    %1063 = vmatprep.subr.bf16.mxu0 0
    %1064 = vmatpush1.bf16.msra.mxu0 0
    %1065 = vmatprep.subr.bf16.mxu0 0
    %1066 = vmatpush1.bf16.msra.mxu0 0
    %1067 = vmatprep.mubr.bf16.mxu0 0
    %1068 = vmatmul.mubr.bf16.gmra.mrb[0].mxu0 %v913
    %v1069 = vpop.f32.mrb[0].mxu0
    %v1070 = vadd.f32 0.0, %v1069
    %v1071 = vpop.f32.mrb[0].mxu0
    %v1072 = vpop.f32.mrb[0].mxu0
    %v1073 = vpop.f32.mrb[0].mxu0
    %1074 = vdwg.mxu0
    %1075 = vmatprep.subr.bf16.mxu0 0
    %1076 = vmatpush1.bf16.msra.mxu0 %v253
    %1077 = vmatprep.subr.bf16.mxu0 0
    %1078 = vmatpush1.bf16.msra.mxu0 0
    %1079 = vmatprep.subr.bf16.mxu0 0
    %1080 = vmatpush1.bf16.msra.mxu0 0
    %1081 = vmatprep.subr.bf16.mxu0 0
    %1082 = vmatpush1.bf16.msra.mxu0 0
    %1083 = vmatprep.subr.bf16.mxu0 0
    %1084 = vmatpush1.bf16.msra.mxu0 0
    %1085 = vmatprep.subr.bf16.mxu0 0
    %1086 = vmatpush1.bf16.msra.mxu0 0
    %1087 = vmatprep.subr.bf16.mxu0 0
    %1088 = vmatpush1.bf16.msra.mxu0 0
    %1089 = vmatprep.subr.bf16.mxu0 0
    %1090 = vmatpush1.bf16.msra.mxu0 0
    %1091 = vmatprep.subr.bf16.mxu0 0
    %1092 = vmatpush1.bf16.msra.mxu0 0
    %1093 = vmatprep.subr.bf16.mxu0 0
    %1094 = vmatpush1.bf16.msra.mxu0 0
    %1095 = vmatprep.subr.bf16.mxu0 0
    %1096 = vmatpush1.bf16.msra.mxu0 0
    %1097 = vmatprep.subr.bf16.mxu0 0
    %1098 = vmatpush1.bf16.msra.mxu0 0
    %1099 = vmatprep.subr.bf16.mxu0 0
    %1100 = vmatpush1.bf16.msra.mxu0 0
    %1101 = vmatprep.subr.bf16.mxu0 0
    %1102 = vmatpush1.bf16.msra.mxu0 0
    %1103 = vmatprep.subr.bf16.mxu0 0
    %1104 = vmatpush1.bf16.msra.mxu0 0
    %1105 = vmatprep.subr.bf16.mxu0 0
    %1106 = vmatpush1.bf16.msra.mxu0 0
    %1107 = vmatprep.mubr.bf16.mxu0 0
    %1108 = vmatmul.mubr.bf16.gmra.mrb[0].mxu0 %v913
    %v1109 = vpop.f32.mrb[0].mxu0
    %v1110 = vadd.f32 0.0, %v1109
    %v1111 = vpop.f32.mrb[0].mxu0
    %v1112 = vpop.f32.mrb[0].mxu0
    %v1113 = vpop.f32.mrb[0].mxu0
    %1114 = vdwg.mxu0
    %1115 = vmatprep.subr.bf16.mxu0 0
    %1116 = vmatpush1.bf16.msra.mxu0 %v254
    %1117 = vmatprep.subr.bf16.mxu0 0
    %1118 = vmatpush1.bf16.msra.mxu0 0
    %1119 = vmatprep.subr.bf16.mxu0 0
    %1120 = vmatpush1.bf16.msra.mxu0 0
    %1121 = vmatprep.subr.bf16.mxu0 0
    %1122 = vmatpush1.bf16.msra.mxu0 0
    %1123 = vmatprep.subr.bf16.mxu0 0
    %1124 = vmatpush1.bf16.msra.mxu0 0
    %1125 = vmatprep.subr.bf16.mxu0 0
    %1126 = vmatpush1.bf16.msra.mxu0 0
    %1127 = vmatprep.subr.bf16.mxu0 0
    %1128 = vmatpush1.bf16.msra.mxu0 0
    %1129 = vmatprep.subr.bf16.mxu0 0
    %1130 = vmatpush1.bf16.msra.mxu0 0
    %1131 = vmatprep.subr.bf16.mxu0 0
    %1132 = vmatpush1.bf16.msra.mxu0 0
    %1133 = vmatprep.subr.bf16.mxu0 0
    %1134 = vmatpush1.bf16.msra.mxu0 0
    %1135 = vmatprep.subr.bf16.mxu0 0
    %1136 = vmatpush1.bf16.msra.mxu0 0
    %1137 = vmatprep.subr.bf16.mxu0 0
    %1138 = vmatpush1.bf16.msra.mxu0 0
    %1139 = vmatprep.subr.bf16.mxu0 0
    %1140 = vmatpush1.bf16.msra.mxu0 0
    %1141 = vmatprep.subr.bf16.mxu0 0
    %1142 = vmatpush1.bf16.msra.mxu0 0
    %1143 = vmatprep.subr.bf16.mxu0 0
    %1144 = vmatpush1.bf16.msra.mxu0 0
    %1145 = vmatprep.subr.bf16.mxu0 0
    %1146 = vmatpush1.bf16.msra.mxu0 0
    %1147 = vmatprep.mubr.bf16.mxu0 0
    %1148 = vmatmul.mubr.bf16.gmra.mrb[0].mxu0 %v913
    %v1149 = vpop.f32.mrb[0].mxu0
    %v1150 = vadd.f32 0.0, %v1149
    %v1151 = vpop.f32.mrb[0].mxu0
    %v1152 = vpop.f32.mrb[0].mxu0
    %v1153 = vpop.f32.mrb[0].mxu0
    %1154 = vdwg.mxu0
    %1155 = vmatprep.subr.bf16.mxu0 0
    %1156 = vmatpush1.bf16.msra.mxu0 %v255
    %1157 = vmatprep.subr.bf16.mxu0 0
    %1158 = vmatpush1.bf16.msra.mxu0 0
    %1159 = vmatprep.subr.bf16.mxu0 0
    %1160 = vmatpush1.bf16.msra.mxu0 0
    %1161 = vmatprep.subr.bf16.mxu0 0
    %1162 = vmatpush1.bf16.msra.mxu0 0
    %1163 = vmatprep.subr.bf16.mxu0 0
    %1164 = vmatpush1.bf16.msra.mxu0 0
    %1165 = vmatprep.subr.bf16.mxu0 0
    %1166 = vmatpush1.bf16.msra.mxu0 0
    %1167 = vmatprep.subr.bf16.mxu0 0
    %1168 = vmatpush1.bf16.msra.mxu0 0
    %1169 = vmatprep.subr.bf16.mxu0 0
    %1170 = vmatpush1.bf16.msra.mxu0 0
    %1171 = vmatprep.subr.bf16.mxu0 0
    %1172 = vmatpush1.bf16.msra.mxu0 0
    %1173 = vmatprep.subr.bf16.mxu0 0
    %1174 = vmatpush1.bf16.msra.mxu0 0
    %1175 = vmatprep.subr.bf16.mxu0 0
    %1176 = vmatpush1.bf16.msra.mxu0 0
    %1177 = vmatprep.subr.bf16.mxu0 0
    %1178 = vmatpush1.bf16.msra.mxu0 0
    %1179 = vmatprep.subr.bf16.mxu0 0
    %1180 = vmatpush1.bf16.msra.mxu0 0
    %1181 = vmatprep.subr.bf16.mxu0 0
    %1182 = vmatpush1.bf16.msra.mxu0 0
    %1183 = vmatprep.subr.bf16.mxu0 0
    %1184 = vmatpush1.bf16.msra.mxu0 0
    %1185 = vmatprep.subr.bf16.mxu0 0
    %1186 = vmatpush1.bf16.msra.mxu0 0
    %1187 = vmatprep.mubr.bf16.mxu0 0
    %1188 = vmatmul.mubr.bf16.gmra.mrb[0].mxu0 %v913
    %v1189 = vpop.f32.mrb[0].mxu0
    %v1190 = vadd.f32 0.0, %v1189
    %v1191 = vpop.f32.mrb[0].mxu0
    %v1192 = vpop.f32.mrb[0].mxu0
    %v1193 = vpop.f32.mrb[0].mxu0
    %1194 = vdwg.mxu0
    %1195 = vmatprep.subr.bf16.mxu0 0
    %1196 = vmatpush1.bf16.msra.mxu0 %v256
    %1197 = vmatprep.subr.bf16.mxu0 0
    %1198 = vmatpush1.bf16.msra.mxu0 0
    %1199 = vmatprep.subr.bf16.mxu0 0
    %1200 = vmatpush1.bf16.msra.mxu0 0
    %1201 = vmatprep.subr.bf16.mxu0 0
    %1202 = vmatpush1.bf16.msra.mxu0 0
    %1203 = vmatprep.subr.bf16.mxu0 0
    %1204 = vmatpush1.bf16.msra.mxu0 0
    %1205 = vmatprep.subr.bf16.mxu0 0
    %1206 = vmatpush1.bf16.msra.mxu0 0
    %1207 = vmatprep.subr.bf16.mxu0 0
    %1208 = vmatpush1.bf16.msra.mxu0 0
    %1209 = vmatprep.subr.bf16.mxu0 0
    %1210 = vmatpush1.bf16.msra.mxu0 0
    %1211 = vmatprep.subr.bf16.mxu0 0
    %1212 = vmatpush1.bf16.msra.mxu0 0
    %1213 = vmatprep.subr.bf16.mxu0 0
    %1214 = vmatpush1.bf16.msra.mxu0 0
    %1215 = vmatprep.subr.bf16.mxu0 0
    %1216 = vmatpush1.bf16.msra.mxu0 0
    %1217 = vmatprep.subr.bf16.mxu0 0
    %1218 = vmatpush1.bf16.msra.mxu0 0
    %1219 = vmatprep.subr.bf16.mxu0 0
    %1220 = vmatpush1.bf16.msra.mxu0 0
    %1221 = vmatprep.subr.bf16.mxu0 0
    %1222 = vmatpush1.bf16.msra.mxu0 0
    %1223 = vmatprep.subr.bf16.mxu0 0
    %1224 = vmatpush1.bf16.msra.mxu0 0
    %1225 = vmatprep.subr.bf16.mxu0 0
    %1226 = vmatpush1.bf16.msra.mxu0 0
    %1227 = vmatprep.mubr.bf16.mxu0 0
    %1228 = vmatmul.mubr.bf16.gmra.mrb[0].mxu0 %v913
    %v1229 = vpop.f32.mrb[0].mxu0
    %v1230 = vadd.f32 0.0, %v1229
    %v1231 = vpop.f32.mrb[0].mxu0
    %v1232 = vpop.f32.mrb[0].mxu0
    %v1233 = vpop.f32.mrb[0].mxu0
    %1234 = vdwg.mxu0
    %1235 = vmatprep.subr.bf16.mxu0 0
    %1236 = vmatpush1.bf16.msra.mxu0 %v257
    %1237 = vmatprep.subr.bf16.mxu0 0
    %1238 = vmatpush1.bf16.msra.mxu0 0
    %1239 = vmatprep.subr.bf16.mxu0 0
    %1240 = vmatpush1.bf16.msra.mxu0 0
    %1241 = vmatprep.subr.bf16.mxu0 0
    %1242 = vmatpush1.bf16.msra.mxu0 0
    %1243 = vmatprep.subr.bf16.mxu0 0
    %1244 = vmatpush1.bf16.msra.mxu0 0
    %1245 = vmatprep.subr.bf16.mxu0 0
    %1246 = vmatpush1.bf16.msra.mxu0 0
    %1247 = vmatprep.subr.bf16.mxu0 0
    %1248 = vmatpush1.bf16.msra.mxu0 0
    %1249 = vmatprep.subr.bf16.mxu0 0
    %1250 = vmatpush1.bf16.msra.mxu0 0
    %1251 = vmatprep.subr.bf16.mxu0 0
    %1252 = vmatpush1.bf16.msra.mxu0 0
    %1253 = vmatprep.subr.bf16.mxu0 0
    %1254 = vmatpush1.bf16.msra.mxu0 0
    %1255 = vmatprep.subr.bf16.mxu0 0
    %1256 = vmatpush1.bf16.msra.mxu0 0
    %1257 = vmatprep.subr.bf16.mxu0 0
    %1258 = vmatpush1.bf16.msra.mxu0 0
    %1259 = vmatprep.subr.bf16.mxu0 0
    %1260 = vmatpush1.bf16.msra.mxu0 0
    %1261 = vmatprep.subr.bf16.mxu0 0
    %1262 = vmatpush1.bf16.msra.mxu0 0
    %1263 = vmatprep.subr.bf16.mxu0 0
    %1264 = vmatpush1.bf16.msra.mxu0 0
    %1265 = vmatprep.subr.bf16.mxu0 0
    %1266 = vmatpush1.bf16.msra.mxu0 0
    %1267 = vmatprep.mubr.bf16.mxu0 0
    %1268 = vmatmul.mubr.bf16.gmra.mrb[0].mxu0 %v913
    %v1269 = vpop.f32.mrb[0].mxu0
    %v1270 = vadd.f32 0.0, %v1269
    %v1271 = vpop.f32.mrb[0].mxu0
    %v1272 = vpop.f32.mrb[0].mxu0
    %v1273 = vpop.f32.mrb[0].mxu0
    %1274 = vdwg.mxu0
    %1275 = vmatprep.subr.bf16.mxu0 0
    %1276 = vmatpush1.bf16.msra.mxu0 %v258
    %1277 = vmatprep.subr.bf16.mxu0 0
    %1278 = vmatpush1.bf16.msra.mxu0 0
    %1279 = vmatprep.subr.bf16.mxu0 0
    %1280 = vmatpush1.bf16.msra.mxu0 0
    %1281 = vmatprep.subr.bf16.mxu0 0
    %1282 = vmatpush1.bf16.msra.mxu0 0
    %1283 = vmatprep.subr.bf16.mxu0 0
    %1284 = vmatpush1.bf16.msra.mxu0 0
    %1285 = vmatprep.subr.bf16.mxu0 0
    %1286 = vmatpush1.bf16.msra.mxu0 0
    %1287 = vmatprep.subr.bf16.mxu0 0
    %1288 = vmatpush1.bf16.msra.mxu0 0
    %1289 = vmatprep.subr.bf16.mxu0 0
    %1290 = vmatpush1.bf16.msra.mxu0 0
    %1291 = vmatprep.subr.bf16.mxu0 0
    %1292 = vmatpush1.bf16.msra.mxu0 0
    %1293 = vmatprep.subr.bf16.mxu0 0
    %1294 = vmatpush1.bf16.msra.mxu0 0
    %1295 = vmatprep.subr.bf16.mxu0 0
    %1296 = vmatpush1.bf16.msra.mxu0 0
    %1297 = vmatprep.subr.bf16.mxu0 0
    %1298 = vmatpush1.bf16.msra.mxu0 0
    %1299 = vmatprep.subr.bf16.mxu0 0
    %1300 = vmatpush1.bf16.msra.mxu0 0
    %1301 = vmatprep.subr.bf16.mxu0 0
    %1302 = vmatpush1.bf16.msra.mxu0 0
    %1303 = vmatprep.subr.bf16.mxu0 0
    %1304 = vmatpush1.bf16.msra.mxu0 0
    %1305 = vmatprep.subr.bf16.mxu0 0
    %1306 = vmatpush1.bf16.msra.mxu0 0
    %1307 = vmatprep.mubr.bf16.mxu0 0
    %1308 = vmatmul.mubr.bf16.gmra.mrb[0].mxu0 %v913
    %v1309 = vpop.f32.mrb[0].mxu0
    %v1310 = vadd.f32 0.0, %v1309
    %v1311 = vpop.f32.mrb[0].mxu0
    %v1312 = vpop.f32.mrb[0].mxu0
    %v1313 = vpop.f32.mrb[0].mxu0
    %1314 = vdwg.mxu0
    %1315 = vmatprep.subr.bf16.mxu0 0
    %1316 = vmatpush1.bf16.msra.mxu0 %v259
    %1317 = vmatprep.subr.bf16.mxu0 0
    %1318 = vmatpush1.bf16.msra.mxu0 0
    %1319 = vmatprep.subr.bf16.mxu0 0
    %1320 = vmatpush1.bf16.msra.mxu0 0
    %1321 = vmatprep.subr.bf16.mxu0 0
    %1322 = vmatpush1.bf16.msra.mxu0 0
    %1323 = vmatprep.subr.bf16.mxu0 0
    %1324 = vmatpush1.bf16.msra.mxu0 0
    %1325 = vmatprep.subr.bf16.mxu0 0
    %1326 = vmatpush1.bf16.msra.mxu0 0
    %1327 = vmatprep.subr.bf16.mxu0 0
    %1328 = vmatpush1.bf16.msra.mxu0 0
    %1329 = vmatprep.subr.bf16.mxu0 0
    %1330 = vmatpush1.bf16.msra.mxu0 0
    %1331 = vmatprep.subr.bf16.mxu0 0
    %1332 = vmatpush1.bf16.msra.mxu0 0
    %1333 = vmatprep.subr.bf16.mxu0 0
    %1334 = vmatpush1.bf16.msra.mxu0 0
    %1335 = vmatprep.subr.bf16.mxu0 0
    %1336 = vmatpush1.bf16.msra.mxu0 0
    %1337 = vmatprep.subr.bf16.mxu0 0
    %1338 = vmatpush1.bf16.msra.mxu0 0
    %1339 = vmatprep.subr.bf16.mxu0 0
    %1340 = vmatpush1.bf16.msra.mxu0 0
    %1341 = vmatprep.subr.bf16.mxu0 0
    %1342 = vmatpush1.bf16.msra.mxu0 0
    %1343 = vmatprep.subr.bf16.mxu0 0
    %1344 = vmatpush1.bf16.msra.mxu0 0
    %1345 = vmatprep.subr.bf16.mxu0 0
    %1346 = vmatpush1.bf16.msra.mxu0 0
    %1347 = vmatprep.mubr.bf16.mxu0 0
    %1348 = vmatmul.mubr.bf16.gmra.mrb[0].mxu0 %v913
    %v1349 = vpop.f32.mrb[0].mxu0
    %v1350 = vadd.f32 0.0, %v1349
    %v1351 = vpop.f32.mrb[0].mxu0
    %v1352 = vpop.f32.mrb[0].mxu0
    %v1353 = vpop.f32.mrb[0].mxu0
    %1354 = vdwg.mxu0
    %1355 = vmatprep.subr.bf16.mxu0 0
    %1356 = vmatpush1.bf16.msra.mxu0 %v260
    %1357 = vmatprep.subr.bf16.mxu0 0
    %1358 = vmatpush1.bf16.msra.mxu0 0
    %1359 = vmatprep.subr.bf16.mxu0 0
    %1360 = vmatpush1.bf16.msra.mxu0 0
    %1361 = vmatprep.subr.bf16.mxu0 0
    %1362 = vmatpush1.bf16.msra.mxu0 0
    %1363 = vmatprep.subr.bf16.mxu0 0
    %1364 = vmatpush1.bf16.msra.mxu0 0
    %1365 = vmatprep.subr.bf16.mxu0 0
    %1366 = vmatpush1.bf16.msra.mxu0 0
    %1367 = vmatprep.subr.bf16.mxu0 0
    %1368 = vmatpush1.bf16.msra.mxu0 0
    %1369 = vmatprep.subr.bf16.mxu0 0
    %1370 = vmatpush1.bf16.msra.mxu0 0
    %1371 = vmatprep.subr.bf16.mxu0 0
    %1372 = vmatpush1.bf16.msra.mxu0 0
    %1373 = vmatprep.subr.bf16.mxu0 0
    %1374 = vmatpush1.bf16.msra.mxu0 0
    %1375 = vmatprep.subr.bf16.mxu0 0
    %1376 = vmatpush1.bf16.msra.mxu0 0
    %1377 = vmatprep.subr.bf16.mxu0 0
    %1378 = vmatpush1.bf16.msra.mxu0 0
    %1379 = vmatprep.subr.bf16.mxu0 0
    %1380 = vmatpush1.bf16.msra.mxu0 0
    %1381 = vmatprep.subr.bf16.mxu0 0
    %1382 = vmatpush1.bf16.msra.mxu0 0
    %1383 = vmatprep.subr.bf16.mxu0 0
    %1384 = vmatpush1.bf16.msra.mxu0 0
    %1385 = vmatprep.subr.bf16.mxu0 0
    %1386 = vmatpush1.bf16.msra.mxu0 0
    %1387 = vmatprep.mubr.bf16.mxu0 0
    %1388 = vmatmul.mubr.bf16.gmra.mrb[0].mxu0 %v913
    %v1389 = vpop.f32.mrb[0].mxu0
    %v1390 = vadd.f32 0.0, %v1389
    %v1391 = vpop.f32.mrb[0].mxu0
    %v1392 = vpop.f32.mrb[0].mxu0
    %v1393 = vpop.f32.mrb[0].mxu0
    %1394 = vdwg.mxu0
    %1395 = vmatprep.subr.bf16.mxu0 0
    %1396 = vmatpush1.bf16.msra.mxu0 %v261
    %1397 = vmatprep.subr.bf16.mxu0 0
    %1398 = vmatpush1.bf16.msra.mxu0 0
    %1399 = vmatprep.subr.bf16.mxu0 0
    %1400 = vmatpush1.bf16.msra.mxu0 0
    %1401 = vmatprep.subr.bf16.mxu0 0
    %1402 = vmatpush1.bf16.msra.mxu0 0
    %1403 = vmatprep.subr.bf16.mxu0 0
    %1404 = vmatpush1.bf16.msra.mxu0 0
    %1405 = vmatprep.subr.bf16.mxu0 0
    %1406 = vmatpush1.bf16.msra.mxu0 0
    %1407 = vmatprep.subr.bf16.mxu0 0
    %1408 = vmatpush1.bf16.msra.mxu0 0
    %1409 = vmatprep.subr.bf16.mxu0 0
    %1410 = vmatpush1.bf16.msra.mxu0 0
    %1411 = vmatprep.subr.bf16.mxu0 0
    %1412 = vmatpush1.bf16.msra.mxu0 0
    %1413 = vmatprep.subr.bf16.mxu0 0
    %1414 = vmatpush1.bf16.msra.mxu0 0
    %1415 = vmatprep.subr.bf16.mxu0 0
    %1416 = vmatpush1.bf16.msra.mxu0 0
    %1417 = vmatprep.subr.bf16.mxu0 0
    %1418 = vmatpush1.bf16.msra.mxu0 0
    %1419 = vmatprep.subr.bf16.mxu0 0
    %1420 = vmatpush1.bf16.msra.mxu0 0
    %1421 = vmatprep.subr.bf16.mxu0 0
    %1422 = vmatpush1.bf16.msra.mxu0 0
    %1423 = vmatprep.subr.bf16.mxu0 0
    %1424 = vmatpush1.bf16.msra.mxu0 0
    %1425 = vmatprep.subr.bf16.mxu0 0
    %1426 = vmatpush1.bf16.msra.mxu0 0
    %1427 = vmatprep.mubr.bf16.mxu0 0
    %1428 = vmatmul.mubr.bf16.gmra.mrb[0].mxu0 %v913
    %v1429 = vpop.f32.mrb[0].mxu0
    %v1430 = vadd.f32 0.0, %v1429
    %v1431 = vpop.f32.mrb[0].mxu0
    %v1432 = vpop.f32.mrb[0].mxu0
    %v1433 = vpop.f32.mrb[0].mxu0
    %1434 = vdwg.mxu0
    %1435 = vmatprep.subr.bf16.mxu0 0
    %1436 = vmatpush1.bf16.msra.mxu0 %v262
    %1437 = vmatprep.subr.bf16.mxu0 0
    %1438 = vmatpush1.bf16.msra.mxu0 0
    %1439 = vmatprep.subr.bf16.mxu0 0
    %1440 = vmatpush1.bf16.msra.mxu0 0
    %1441 = vmatprep.subr.bf16.mxu0 0
    %1442 = vmatpush1.bf16.msra.mxu0 0
    %1443 = vmatprep.subr.bf16.mxu0 0
    %1444 = vmatpush1.bf16.msra.mxu0 0
    %1445 = vmatprep.subr.bf16.mxu0 0
    %1446 = vmatpush1.bf16.msra.mxu0 0
    %1447 = vmatprep.subr.bf16.mxu0 0
    %1448 = vmatpush1.bf16.msra.mxu0 0
    %1449 = vmatprep.subr.bf16.mxu0 0
    %1450 = vmatpush1.bf16.msra.mxu0 0
    %1451 = vmatprep.subr.bf16.mxu0 0
    %1452 = vmatpush1.bf16.msra.mxu0 0
    %1453 = vmatprep.subr.bf16.mxu0 0
    %1454 = vmatpush1.bf16.msra.mxu0 0
    %1455 = vmatprep.subr.bf16.mxu0 0
    %1456 = vmatpush1.bf16.msra.mxu0 0
    %1457 = vmatprep.subr.bf16.mxu0 0
    %1458 = vmatpush1.bf16.msra.mxu0 0
    %1459 = vmatprep.subr.bf16.mxu0 0
    %1460 = vmatpush1.bf16.msra.mxu0 0
    %1461 = vmatprep.subr.bf16.mxu0 0
    %1462 = vmatpush1.bf16.msra.mxu0 0
    %1463 = vmatprep.subr.bf16.mxu0 0
    %1464 = vmatpush1.bf16.msra.mxu0 0
    %1465 = vmatprep.subr.bf16.mxu0 0
    %1466 = vmatpush1.bf16.msra.mxu0 0
    %1467 = vmatprep.mubr.bf16.mxu0 0
    %1468 = vmatmul.mubr.bf16.gmra.mrb[0].mxu0 %v913
    %v1469 = vpop.f32.mrb[0].mxu0
    %v1470 = vadd.f32 0.0, %v1469
    %v1471 = vpop.f32.mrb[0].mxu0
    %v1472 = vpop.f32.mrb[0].mxu0
    %v1473 = vpop.f32.mrb[0].mxu0
    %1474 = vdwg.mxu0
    %1475 = vmatprep.subr.bf16.mxu0 0
    %1476 = vmatpush1.bf16.msra.mxu0 %v263
    %1477 = vmatprep.subr.bf16.mxu0 0
    %1478 = vmatpush1.bf16.msra.mxu0 0
    %1479 = vmatprep.subr.bf16.mxu0 0
    %1480 = vmatpush1.bf16.msra.mxu0 0
    %1481 = vmatprep.subr.bf16.mxu0 0
    %1482 = vmatpush1.bf16.msra.mxu0 0
    %1483 = vmatprep.subr.bf16.mxu0 0
    %1484 = vmatpush1.bf16.msra.mxu0 0
    %1485 = vmatprep.subr.bf16.mxu0 0
    %1486 = vmatpush1.bf16.msra.mxu0 0
    %1487 = vmatprep.subr.bf16.mxu0 0
    %1488 = vmatpush1.bf16.msra.mxu0 0
    %1489 = vmatprep.subr.bf16.mxu0 0
    %1490 = vmatpush1.bf16.msra.mxu0 0
    %1491 = vmatprep.subr.bf16.mxu0 0
    %1492 = vmatpush1.bf16.msra.mxu0 0
    %1493 = vmatprep.subr.bf16.mxu0 0
    %1494 = vmatpush1.bf16.msra.mxu0 0
    %1495 = vmatprep.subr.bf16.mxu0 0
    %1496 = vmatpush1.bf16.msra.mxu0 0
    %1497 = vmatprep.subr.bf16.mxu0 0
    %1498 = vmatpush1.bf16.msra.mxu0 0
    %1499 = vmatprep.subr.bf16.mxu0 0
    %1500 = vmatpush1.bf16.msra.mxu0 0
    %1501 = vmatprep.subr.bf16.mxu0 0
    %1502 = vmatpush1.bf16.msra.mxu0 0
    %1503 = vmatprep.subr.bf16.mxu0 0
    %1504 = vmatpush1.bf16.msra.mxu0 0
    %1505 = vmatprep.subr.bf16.mxu0 0
    %1506 = vmatpush1.bf16.msra.mxu0 0
    %1507 = vmatprep.mubr.bf16.mxu0 0
    %1508 = vmatmul.mubr.bf16.gmra.mrb[0].mxu0 %v913
    %v1509 = vpop.f32.mrb[0].mxu0
    %v1510 = vadd.f32 0.0, %v1509
    %v1511 = vpop.f32.mrb[0].mxu0
    %v1512 = vpop.f32.mrb[0].mxu0
    %v1513 = vpop.f32.mrb[0].mxu0
    %1514 = vdwg.mxu0
    %1515 = vmatprep.subr.bf16.mxu0 0
    %1516 = vmatpush1.bf16.msra.mxu0 %v264
    %1517 = vmatprep.subr.bf16.mxu0 0
    %1518 = vmatpush1.bf16.msra.mxu0 0
    %1519 = vmatprep.subr.bf16.mxu0 0
    %1520 = vmatpush1.bf16.msra.mxu0 0
    %1521 = vmatprep.subr.bf16.mxu0 0
    %1522 = vmatpush1.bf16.msra.mxu0 0
    %1523 = vmatprep.subr.bf16.mxu0 0
    %1524 = vmatpush1.bf16.msra.mxu0 0
    %1525 = vmatprep.subr.bf16.mxu0 0
    %1526 = vmatpush1.bf16.msra.mxu0 0
    %1527 = vmatprep.subr.bf16.mxu0 0
    %1528 = vmatpush1.bf16.msra.mxu0 0
    %1529 = vmatprep.subr.bf16.mxu0 0
    %1530 = vmatpush1.bf16.msra.mxu0 0
    %1531 = vmatprep.subr.bf16.mxu0 0
    %1532 = vmatpush1.bf16.msra.mxu0 0
    %1533 = vmatprep.subr.bf16.mxu0 0
    %1534 = vmatpush1.bf16.msra.mxu0 0
    %1535 = vmatprep.subr.bf16.mxu0 0
    %1536 = vmatpush1.bf16.msra.mxu0 0
    %1537 = vmatprep.subr.bf16.mxu0 0
    %1538 = vmatpush1.bf16.msra.mxu0 0
    %1539 = vmatprep.subr.bf16.mxu0 0
    %1540 = vmatpush1.bf16.msra.mxu0 0
    %1541 = vmatprep.subr.bf16.mxu0 0
    %1542 = vmatpush1.bf16.msra.mxu0 0
    %1543 = vmatprep.subr.bf16.mxu0 0
    %1544 = vmatpush1.bf16.msra.mxu0 0
    %1545 = vmatprep.subr.bf16.mxu0 0
    %1546 = vmatpush1.bf16.msra.mxu0 0
    %1547 = vmatprep.mubr.bf16.mxu0 0
    %1548 = vmatmul.mubr.bf16.gmra.mrb[0].mxu0 %v913
    %v1549 = vpop.f32.mrb[0].mxu0
    %v1550 = vadd.f32 0.0, %v1549
    %v1551 = vpop.f32.mrb[0].mxu0
    %v1552 = vpop.f32.mrb[0].mxu0
    %v1553 = vpop.f32.mrb[0].mxu0
    %1554 = vdwg.mxu0
    %v1555 = vmax.f32 %v305, %v950
    %v1556 = vmax.f32 %v345, %v990
    %v1557 = vmax.f32 %v385, %v1030
    %v1558 = vmax.f32 %v425, %v1070
    %v1559 = vmax.f32 %v465, %v1110
    %v1560 = vmax.f32 %v505, %v1150
    %v1561 = vmax.f32 %v545, %v1190
    %v1562 = vmax.f32 %v585, %v1230
    %v1563 = vmax.f32 %v625, %v1270
    %v1564 = vmax.f32 %v665, %v1310
    %v1565 = vmax.f32 %v705, %v1350
    %v1566 = vmax.f32 %v745, %v1390
    %v1567 = vmax.f32 %v785, %v1430
    %v1568 = vmax.f32 %v825, %v1470
    %v1569 = vmax.f32 %v865, %v1510
    %v1570 = vmax.f32 %v905, %v1550
    %s1571 = scalar_lea.vmem [#allocation2], 8
    %v1572 = vld [vmem:[%s1571] sm:$0xf]
    %v1574 = vsel %vm266, %v1572, 0
    %1576 = vmatprep.subr.bf16.mxu0 0
    %1577 = vmatpush1.bf16.msra.mxu0 %v249
    %1578 = vmatprep.subr.bf16.mxu0 0
    %1579 = vmatpush1.bf16.msra.mxu0 0
    %1580 = vmatprep.subr.bf16.mxu0 0
    %1581 = vmatpush1.bf16.msra.mxu0 0
    %1582 = vmatprep.subr.bf16.mxu0 0
    %1583 = vmatpush1.bf16.msra.mxu0 0
    %1584 = vmatprep.subr.bf16.mxu0 0
    %1585 = vmatpush1.bf16.msra.mxu0 0
    %1586 = vmatprep.subr.bf16.mxu0 0
    %1587 = vmatpush1.bf16.msra.mxu0 0
    %1588 = vmatprep.subr.bf16.mxu0 0
    %1589 = vmatpush1.bf16.msra.mxu0 0
    %1590 = vmatprep.subr.bf16.mxu0 0
    %1591 = vmatpush1.bf16.msra.mxu0 0
    %1592 = vmatprep.subr.bf16.mxu0 0
    %1593 = vmatpush1.bf16.msra.mxu0 0
    %1594 = vmatprep.subr.bf16.mxu0 0
    %1595 = vmatpush1.bf16.msra.mxu0 0
    %1596 = vmatprep.subr.bf16.mxu0 0
    %1597 = vmatpush1.bf16.msra.mxu0 0
    %1598 = vmatprep.subr.bf16.mxu0 0
    %1599 = vmatpush1.bf16.msra.mxu0 0
    %1600 = vmatprep.subr.bf16.mxu0 0
    %1601 = vmatpush1.bf16.msra.mxu0 0
    %1602 = vmatprep.subr.bf16.mxu0 0
    %1603 = vmatpush1.bf16.msra.mxu0 0
    %1604 = vmatprep.subr.bf16.mxu0 0
    %1605 = vmatpush1.bf16.msra.mxu0 0
    %1606 = vmatprep.subr.bf16.mxu0 0
    %1607 = vmatpush1.bf16.msra.mxu0 0
    %1608 = vmatprep.mubr.bf16.mxu0 0
    %1609 = vmatmul.mubr.bf16.gmra.mrb[0].mxu0 %v1574
    %v1610 = vpop.f32.mrb[0].mxu0
    %v1611 = vadd.f32 0.0, %v1610
    %v1612 = vpop.f32.mrb[0].mxu0
    %v1613 = vpop.f32.mrb[0].mxu0
    %v1614 = vpop.f32.mrb[0].mxu0
    %1615 = vdwg.mxu0
    %1616 = vmatprep.subr.bf16.mxu0 0
    %1617 = vmatpush1.bf16.msra.mxu0 %v250
    %1618 = vmatprep.subr.bf16.mxu0 0
    %1619 = vmatpush1.bf16.msra.mxu0 0
    %1620 = vmatprep.subr.bf16.mxu0 0
    %1621 = vmatpush1.bf16.msra.mxu0 0
    %1622 = vmatprep.subr.bf16.mxu0 0
    %1623 = vmatpush1.bf16.msra.mxu0 0
    %1624 = vmatprep.subr.bf16.mxu0 0
    %1625 = vmatpush1.bf16.msra.mxu0 0
    %1626 = vmatprep.subr.bf16.mxu0 0
    %1627 = vmatpush1.bf16.msra.mxu0 0
    %1628 = vmatprep.subr.bf16.mxu0 0
    %1629 = vmatpush1.bf16.msra.mxu0 0
    %1630 = vmatprep.subr.bf16.mxu0 0
    %1631 = vmatpush1.bf16.msra.mxu0 0
    %1632 = vmatprep.subr.bf16.mxu0 0
    %1633 = vmatpush1.bf16.msra.mxu0 0
    %1634 = vmatprep.subr.bf16.mxu0 0
    %1635 = vmatpush1.bf16.msra.mxu0 0
    %1636 = vmatprep.subr.bf16.mxu0 0
    %1637 = vmatpush1.bf16.msra.mxu0 0
    %1638 = vmatprep.subr.bf16.mxu0 0
    %1639 = vmatpush1.bf16.msra.mxu0 0
    %1640 = vmatprep.subr.bf16.mxu0 0
    %1641 = vmatpush1.bf16.msra.mxu0 0
    %1642 = vmatprep.subr.bf16.mxu0 0
    %1643 = vmatpush1.bf16.msra.mxu0 0
    %1644 = vmatprep.subr.bf16.mxu0 0
    %1645 = vmatpush1.bf16.msra.mxu0 0
    %1646 = vmatprep.subr.bf16.mxu0 0
    %1647 = vmatpush1.bf16.msra.mxu0 0
    %1648 = vmatprep.mubr.bf16.mxu0 0
    %1649 = vmatmul.mubr.bf16.gmra.mrb[0].mxu0 %v1574
    %v1650 = vpop.f32.mrb[0].mxu0
    %v1651 = vadd.f32 0.0, %v1650
    %v1652 = vpop.f32.mrb[0].mxu0
    %v1653 = vpop.f32.mrb[0].mxu0
    %v1654 = vpop.f32.mrb[0].mxu0
    %1655 = vdwg.mxu0
    %1656 = vmatprep.subr.bf16.mxu0 0
    %1657 = vmatpush1.bf16.msra.mxu0 %v251
    %1658 = vmatprep.subr.bf16.mxu0 0
    %1659 = vmatpush1.bf16.msra.mxu0 0
    %1660 = vmatprep.subr.bf16.mxu0 0
    %1661 = vmatpush1.bf16.msra.mxu0 0
    %1662 = vmatprep.subr.bf16.mxu0 0
    %1663 = vmatpush1.bf16.msra.mxu0 0
    %1664 = vmatprep.subr.bf16.mxu0 0
    %1665 = vmatpush1.bf16.msra.mxu0 0
    %1666 = vmatprep.subr.bf16.mxu0 0
    %1667 = vmatpush1.bf16.msra.mxu0 0
    %1668 = vmatprep.subr.bf16.mxu0 0
    %1669 = vmatpush1.bf16.msra.mxu0 0
    %1670 = vmatprep.subr.bf16.mxu0 0
    %1671 = vmatpush1.bf16.msra.mxu0 0
    %1672 = vmatprep.subr.bf16.mxu0 0
    %1673 = vmatpush1.bf16.msra.mxu0 0
    %1674 = vmatprep.subr.bf16.mxu0 0
    %1675 = vmatpush1.bf16.msra.mxu0 0
    %1676 = vmatprep.subr.bf16.mxu0 0
    %1677 = vmatpush1.bf16.msra.mxu0 0
    %1678 = vmatprep.subr.bf16.mxu0 0
    %1679 = vmatpush1.bf16.msra.mxu0 0
    %1680 = vmatprep.subr.bf16.mxu0 0
    %1681 = vmatpush1.bf16.msra.mxu0 0
    %1682 = vmatprep.subr.bf16.mxu0 0
    %1683 = vmatpush1.bf16.msra.mxu0 0
    %1684 = vmatprep.subr.bf16.mxu0 0
    %1685 = vmatpush1.bf16.msra.mxu0 0
    %1686 = vmatprep.subr.bf16.mxu0 0
    %1687 = vmatpush1.bf16.msra.mxu0 0
    %1688 = vmatprep.mubr.bf16.mxu0 0
    %1689 = vmatmul.mubr.bf16.gmra.mrb[0].mxu0 %v1574
    %v1690 = vpop.f32.mrb[0].mxu0
    %v1691 = vadd.f32 0.0, %v1690
    %v1692 = vpop.f32.mrb[0].mxu0
    %v1693 = vpop.f32.mrb[0].mxu0
    %v1694 = vpop.f32.mrb[0].mxu0
    %1695 = vdwg.mxu0
    %1696 = vmatprep.subr.bf16.mxu0 0
    %1697 = vmatpush1.bf16.msra.mxu0 %v252
    %1698 = vmatprep.subr.bf16.mxu0 0
    %1699 = vmatpush1.bf16.msra.mxu0 0
    %1700 = vmatprep.subr.bf16.mxu0 0
    %1701 = vmatpush1.bf16.msra.mxu0 0
    %1702 = vmatprep.subr.bf16.mxu0 0
    %1703 = vmatpush1.bf16.msra.mxu0 0
    %1704 = vmatprep.subr.bf16.mxu0 0
    %1705 = vmatpush1.bf16.msra.mxu0 0
    %1706 = vmatprep.subr.bf16.mxu0 0
    %1707 = vmatpush1.bf16.msra.mxu0 0
    %1708 = vmatprep.subr.bf16.mxu0 0
    %1709 = vmatpush1.bf16.msra.mxu0 0
    %1710 = vmatprep.subr.bf16.mxu0 0
    %1711 = vmatpush1.bf16.msra.mxu0 0
    %1712 = vmatprep.subr.bf16.mxu0 0
    %1713 = vmatpush1.bf16.msra.mxu0 0
    %1714 = vmatprep.subr.bf16.mxu0 0
    %1715 = vmatpush1.bf16.msra.mxu0 0
    %1716 = vmatprep.subr.bf16.mxu0 0
    %1717 = vmatpush1.bf16.msra.mxu0 0
    %1718 = vmatprep.subr.bf16.mxu0 0
    %1719 = vmatpush1.bf16.msra.mxu0 0
    %1720 = vmatprep.subr.bf16.mxu0 0
    %1721 = vmatpush1.bf16.msra.mxu0 0
    %1722 = vmatprep.subr.bf16.mxu0 0
    %1723 = vmatpush1.bf16.msra.mxu0 0
    %1724 = vmatprep.subr.bf16.mxu0 0
    %1725 = vmatpush1.bf16.msra.mxu0 0
    %1726 = vmatprep.subr.bf16.mxu0 0
    %1727 = vmatpush1.bf16.msra.mxu0 0
    %1728 = vmatprep.mubr.bf16.mxu0 0
    %1729 = vmatmul.mubr.bf16.gmra.mrb[0].mxu0 %v1574
    %v1730 = vpop.f32.mrb[0].mxu0
    %v1731 = vadd.f32 0.0, %v1730
    %v1732 = vpop.f32.mrb[0].mxu0
    %v1733 = vpop.f32.mrb[0].mxu0
    %v1734 = vpop.f32.mrb[0].mxu0
    %1735 = vdwg.mxu0
    %1736 = vmatprep.subr.bf16.mxu0 0
    %1737 = vmatpush1.bf16.msra.mxu0 %v253
    %1738 = vmatprep.subr.bf16.mxu0 0
    %1739 = vmatpush1.bf16.msra.mxu0 0
    %1740 = vmatprep.subr.bf16.mxu0 0
    %1741 = vmatpush1.bf16.msra.mxu0 0
    %1742 = vmatprep.subr.bf16.mxu0 0
    %1743 = vmatpush1.bf16.msra.mxu0 0
    %1744 = vmatprep.subr.bf16.mxu0 0
    %1745 = vmatpush1.bf16.msra.mxu0 0
    %1746 = vmatprep.subr.bf16.mxu0 0
    %1747 = vmatpush1.bf16.msra.mxu0 0
    %1748 = vmatprep.subr.bf16.mxu0 0
    %1749 = vmatpush1.bf16.msra.mxu0 0
    %1750 = vmatprep.subr.bf16.mxu0 0
    %1751 = vmatpush1.bf16.msra.mxu0 0
    %1752 = vmatprep.subr.bf16.mxu0 0
    %1753 = vmatpush1.bf16.msra.mxu0 0
    %1754 = vmatprep.subr.bf16.mxu0 0
    %1755 = vmatpush1.bf16.msra.mxu0 0
    %1756 = vmatprep.subr.bf16.mxu0 0
    %1757 = vmatpush1.bf16.msra.mxu0 0
    %1758 = vmatprep.subr.bf16.mxu0 0
    %1759 = vmatpush1.bf16.msra.mxu0 0
    %1760 = vmatprep.subr.bf16.mxu0 0
    %1761 = vmatpush1.bf16.msra.mxu0 0
    %1762 = vmatprep.subr.bf16.mxu0 0
    %1763 = vmatpush1.bf16.msra.mxu0 0
    %1764 = vmatprep.subr.bf16.mxu0 0
    %1765 = vmatpush1.bf16.msra.mxu0 0
    %1766 = vmatprep.subr.bf16.mxu0 0
    %1767 = vmatpush1.bf16.msra.mxu0 0
    %1768 = vmatprep.mubr.bf16.mxu0 0
    %1769 = vmatmul.mubr.bf16.gmra.mrb[0].mxu0 %v1574
    %v1770 = vpop.f32.mrb[0].mxu0
    %v1771 = vadd.f32 0.0, %v1770
    %v1772 = vpop.f32.mrb[0].mxu0
    %v1773 = vpop.f32.mrb[0].mxu0
    %v1774 = vpop.f32.mrb[0].mxu0
    %1775 = vdwg.mxu0
    %1776 = vmatprep.subr.bf16.mxu0 0
    %1777 = vmatpush1.bf16.msra.mxu0 %v254
    %1778 = vmatprep.subr.bf16.mxu0 0
    %1779 = vmatpush1.bf16.msra.mxu0 0
    %1780 = vmatprep.subr.bf16.mxu0 0
    %1781 = vmatpush1.bf16.msra.mxu0 0
    %1782 = vmatprep.subr.bf16.mxu0 0
    %1783 = vmatpush1.bf16.msra.mxu0 0
    %1784 = vmatprep.subr.bf16.mxu0 0
    %1785 = vmatpush1.bf16.msra.mxu0 0
    %1786 = vmatprep.subr.bf16.mxu0 0
    %1787 = vmatpush1.bf16.msra.mxu0 0
    %1788 = vmatprep.subr.bf16.mxu0 0
    %1789 = vmatpush1.bf16.msra.mxu0 0
    %1790 = vmatprep.subr.bf16.mxu0 0
    %1791 = vmatpush1.bf16.msra.mxu0 0
    %1792 = vmatprep.subr.bf16.mxu0 0
    %1793 = vmatpush1.bf16.msra.mxu0 0
    %1794 = vmatprep.subr.bf16.mxu0 0
    %1795 = vmatpush1.bf16.msra.mxu0 0
    %1796 = vmatprep.subr.bf16.mxu0 0
    %1797 = vmatpush1.bf16.msra.mxu0 0
    %1798 = vmatprep.subr.bf16.mxu0 0
    %1799 = vmatpush1.bf16.msra.mxu0 0
    %1800 = vmatprep.subr.bf16.mxu0 0
    %1801 = vmatpush1.bf16.msra.mxu0 0
    %1802 = vmatprep.subr.bf16.mxu0 0
    %1803 = vmatpush1.bf16.msra.mxu0 0
    %1804 = vmatprep.subr.bf16.mxu0 0
    %1805 = vmatpush1.bf16.msra.mxu0 0
    %1806 = vmatprep.subr.bf16.mxu0 0
    %1807 = vmatpush1.bf16.msra.mxu0 0
    %1808 = vmatprep.mubr.bf16.mxu0 0
    %1809 = vmatmul.mubr.bf16.gmra.mrb[0].mxu0 %v1574
    %v1810 = vpop.f32.mrb[0].mxu0
    %v1811 = vadd.f32 0.0, %v1810
    %v1812 = vpop.f32.mrb[0].mxu0
    %v1813 = vpop.f32.mrb[0].mxu0
    %v1814 = vpop.f32.mrb[0].mxu0
    %1815 = vdwg.mxu0
    %1816 = vmatprep.subr.bf16.mxu0 0
    %1817 = vmatpush1.bf16.msra.mxu0 %v255
    %1818 = vmatprep.subr.bf16.mxu0 0
    %1819 = vmatpush1.bf16.msra.mxu0 0
    %1820 = vmatprep.subr.bf16.mxu0 0
    %1821 = vmatpush1.bf16.msra.mxu0 0
    %1822 = vmatprep.subr.bf16.mxu0 0
    %1823 = vmatpush1.bf16.msra.mxu0 0
    %1824 = vmatprep.subr.bf16.mxu0 0
    %1825 = vmatpush1.bf16.msra.mxu0 0
    %1826 = vmatprep.subr.bf16.mxu0 0
    %1827 = vmatpush1.bf16.msra.mxu0 0
    %1828 = vmatprep.subr.bf16.mxu0 0
    %1829 = vmatpush1.bf16.msra.mxu0 0
    %1830 = vmatprep.subr.bf16.mxu0 0
    %1831 = vmatpush1.bf16.msra.mxu0 0
    %1832 = vmatprep.subr.bf16.mxu0 0
    %1833 = vmatpush1.bf16.msra.mxu0 0
    %1834 = vmatprep.subr.bf16.mxu0 0
    %1835 = vmatpush1.bf16.msra.mxu0 0
    %1836 = vmatprep.subr.bf16.mxu0 0
    %1837 = vmatpush1.bf16.msra.mxu0 0
    %1838 = vmatprep.subr.bf16.mxu0 0
    %1839 = vmatpush1.bf16.msra.mxu0 0
    %1840 = vmatprep.subr.bf16.mxu0 0
    %1841 = vmatpush1.bf16.msra.mxu0 0
    %1842 = vmatprep.subr.bf16.mxu0 0
    %1843 = vmatpush1.bf16.msra.mxu0 0
    %1844 = vmatprep.subr.bf16.mxu0 0
    %1845 = vmatpush1.bf16.msra.mxu0 0
    %1846 = vmatprep.subr.bf16.mxu0 0
    %1847 = vmatpush1.bf16.msra.mxu0 0
    %1848 = vmatprep.mubr.bf16.mxu0 0
    %1849 = vmatmul.mubr.bf16.gmra.mrb[0].mxu0 %v1574
    %v1850 = vpop.f32.mrb[0].mxu0
    %v1851 = vadd.f32 0.0, %v1850
    %v1852 = vpop.f32.mrb[0].mxu0
    %v1853 = vpop.f32.mrb[0].mxu0
    %v1854 = vpop.f32.mrb[0].mxu0
    %1855 = vdwg.mxu0
    %1856 = vmatprep.subr.bf16.mxu0 0
    %1857 = vmatpush1.bf16.msra.mxu0 %v256
    %1858 = vmatprep.subr.bf16.mxu0 0
    %1859 = vmatpush1.bf16.msra.mxu0 0
    %1860 = vmatprep.subr.bf16.mxu0 0
    %1861 = vmatpush1.bf16.msra.mxu0 0
    %1862 = vmatprep.subr.bf16.mxu0 0
    %1863 = vmatpush1.bf16.msra.mxu0 0
    %1864 = vmatprep.subr.bf16.mxu0 0
    %1865 = vmatpush1.bf16.msra.mxu0 0
    %1866 = vmatprep.subr.bf16.mxu0 0
    %1867 = vmatpush1.bf16.msra.mxu0 0
    %1868 = vmatprep.subr.bf16.mxu0 0
    %1869 = vmatpush1.bf16.msra.mxu0 0
    %1870 = vmatprep.subr.bf16.mxu0 0
    %1871 = vmatpush1.bf16.msra.mxu0 0
    %1872 = vmatprep.subr.bf16.mxu0 0
    %1873 = vmatpush1.bf16.msra.mxu0 0
    %1874 = vmatprep.subr.bf16.mxu0 0
    %1875 = vmatpush1.bf16.msra.mxu0 0
    %1876 = vmatprep.subr.bf16.mxu0 0
    %1877 = vmatpush1.bf16.msra.mxu0 0
    %1878 = vmatprep.subr.bf16.mxu0 0
    %1879 = vmatpush1.bf16.msra.mxu0 0
    %1880 = vmatprep.subr.bf16.mxu0 0
    %1881 = vmatpush1.bf16.msra.mxu0 0
    %1882 = vmatprep.subr.bf16.mxu0 0
    %1883 = vmatpush1.bf16.msra.mxu0 0
    %1884 = vmatprep.subr.bf16.mxu0 0
    %1885 = vmatpush1.bf16.msra.mxu0 0
    %1886 = vmatprep.subr.bf16.mxu0 0
    %1887 = vmatpush1.bf16.msra.mxu0 0
    %1888 = vmatprep.mubr.bf16.mxu0 0
    %1889 = vmatmul.mubr.bf16.gmra.mrb[0].mxu0 %v1574
    %v1890 = vpop.f32.mrb[0].mxu0
    %v1891 = vadd.f32 0.0, %v1890
    %v1892 = vpop.f32.mrb[0].mxu0
    %v1893 = vpop.f32.mrb[0].mxu0
    %v1894 = vpop.f32.mrb[0].mxu0
    %1895 = vdwg.mxu0
    %1896 = vmatprep.subr.bf16.mxu0 0
    %1897 = vmatpush1.bf16.msra.mxu0 %v257
    %1898 = vmatprep.subr.bf16.mxu0 0
    %1899 = vmatpush1.bf16.msra.mxu0 0
    %1900 = vmatprep.subr.bf16.mxu0 0
    %1901 = vmatpush1.bf16.msra.mxu0 0
    %1902 = vmatprep.subr.bf16.mxu0 0
    %1903 = vmatpush1.bf16.msra.mxu0 0
    %1904 = vmatprep.subr.bf16.mxu0 0
    %1905 = vmatpush1.bf16.msra.mxu0 0
    %1906 = vmatprep.subr.bf16.mxu0 0
    %1907 = vmatpush1.bf16.msra.mxu0 0
    %1908 = vmatprep.subr.bf16.mxu0 0
    %1909 = vmatpush1.bf16.msra.mxu0 0
    %1910 = vmatprep.subr.bf16.mxu0 0
    %1911 = vmatpush1.bf16.msra.mxu0 0
    %1912 = vmatprep.subr.bf16.mxu0 0
    %1913 = vmatpush1.bf16.msra.mxu0 0
    %1914 = vmatprep.subr.bf16.mxu0 0
    %1915 = vmatpush1.bf16.msra.mxu0 0
    %1916 = vmatprep.subr.bf16.mxu0 0
    %1917 = vmatpush1.bf16.msra.mxu0 0
    %1918 = vmatprep.subr.bf16.mxu0 0
    %1919 = vmatpush1.bf16.msra.mxu0 0
    %1920 = vmatprep.subr.bf16.mxu0 0
    %1921 = vmatpush1.bf16.msra.mxu0 0
    %1922 = vmatprep.subr.bf16.mxu0 0
    %1923 = vmatpush1.bf16.msra.mxu0 0
    %1924 = vmatprep.subr.bf16.mxu0 0
    %1925 = vmatpush1.bf16.msra.mxu0 0
    %1926 = vmatprep.subr.bf16.mxu0 0
    %1927 = vmatpush1.bf16.msra.mxu0 0
    %1928 = vmatprep.mubr.bf16.mxu0 0
    %1929 = vmatmul.mubr.bf16.gmra.mrb[0].mxu0 %v1574
    %v1930 = vpop.f32.mrb[0].mxu0
    %v1931 = vadd.f32 0.0, %v1930
    %v1932 = vpop.f32.mrb[0].mxu0
    %v1933 = vpop.f32.mrb[0].mxu0
    %v1934 = vpop.f32.mrb[0].mxu0
    %1935 = vdwg.mxu0
    %1936 = vmatprep.subr.bf16.mxu0 0
    %1937 = vmatpush1.bf16.msra.mxu0 %v258
    %1938 = vmatprep.subr.bf16.mxu0 0
    %1939 = vmatpush1.bf16.msra.mxu0 0
    %1940 = vmatprep.subr.bf16.mxu0 0
    %1941 = vmatpush1.bf16.msra.mxu0 0
    %1942 = vmatprep.subr.bf16.mxu0 0
    %1943 = vmatpush1.bf16.msra.mxu0 0
    %1944 = vmatprep.subr.bf16.mxu0 0
    %1945 = vmatpush1.bf16.msra.mxu0 0
    %1946 = vmatprep.subr.bf16.mxu0 0
    %1947 = vmatpush1.bf16.msra.mxu0 0
    %1948 = vmatprep.subr.bf16.mxu0 0
    %1949 = vmatpush1.bf16.msra.mxu0 0
    %1950 = vmatprep.subr.bf16.mxu0 0
    %1951 = vmatpush1.bf16.msra.mxu0 0
    %1952 = vmatprep.subr.bf16.mxu0 0
    %1953 = vmatpush1.bf16.msra.mxu0 0
    %1954 = vmatprep.subr.bf16.mxu0 0
    %1955 = vmatpush1.bf16.msra.mxu0 0
    %1956 = vmatprep.subr.bf16.mxu0 0
    %1957 = vmatpush1.bf16.msra.mxu0 0
    %1958 = vmatprep.subr.bf16.mxu0 0
    %1959 = vmatpush1.bf16.msra.mxu0 0
    %1960 = vmatprep.subr.bf16.mxu0 0
    %1961 = vmatpush1.bf16.msra.mxu0 0
    %1962 = vmatprep.subr.bf16.mxu0 0
    %1963 = vmatpush1.bf16.msra.mxu0 0
    %1964 = vmatprep.subr.bf16.mxu0 0
    %1965 = vmatpush1.bf16.msra.mxu0 0
    %1966 = vmatprep.subr.bf16.mxu0 0
    %1967 = vmatpush1.bf16.msra.mxu0 0
    %1968 = vmatprep.mubr.bf16.mxu0 0
    %1969 = vmatmul.mubr.bf16.gmra.mrb[0].mxu0 %v1574
    %v1970 = vpop.f32.mrb[0].mxu0
    %v1971 = vadd.f32 0.0, %v1970
    %v1972 = vpop.f32.mrb[0].mxu0
    %v1973 = vpop.f32.mrb[0].mxu0
    %v1974 = vpop.f32.mrb[0].mxu0
    %1975 = vdwg.mxu0
    %1976 = vmatprep.subr.bf16.mxu0 0
    %1977 = vmatpush1.bf16.msra.mxu0 %v259
    %1978 = vmatprep.subr.bf16.mxu0 0
    %1979 = vmatpush1.bf16.msra.mxu0 0
    %1980 = vmatprep.subr.bf16.mxu0 0
    %1981 = vmatpush1.bf16.msra.mxu0 0
    %1982 = vmatprep.subr.bf16.mxu0 0
    %1983 = vmatpush1.bf16.msra.mxu0 0
    %1984 = vmatprep.subr.bf16.mxu0 0
    %1985 = vmatpush1.bf16.msra.mxu0 0
    %1986 = vmatprep.subr.bf16.mxu0 0
    %1987 = vmatpush1.bf16.msra.mxu0 0
    %1988 = vmatprep.subr.bf16.mxu0 0
    %1989 = vmatpush1.bf16.msra.mxu0 0
    %1990 = vmatprep.subr.bf16.mxu0 0
    %1991 = vmatpush1.bf16.msra.mxu0 0
    %1992 = vmatprep.subr.bf16.mxu0 0
    %1993 = vmatpush1.bf16.msra.mxu0 0
    %1994 = vmatprep.subr.bf16.mxu0 0
    %1995 = vmatpush1.bf16.msra.mxu0 0
    %1996 = vmatprep.subr.bf16.mxu0 0
    %1997 = vmatpush1.bf16.msra.mxu0 0
    %1998 = vmatprep.subr.bf16.mxu0 0
    %1999 = vmatpush1.bf16.msra.mxu0 0
    %2000 = vmatprep.subr.bf16.mxu0 0
    %2001 = vmatpush1.bf16.msra.mxu0 0
    %2002 = vmatprep.subr.bf16.mxu0 0
    %2003 = vmatpush1.bf16.msra.mxu0 0
    %2004 = vmatprep.subr.bf16.mxu0 0
    %2005 = vmatpush1.bf16.msra.mxu0 0
    %2006 = vmatprep.subr.bf16.mxu0 0
    %2007 = vmatpush1.bf16.msra.mxu0 0
    %2008 = vmatprep.mubr.bf16.mxu0 0
    %2009 = vmatmul.mubr.bf16.gmra.mrb[0].mxu0 %v1574
    %v2010 = vpop.f32.mrb[0].mxu0
    %v2011 = vadd.f32 0.0, %v2010
    %v2012 = vpop.f32.mrb[0].mxu0
    %v2013 = vpop.f32.mrb[0].mxu0
    %v2014 = vpop.f32.mrb[0].mxu0
    %2015 = vdwg.mxu0
    %2016 = vmatprep.subr.bf16.mxu0 0
    %2017 = vmatpush1.bf16.msra.mxu0 %v260
    %2018 = vmatprep.subr.bf16.mxu0 0
    %2019 = vmatpush1.bf16.msra.mxu0 0
    %2020 = vmatprep.subr.bf16.mxu0 0
    %2021 = vmatpush1.bf16.msra.mxu0 0
    %2022 = vmatprep.subr.bf16.mxu0 0
    %2023 = vmatpush1.bf16.msra.mxu0 0
    %2024 = vmatprep.subr.bf16.mxu0 0
    %2025 = vmatpush1.bf16.msra.mxu0 0
    %2026 = vmatprep.subr.bf16.mxu0 0
    %2027 = vmatpush1.bf16.msra.mxu0 0
    %2028 = vmatprep.subr.bf16.mxu0 0
    %2029 = vmatpush1.bf16.msra.mxu0 0
    %2030 = vmatprep.subr.bf16.mxu0 0
    %2031 = vmatpush1.bf16.msra.mxu0 0
    %2032 = vmatprep.subr.bf16.mxu0 0
    %2033 = vmatpush1.bf16.msra.mxu0 0
    %2034 = vmatprep.subr.bf16.mxu0 0
    %2035 = vmatpush1.bf16.msra.mxu0 0
    %2036 = vmatprep.subr.bf16.mxu0 0
    %2037 = vmatpush1.bf16.msra.mxu0 0
    %2038 = vmatprep.subr.bf16.mxu0 0
    %2039 = vmatpush1.bf16.msra.mxu0 0
    %2040 = vmatprep.subr.bf16.mxu0 0
    %2041 = vmatpush1.bf16.msra.mxu0 0
    %2042 = vmatprep.subr.bf16.mxu0 0
    %2043 = vmatpush1.bf16.msra.mxu0 0
    %2044 = vmatprep.subr.bf16.mxu0 0
    %2045 = vmatpush1.bf16.msra.mxu0 0
    %2046 = vmatprep.subr.bf16.mxu0 0
    %2047 = vmatpush1.bf16.msra.mxu0 0
    %2048 = vmatprep.mubr.bf16.mxu0 0
    %2049 = vmatmul.mubr.bf16.gmra.mrb[0].mxu0 %v1574
    %v2050 = vpop.f32.mrb[0].mxu0
    %v2051 = vadd.f32 0.0, %v2050
    %v2052 = vpop.f32.mrb[0].mxu0
    %v2053 = vpop.f32.mrb[0].mxu0
    %v2054 = vpop.f32.mrb[0].mxu0
    %2055 = vdwg.mxu0
    %2056 = vmatprep.subr.bf16.mxu0 0
    %2057 = vmatpush1.bf16.msra.mxu0 %v261
    %2058 = vmatprep.subr.bf16.mxu0 0
    %2059 = vmatpush1.bf16.msra.mxu0 0
    %2060 = vmatprep.subr.bf16.mxu0 0
    %2061 = vmatpush1.bf16.msra.mxu0 0
    %2062 = vmatprep.subr.bf16.mxu0 0
    %2063 = vmatpush1.bf16.msra.mxu0 0
    %2064 = vmatprep.subr.bf16.mxu0 0
    %2065 = vmatpush1.bf16.msra.mxu0 0
    %2066 = vmatprep.subr.bf16.mxu0 0
    %2067 = vmatpush1.bf16.msra.mxu0 0
    %2068 = vmatprep.subr.bf16.mxu0 0
    %2069 = vmatpush1.bf16.msra.mxu0 0
    %2070 = vmatprep.subr.bf16.mxu0 0
    %2071 = vmatpush1.bf16.msra.mxu0 0
    %2072 = vmatprep.subr.bf16.mxu0 0
    %2073 = vmatpush1.bf16.msra.mxu0 0
    %2074 = vmatprep.subr.bf16.mxu0 0
    %2075 = vmatpush1.bf16.msra.mxu0 0
    %2076 = vmatprep.subr.bf16.mxu0 0
    %2077 = vmatpush1.bf16.msra.mxu0 0
    %2078 = vmatprep.subr.bf16.mxu0 0
    %2079 = vmatpush1.bf16.msra.mxu0 0
    %2080 = vmatprep.subr.bf16.mxu0 0
    %2081 = vmatpush1.bf16.msra.mxu0 0
    %2082 = vmatprep.subr.bf16.mxu0 0
    %2083 = vmatpush1.bf16.msra.mxu0 0
    %2084 = vmatprep.subr.bf16.mxu0 0
    %2085 = vmatpush1.bf16.msra.mxu0 0
    %2086 = vmatprep.subr.bf16.mxu0 0
    %2087 = vmatpush1.bf16.msra.mxu0 0
    %2088 = vmatprep.mubr.bf16.mxu0 0
    %2089 = vmatmul.mubr.bf16.gmra.mrb[0].mxu0 %v1574
    %v2090 = vpop.f32.mrb[0].mxu0
    %v2091 = vadd.f32 0.0, %v2090
    %v2092 = vpop.f32.mrb[0].mxu0
    %v2093 = vpop.f32.mrb[0].mxu0
    %v2094 = vpop.f32.mrb[0].mxu0
    %2095 = vdwg.mxu0
    %2096 = vmatprep.subr.bf16.mxu0 0
    %2097 = vmatpush1.bf16.msra.mxu0 %v262
    %2098 = vmatprep.subr.bf16.mxu0 0
    %2099 = vmatpush1.bf16.msra.mxu0 0
    %2100 = vmatprep.subr.bf16.mxu0 0
    %2101 = vmatpush1.bf16.msra.mxu0 0
    %2102 = vmatprep.subr.bf16.mxu0 0
    %2103 = vmatpush1.bf16.msra.mxu0 0
    %2104 = vmatprep.subr.bf16.mxu0 0
    %2105 = vmatpush1.bf16.msra.mxu0 0
    %2106 = vmatprep.subr.bf16.mxu0 0
    %2107 = vmatpush1.bf16.msra.mxu0 0
    %2108 = vmatprep.subr.bf16.mxu0 0
    %2109 = vmatpush1.bf16.msra.mxu0 0
    %2110 = vmatprep.subr.bf16.mxu0 0
    %2111 = vmatpush1.bf16.msra.mxu0 0
    %2112 = vmatprep.subr.bf16.mxu0 0
    %2113 = vmatpush1.bf16.msra.mxu0 0
    %2114 = vmatprep.subr.bf16.mxu0 0
    %2115 = vmatpush1.bf16.msra.mxu0 0
    %2116 = vmatprep.subr.bf16.mxu0 0
    %2117 = vmatpush1.bf16.msra.mxu0 0
    %2118 = vmatprep.subr.bf16.mxu0 0
    %2119 = vmatpush1.bf16.msra.mxu0 0
    %2120 = vmatprep.subr.bf16.mxu0 0
    %2121 = vmatpush1.bf16.msra.mxu0 0
    %2122 = vmatprep.subr.bf16.mxu0 0
    %2123 = vmatpush1.bf16.msra.mxu0 0
    %2124 = vmatprep.subr.bf16.mxu0 0
    %2125 = vmatpush1.bf16.msra.mxu0 0
    %2126 = vmatprep.subr.bf16.mxu0 0
    %2127 = vmatpush1.bf16.msra.mxu0 0
    %2128 = vmatprep.mubr.bf16.mxu0 0
    %2129 = vmatmul.mubr.bf16.gmra.mrb[0].mxu0 %v1574
    %v2130 = vpop.f32.mrb[0].mxu0
    %v2131 = vadd.f32 0.0, %v2130
    %v2132 = vpop.f32.mrb[0].mxu0
    %v2133 = vpop.f32.mrb[0].mxu0
    %v2134 = vpop.f32.mrb[0].mxu0
    %2135 = vdwg.mxu0
    %2136 = vmatprep.subr.bf16.mxu0 0
    %2137 = vmatpush1.bf16.msra.mxu0 %v263
    %2138 = vmatprep.subr.bf16.mxu0 0
    %2139 = vmatpush1.bf16.msra.mxu0 0
    %2140 = vmatprep.subr.bf16.mxu0 0
    %2141 = vmatpush1.bf16.msra.mxu0 0
    %2142 = vmatprep.subr.bf16.mxu0 0
    %2143 = vmatpush1.bf16.msra.mxu0 0
    %2144 = vmatprep.subr.bf16.mxu0 0
    %2145 = vmatpush1.bf16.msra.mxu0 0
    %2146 = vmatprep.subr.bf16.mxu0 0
    %2147 = vmatpush1.bf16.msra.mxu0 0
    %2148 = vmatprep.subr.bf16.mxu0 0
    %2149 = vmatpush1.bf16.msra.mxu0 0
    %2150 = vmatprep.subr.bf16.mxu0 0
    %2151 = vmatpush1.bf16.msra.mxu0 0
    %2152 = vmatprep.subr.bf16.mxu0 0
    %2153 = vmatpush1.bf16.msra.mxu0 0
    %2154 = vmatprep.subr.bf16.mxu0 0
    %2155 = vmatpush1.bf16.msra.mxu0 0
    %2156 = vmatprep.subr.bf16.mxu0 0
    %2157 = vmatpush1.bf16.msra.mxu0 0
    %2158 = vmatprep.subr.bf16.mxu0 0
    %2159 = vmatpush1.bf16.msra.mxu0 0
    %2160 = vmatprep.subr.bf16.mxu0 0
    %2161 = vmatpush1.bf16.msra.mxu0 0
    %2162 = vmatprep.subr.bf16.mxu0 0
    %2163 = vmatpush1.bf16.msra.mxu0 0
    %2164 = vmatprep.subr.bf16.mxu0 0
    %2165 = vmatpush1.bf16.msra.mxu0 0
    %2166 = vmatprep.subr.bf16.mxu0 0
    %2167 = vmatpush1.bf16.msra.mxu0 0
    %2168 = vmatprep.mubr.bf16.mxu0 0
    %2169 = vmatmul.mubr.bf16.gmra.mrb[0].mxu0 %v1574
    %v2170 = vpop.f32.mrb[0].mxu0
    %v2171 = vadd.f32 0.0, %v2170
    %v2172 = vpop.f32.mrb[0].mxu0
    %v2173 = vpop.f32.mrb[0].mxu0
    %v2174 = vpop.f32.mrb[0].mxu0
    %2175 = vdwg.mxu0
    %2176 = vmatprep.subr.bf16.mxu0 0
    %2177 = vmatpush1.bf16.msra.mxu0 %v264
    %2178 = vmatprep.subr.bf16.mxu0 0
    %2179 = vmatpush1.bf16.msra.mxu0 0
    %2180 = vmatprep.subr.bf16.mxu0 0
    %2181 = vmatpush1.bf16.msra.mxu0 0
    %2182 = vmatprep.subr.bf16.mxu0 0
    %2183 = vmatpush1.bf16.msra.mxu0 0
    %2184 = vmatprep.subr.bf16.mxu0 0
    %2185 = vmatpush1.bf16.msra.mxu0 0
    %2186 = vmatprep.subr.bf16.mxu0 0
    %2187 = vmatpush1.bf16.msra.mxu0 0
    %2188 = vmatprep.subr.bf16.mxu0 0
    %2189 = vmatpush1.bf16.msra.mxu0 0
    %2190 = vmatprep.subr.bf16.mxu0 0
    %2191 = vmatpush1.bf16.msra.mxu0 0
    %2192 = vmatprep.subr.bf16.mxu0 0
    %2193 = vmatpush1.bf16.msra.mxu0 0
    %2194 = vmatprep.subr.bf16.mxu0 0
    %2195 = vmatpush1.bf16.msra.mxu0 0
    %2196 = vmatprep.subr.bf16.mxu0 0
    %2197 = vmatpush1.bf16.msra.mxu0 0
    %2198 = vmatprep.subr.bf16.mxu0 0
    %2199 = vmatpush1.bf16.msra.mxu0 0
    %2200 = vmatprep.subr.bf16.mxu0 0
    %2201 = vmatpush1.bf16.msra.mxu0 0
    %2202 = vmatprep.subr.bf16.mxu0 0
    %2203 = vmatpush1.bf16.msra.mxu0 0
    %2204 = vmatprep.subr.bf16.mxu0 0
    %2205 = vmatpush1.bf16.msra.mxu0 0
    %2206 = vmatprep.subr.bf16.mxu0 0
    %2207 = vmatpush1.bf16.msra.mxu0 0
    %2208 = vmatprep.mubr.bf16.mxu0 0
    %2209 = vmatmul.mubr.bf16.gmra.mrb[0].mxu0 %v1574
    %v2210 = vpop.f32.mrb[0].mxu0
    %v2211 = vadd.f32 0.0, %v2210
    %v2212 = vpop.f32.mrb[0].mxu0
    %v2213 = vpop.f32.mrb[0].mxu0
    %v2214 = vpop.f32.mrb[0].mxu0
    %2215 = vdwg.mxu0
    %v2216 = vmax.f32 %v1555, %v1611
    %v2217 = vmax.f32 %v1556, %v1651
    %v2218 = vmax.f32 %v1557, %v1691
    %v2219 = vmax.f32 %v1558, %v1731
    %v2220 = vmax.f32 %v1559, %v1771
    %v2221 = vmax.f32 %v1560, %v1811
    %v2222 = vmax.f32 %v1561, %v1851
    %v2223 = vmax.f32 %v1562, %v1891
    %v2224 = vmax.f32 %v1563, %v1931
    %v2225 = vmax.f32 %v1564, %v1971
    %v2226 = vmax.f32 %v1565, %v2011
    %v2227 = vmax.f32 %v1566, %v2051
    %v2228 = vmax.f32 %v1567, %v2091
    %v2229 = vmax.f32 %v1568, %v2131
    %v2230 = vmax.f32 %v1569, %v2171
    %v2231 = vmax.f32 %v1570, %v2211
    %v2232 = vpack.c.bf16 %v2216, %v2216
    %v2233 = vpack.c.bf16 %v2217, %v2217
    %v2234 = vpack.c.bf16 %v2218, %v2218
    %v2235 = vpack.c.bf16 %v2219, %v2219
    %v2236 = vpack.c.bf16 %v2220, %v2220
    %v2237 = vpack.c.bf16 %v2221, %v2221
    %v2238 = vpack.c.bf16 %v2222, %v2222
    %v2239 = vpack.c.bf16 %v2223, %v2223
    %v2240 = vpack.c.bf16 %v2224, %v2224
    %v2241 = vpack.c.bf16 %v2225, %v2225
    %v2242 = vpack.c.bf16 %v2226, %v2226
    %v2243 = vpack.c.bf16 %v2227, %v2227
    %v2244 = vpack.c.bf16 %v2228, %v2228
    %v2245 = vpack.c.bf16 %v2229, %v2229
    %v2246 = vpack.c.bf16 %v2230, %v2230
    %v2247 = vpack.c.bf16 %v2231, %v2231
    %v2248 = vld [vmem:[#allocation5] sm:$0xf]
    %v2249 = vld [vmem:[#allocation5 + $0x4] sm:$0xf]
    %v2252 = vunpack.c.l.b16 %v2248
    %v2253 = vunpack.c.l.b16 %v2249
    %v2254 = vpack.c.b16 %v2253, %v2252
    %v2257 = vsel %vm266, %v2232, 0
    %2259 = vmatprep.subr.bf16.mxu0 0
    %2260 = vmatpush1.bf16.msra.mxu0 %v2254
    %2261 = vmatprep.subr.bf16.mxu0 0
    %2262 = vmatpush1.bf16.msra.mxu0 0
    %2263 = vmatprep.subr.bf16.mxu0 0
    %2264 = vmatpush1.bf16.msra.mxu0 0
    %2265 = vmatprep.subr.bf16.mxu0 0
    %2266 = vmatpush1.bf16.msra.mxu0 0
    %2267 = vmatprep.subr.bf16.mxu0 0
    %2268 = vmatpush1.bf16.msra.mxu0 0
    %2269 = vmatprep.subr.bf16.mxu0 0
    %2270 = vmatpush1.bf16.msra.mxu0 0
    %2271 = vmatprep.subr.bf16.mxu0 0
    %2272 = vmatpush1.bf16.msra.mxu0 0
    %2273 = vmatprep.subr.bf16.mxu0 0
    %2274 = vmatpush1.bf16.msra.mxu0 0
    %2275 = vmatprep.subr.bf16.mxu0 0
    %2276 = vmatpush1.bf16.msra.mxu0 0
    %2277 = vmatprep.subr.bf16.mxu0 0
    %2278 = vmatpush1.bf16.msra.mxu0 0
    %2279 = vmatprep.subr.bf16.mxu0 0
    %2280 = vmatpush1.bf16.msra.mxu0 0
    %2281 = vmatprep.subr.bf16.mxu0 0
    %2282 = vmatpush1.bf16.msra.mxu0 0
    %2283 = vmatprep.subr.bf16.mxu0 0
    %2284 = vmatpush1.bf16.msra.mxu0 0
    %2285 = vmatprep.subr.bf16.mxu0 0
    %2286 = vmatpush1.bf16.msra.mxu0 0
    %2287 = vmatprep.subr.bf16.mxu0 0
    %2288 = vmatpush1.bf16.msra.mxu0 0
    %2289 = vmatprep.subr.bf16.mxu0 0
    %2290 = vmatpush1.bf16.msra.mxu0 0
    %2291 = vmatprep.mubr.bf16.mxu0 0
    %2292 = vmatmul.mubr.bf16.gmra.mrb[0].mxu0 %v2257
    %v2293 = vpop.f32.mrb[0].mxu0
    %v2294 = vadd.f32 0.0, %v2293
    %v2295 = vpop.f32.mrb[0].mxu0
    %v2296 = vpop.f32.mrb[0].mxu0
    %v2297 = vpop.f32.mrb[0].mxu0
    %2298 = vdwg.mxu0
    %v2300 = vsel %vm266, %v2233, 0
    %2302 = vmatprep.subr.bf16.mxu0 0
    %2303 = vmatpush1.bf16.msra.mxu0 %v2254
    %2304 = vmatprep.subr.bf16.mxu0 0
    %2305 = vmatpush1.bf16.msra.mxu0 0
    %2306 = vmatprep.subr.bf16.mxu0 0
    %2307 = vmatpush1.bf16.msra.mxu0 0
    %2308 = vmatprep.subr.bf16.mxu0 0
    %2309 = vmatpush1.bf16.msra.mxu0 0
    %2310 = vmatprep.subr.bf16.mxu0 0
    %2311 = vmatpush1.bf16.msra.mxu0 0
    %2312 = vmatprep.subr.bf16.mxu0 0
    %2313 = vmatpush1.bf16.msra.mxu0 0
    %2314 = vmatprep.subr.bf16.mxu0 0
    %2315 = vmatpush1.bf16.msra.mxu0 0
    %2316 = vmatprep.subr.bf16.mxu0 0
    %2317 = vmatpush1.bf16.msra.mxu0 0
    %2318 = vmatprep.subr.bf16.mxu0 0
    %2319 = vmatpush1.bf16.msra.mxu0 0
    %2320 = vmatprep.subr.bf16.mxu0 0
    %2321 = vmatpush1.bf16.msra.mxu0 0
    %2322 = vmatprep.subr.bf16.mxu0 0
    %2323 = vmatpush1.bf16.msra.mxu0 0
    %2324 = vmatprep.subr.bf16.mxu0 0
    %2325 = vmatpush1.bf16.msra.mxu0 0
    %2326 = vmatprep.subr.bf16.mxu0 0
    %2327 = vmatpush1.bf16.msra.mxu0 0
    %2328 = vmatprep.subr.bf16.mxu0 0
    %2329 = vmatpush1.bf16.msra.mxu0 0
    %2330 = vmatprep.subr.bf16.mxu0 0
    %2331 = vmatpush1.bf16.msra.mxu0 0
    %2332 = vmatprep.subr.bf16.mxu0 0
    %2333 = vmatpush1.bf16.msra.mxu0 0
    %2334 = vmatprep.mubr.bf16.mxu0 0
    %2335 = vmatmul.mubr.bf16.gmra.mrb[0].mxu0 %v2300
    %v2336 = vpop.f32.mrb[0].mxu0
    %v2337 = vadd.f32 0.0, %v2336
    %v2338 = vpop.f32.mrb[0].mxu0
    %v2339 = vpop.f32.mrb[0].mxu0
    %v2340 = vpop.f32.mrb[0].mxu0
    %2341 = vdwg.mxu0
    %v2343 = vsel %vm266, %v2234, 0
    %2345 = vmatprep.subr.bf16.mxu0 0
    %2346 = vmatpush1.bf16.msra.mxu0 %v2254
    %2347 = vmatprep.subr.bf16.mxu0 0
    %2348 = vmatpush1.bf16.msra.mxu0 0
    %2349 = vmatprep.subr.bf16.mxu0 0
    %2350 = vmatpush1.bf16.msra.mxu0 0
    %2351 = vmatprep.subr.bf16.mxu0 0
    %2352 = vmatpush1.bf16.msra.mxu0 0
    %2353 = vmatprep.subr.bf16.mxu0 0
    %2354 = vmatpush1.bf16.msra.mxu0 0
    %2355 = vmatprep.subr.bf16.mxu0 0
    %2356 = vmatpush1.bf16.msra.mxu0 0
    %2357 = vmatprep.subr.bf16.mxu0 0
    %2358 = vmatpush1.bf16.msra.mxu0 0
    %2359 = vmatprep.subr.bf16.mxu0 0
    %2360 = vmatpush1.bf16.msra.mxu0 0
    %2361 = vmatprep.subr.bf16.mxu0 0
    %2362 = vmatpush1.bf16.msra.mxu0 0
    %2363 = vmatprep.subr.bf16.mxu0 0
    %2364 = vmatpush1.bf16.msra.mxu0 0
    %2365 = vmatprep.subr.bf16.mxu0 0
    %2366 = vmatpush1.bf16.msra.mxu0 0
    %2367 = vmatprep.subr.bf16.mxu0 0
    %2368 = vmatpush1.bf16.msra.mxu0 0
    %2369 = vmatprep.subr.bf16.mxu0 0
    %2370 = vmatpush1.bf16.msra.mxu0 0
    %2371 = vmatprep.subr.bf16.mxu0 0
    %2372 = vmatpush1.bf16.msra.mxu0 0
    %2373 = vmatprep.subr.bf16.mxu0 0
    %2374 = vmatpush1.bf16.msra.mxu0 0
    %2375 = vmatprep.subr.bf16.mxu0 0
    %2376 = vmatpush1.bf16.msra.mxu0 0
    %2377 = vmatprep.mubr.bf16.mxu0 0
    %2378 = vmatmul.mubr.bf16.gmra.mrb[0].mxu0 %v2343
    %v2379 = vpop.f32.mrb[0].mxu0
    %v2380 = vadd.f32 0.0, %v2379
    %v2381 = vpop.f32.mrb[0].mxu0
    %v2382 = vpop.f32.mrb[0].mxu0
    %v2383 = vpop.f32.mrb[0].mxu0
    %2384 = vdwg.mxu0
    %v2386 = vsel %vm266, %v2235, 0
    %2388 = vmatprep.subr.bf16.mxu0 0
    %2389 = vmatpush1.bf16.msra.mxu0 %v2254
    %2390 = vmatprep.subr.bf16.mxu0 0
    %2391 = vmatpush1.bf16.msra.mxu0 0
    %2392 = vmatprep.subr.bf16.mxu0 0
    %2393 = vmatpush1.bf16.msra.mxu0 0
    %2394 = vmatprep.subr.bf16.mxu0 0
    %2395 = vmatpush1.bf16.msra.mxu0 0
    %2396 = vmatprep.subr.bf16.mxu0 0
    %2397 = vmatpush1.bf16.msra.mxu0 0
    %2398 = vmatprep.subr.bf16.mxu0 0
    %2399 = vmatpush1.bf16.msra.mxu0 0
    %2400 = vmatprep.subr.bf16.mxu0 0
    %2401 = vmatpush1.bf16.msra.mxu0 0
    %2402 = vmatprep.subr.bf16.mxu0 0
    %2403 = vmatpush1.bf16.msra.mxu0 0
    %2404 = vmatprep.subr.bf16.mxu0 0
    %2405 = vmatpush1.bf16.msra.mxu0 0
    %2406 = vmatprep.subr.bf16.mxu0 0
    %2407 = vmatpush1.bf16.msra.mxu0 0
    %2408 = vmatprep.subr.bf16.mxu0 0
    %2409 = vmatpush1.bf16.msra.mxu0 0
    %2410 = vmatprep.subr.bf16.mxu0 0
    %2411 = vmatpush1.bf16.msra.mxu0 0
    %2412 = vmatprep.subr.bf16.mxu0 0
    %2413 = vmatpush1.bf16.msra.mxu0 0
    %2414 = vmatprep.subr.bf16.mxu0 0
    %2415 = vmatpush1.bf16.msra.mxu0 0
    %2416 = vmatprep.subr.bf16.mxu0 0
    %2417 = vmatpush1.bf16.msra.mxu0 0
    %2418 = vmatprep.subr.bf16.mxu0 0
    %2419 = vmatpush1.bf16.msra.mxu0 0
    %2420 = vmatprep.mubr.bf16.mxu0 0
    %2421 = vmatmul.mubr.bf16.gmra.mrb[0].mxu0 %v2386
    %v2422 = vpop.f32.mrb[0].mxu0
    %v2423 = vadd.f32 0.0, %v2422
    %v2424 = vpop.f32.mrb[0].mxu0
    %v2425 = vpop.f32.mrb[0].mxu0
    %v2426 = vpop.f32.mrb[0].mxu0
    %2427 = vdwg.mxu0
    %v2429 = vsel %vm266, %v2236, 0
    %2431 = vmatprep.subr.bf16.mxu0 0
    %2432 = vmatpush1.bf16.msra.mxu0 %v2254
    %2433 = vmatprep.subr.bf16.mxu0 0
    %2434 = vmatpush1.bf16.msra.mxu0 0
    %2435 = vmatprep.subr.bf16.mxu0 0
    %2436 = vmatpush1.bf16.msra.mxu0 0
    %2437 = vmatprep.subr.bf16.mxu0 0
    %2438 = vmatpush1.bf16.msra.mxu0 0
    %2439 = vmatprep.subr.bf16.mxu0 0
    %2440 = vmatpush1.bf16.msra.mxu0 0
    %2441 = vmatprep.subr.bf16.mxu0 0
    %2442 = vmatpush1.bf16.msra.mxu0 0
    %2443 = vmatprep.subr.bf16.mxu0 0
    %2444 = vmatpush1.bf16.msra.mxu0 0
    %2445 = vmatprep.subr.bf16.mxu0 0
    %2446 = vmatpush1.bf16.msra.mxu0 0
    %2447 = vmatprep.subr.bf16.mxu0 0
    %2448 = vmatpush1.bf16.msra.mxu0 0
    %2449 = vmatprep.subr.bf16.mxu0 0
    %2450 = vmatpush1.bf16.msra.mxu0 0
    %2451 = vmatprep.subr.bf16.mxu0 0
    %2452 = vmatpush1.bf16.msra.mxu0 0
    %2453 = vmatprep.subr.bf16.mxu0 0
    %2454 = vmatpush1.bf16.msra.mxu0 0
    %2455 = vmatprep.subr.bf16.mxu0 0
    %2456 = vmatpush1.bf16.msra.mxu0 0
    %2457 = vmatprep.subr.bf16.mxu0 0
    %2458 = vmatpush1.bf16.msra.mxu0 0
    %2459 = vmatprep.subr.bf16.mxu0 0
    %2460 = vmatpush1.bf16.msra.mxu0 0
    %2461 = vmatprep.subr.bf16.mxu0 0
    %2462 = vmatpush1.bf16.msra.mxu0 0
    %2463 = vmatprep.mubr.bf16.mxu0 0
    %2464 = vmatmul.mubr.bf16.gmra.mrb[0].mxu0 %v2429
    %v2465 = vpop.f32.mrb[0].mxu0
    %v2466 = vadd.f32 0.0, %v2465
    %v2467 = vpop.f32.mrb[0].mxu0
    %v2468 = vpop.f32.mrb[0].mxu0
    %v2469 = vpop.f32.mrb[0].mxu0
    %2470 = vdwg.mxu0
    %v2472 = vsel %vm266, %v2237, 0
    %2474 = vmatprep.subr.bf16.mxu0 0
    %2475 = vmatpush1.bf16.msra.mxu0 %v2254
    %2476 = vmatprep.subr.bf16.mxu0 0
    %2477 = vmatpush1.bf16.msra.mxu0 0
    %2478 = vmatprep.subr.bf16.mxu0 0
    %2479 = vmatpush1.bf16.msra.mxu0 0
    %2480 = vmatprep.subr.bf16.mxu0 0
    %2481 = vmatpush1.bf16.msra.mxu0 0
    %2482 = vmatprep.subr.bf16.mxu0 0
    %2483 = vmatpush1.bf16.msra.mxu0 0
    %2484 = vmatprep.subr.bf16.mxu0 0
    %2485 = vmatpush1.bf16.msra.mxu0 0
    %2486 = vmatprep.subr.bf16.mxu0 0
    %2487 = vmatpush1.bf16.msra.mxu0 0
    %2488 = vmatprep.subr.bf16.mxu0 0
    %2489 = vmatpush1.bf16.msra.mxu0 0
    %2490 = vmatprep.subr.bf16.mxu0 0
    %2491 = vmatpush1.bf16.msra.mxu0 0
    %2492 = vmatprep.subr.bf16.mxu0 0
    %2493 = vmatpush1.bf16.msra.mxu0 0
    %2494 = vmatprep.subr.bf16.mxu0 0
    %2495 = vmatpush1.bf16.msra.mxu0 0
    %2496 = vmatprep.subr.bf16.mxu0 0
    %2497 = vmatpush1.bf16.msra.mxu0 0
    %2498 = vmatprep.subr.bf16.mxu0 0
    %2499 = vmatpush1.bf16.msra.mxu0 0
    %2500 = vmatprep.subr.bf16.mxu0 0
    %2501 = vmatpush1.bf16.msra.mxu0 0
    %2502 = vmatprep.subr.bf16.mxu0 0
    %2503 = vmatpush1.bf16.msra.mxu0 0
    %2504 = vmatprep.subr.bf16.mxu0 0
    %2505 = vmatpush1.bf16.msra.mxu0 0
    %2506 = vmatprep.mubr.bf16.mxu0 0
    %2507 = vmatmul.mubr.bf16.gmra.mrb[0].mxu0 %v2472
    %v2508 = vpop.f32.mrb[0].mxu0
    %v2509 = vadd.f32 0.0, %v2508
    %v2510 = vpop.f32.mrb[0].mxu0
    %v2511 = vpop.f32.mrb[0].mxu0
    %v2512 = vpop.f32.mrb[0].mxu0
    %2513 = vdwg.mxu0
    %v2515 = vsel %vm266, %v2238, 0
    %2517 = vmatprep.subr.bf16.mxu0 0
    %2518 = vmatpush1.bf16.msra.mxu0 %v2254
    %2519 = vmatprep.subr.bf16.mxu0 0
    %2520 = vmatpush1.bf16.msra.mxu0 0
    %2521 = vmatprep.subr.bf16.mxu0 0
    %2522 = vmatpush1.bf16.msra.mxu0 0
    %2523 = vmatprep.subr.bf16.mxu0 0
    %2524 = vmatpush1.bf16.msra.mxu0 0
    %2525 = vmatprep.subr.bf16.mxu0 0
    %2526 = vmatpush1.bf16.msra.mxu0 0
    %2527 = vmatprep.subr.bf16.mxu0 0
    %2528 = vmatpush1.bf16.msra.mxu0 0
    %2529 = vmatprep.subr.bf16.mxu0 0
    %2530 = vmatpush1.bf16.msra.mxu0 0
    %2531 = vmatprep.subr.bf16.mxu0 0
    %2532 = vmatpush1.bf16.msra.mxu0 0
    %2533 = vmatprep.subr.bf16.mxu0 0
    %2534 = vmatpush1.bf16.msra.mxu0 0
    %2535 = vmatprep.subr.bf16.mxu0 0
    %2536 = vmatpush1.bf16.msra.mxu0 0
    %2537 = vmatprep.subr.bf16.mxu0 0
    %2538 = vmatpush1.bf16.msra.mxu0 0
    %2539 = vmatprep.subr.bf16.mxu0 0
    %2540 = vmatpush1.bf16.msra.mxu0 0
    %2541 = vmatprep.subr.bf16.mxu0 0
    %2542 = vmatpush1.bf16.msra.mxu0 0
    %2543 = vmatprep.subr.bf16.mxu0 0
    %2544 = vmatpush1.bf16.msra.mxu0 0
    %2545 = vmatprep.subr.bf16.mxu0 0
    %2546 = vmatpush1.bf16.msra.mxu0 0
    %2547 = vmatprep.subr.bf16.mxu0 0
    %2548 = vmatpush1.bf16.msra.mxu0 0
    %2549 = vmatprep.mubr.bf16.mxu0 0
    %2550 = vmatmul.mubr.bf16.gmra.mrb[0].mxu0 %v2515
    %v2551 = vpop.f32.mrb[0].mxu0
    %v2552 = vadd.f32 0.0, %v2551
    %v2553 = vpop.f32.mrb[0].mxu0
    %v2554 = vpop.f32.mrb[0].mxu0
    %v2555 = vpop.f32.mrb[0].mxu0
    %2556 = vdwg.mxu0
    %v2558 = vsel %vm266, %v2239, 0
    %2560 = vmatprep.subr.bf16.mxu0 0
    %2561 = vmatpush1.bf16.msra.mxu0 %v2254
    %2562 = vmatprep.subr.bf16.mxu0 0
    %2563 = vmatpush1.bf16.msra.mxu0 0
    %2564 = vmatprep.subr.bf16.mxu0 0
    %2565 = vmatpush1.bf16.msra.mxu0 0
    %2566 = vmatprep.subr.bf16.mxu0 0
    %2567 = vmatpush1.bf16.msra.mxu0 0
    %2568 = vmatprep.subr.bf16.mxu0 0
    %2569 = vmatpush1.bf16.msra.mxu0 0
    %2570 = vmatprep.subr.bf16.mxu0 0
    %2571 = vmatpush1.bf16.msra.mxu0 0
    %2572 = vmatprep.subr.bf16.mxu0 0
    %2573 = vmatpush1.bf16.msra.mxu0 0
    %2574 = vmatprep.subr.bf16.mxu0 0
    %2575 = vmatpush1.bf16.msra.mxu0 0
    %2576 = vmatprep.subr.bf16.mxu0 0
    %2577 = vmatpush1.bf16.msra.mxu0 0
    %2578 = vmatprep.subr.bf16.mxu0 0
    %2579 = vmatpush1.bf16.msra.mxu0 0
    %2580 = vmatprep.subr.bf16.mxu0 0
    %2581 = vmatpush1.bf16.msra.mxu0 0
    %2582 = vmatprep.subr.bf16.mxu0 0
    %2583 = vmatpush1.bf16.msra.mxu0 0
    %2584 = vmatprep.subr.bf16.mxu0 0
    %2585 = vmatpush1.bf16.msra.mxu0 0
    %2586 = vmatprep.subr.bf16.mxu0 0
    %2587 = vmatpush1.bf16.msra.mxu0 0
    %2588 = vmatprep.subr.bf16.mxu0 0
    %2589 = vmatpush1.bf16.msra.mxu0 0
    %2590 = vmatprep.subr.bf16.mxu0 0
    %2591 = vmatpush1.bf16.msra.mxu0 0
    %2592 = vmatprep.mubr.bf16.mxu0 0
    %2593 = vmatmul.mubr.bf16.gmra.mrb[0].mxu0 %v2558
    %v2594 = vpop.f32.mrb[0].mxu0
    %v2595 = vadd.f32 0.0, %v2594
    %v2596 = vpop.f32.mrb[0].mxu0
    %v2597 = vpop.f32.mrb[0].mxu0
    %v2598 = vpop.f32.mrb[0].mxu0
    %2599 = vdwg.mxu0
    %v2601 = vsel %vm266, %v2240, 0
    %2603 = vmatprep.subr.bf16.mxu0 0
    %2604 = vmatpush1.bf16.msra.mxu0 %v2254
    %2605 = vmatprep.subr.bf16.mxu0 0
    %2606 = vmatpush1.bf16.msra.mxu0 0
    %2607 = vmatprep.subr.bf16.mxu0 0
    %2608 = vmatpush1.bf16.msra.mxu0 0
    %2609 = vmatprep.subr.bf16.mxu0 0
    %2610 = vmatpush1.bf16.msra.mxu0 0
    %2611 = vmatprep.subr.bf16.mxu0 0
    %2612 = vmatpush1.bf16.msra.mxu0 0
    %2613 = vmatprep.subr.bf16.mxu0 0
    %2614 = vmatpush1.bf16.msra.mxu0 0
    %2615 = vmatprep.subr.bf16.mxu0 0
    %2616 = vmatpush1.bf16.msra.mxu0 0
    %2617 = vmatprep.subr.bf16.mxu0 0
    %2618 = vmatpush1.bf16.msra.mxu0 0
    %2619 = vmatprep.subr.bf16.mxu0 0
    %2620 = vmatpush1.bf16.msra.mxu0 0
    %2621 = vmatprep.subr.bf16.mxu0 0
    %2622 = vmatpush1.bf16.msra.mxu0 0
    %2623 = vmatprep.subr.bf16.mxu0 0
    %2624 = vmatpush1.bf16.msra.mxu0 0
    %2625 = vmatprep.subr.bf16.mxu0 0
    %2626 = vmatpush1.bf16.msra.mxu0 0
    %2627 = vmatprep.subr.bf16.mxu0 0
    %2628 = vmatpush1.bf16.msra.mxu0 0
    %2629 = vmatprep.subr.bf16.mxu0 0
    %2630 = vmatpush1.bf16.msra.mxu0 0
    %2631 = vmatprep.subr.bf16.mxu0 0
    %2632 = vmatpush1.bf16.msra.mxu0 0
    %2633 = vmatprep.subr.bf16.mxu0 0
    %2634 = vmatpush1.bf16.msra.mxu0 0
    %2635 = vmatprep.mubr.bf16.mxu0 0
    %2636 = vmatmul.mubr.bf16.gmra.mrb[0].mxu0 %v2601
    %v2637 = vpop.f32.mrb[0].mxu0
    %v2638 = vadd.f32 0.0, %v2637
    %v2639 = vpop.f32.mrb[0].mxu0
    %v2640 = vpop.f32.mrb[0].mxu0
    %v2641 = vpop.f32.mrb[0].mxu0
    %2642 = vdwg.mxu0
    %v2644 = vsel %vm266, %v2241, 0
    %2646 = vmatprep.subr.bf16.mxu0 0
    %2647 = vmatpush1.bf16.msra.mxu0 %v2254
    %2648 = vmatprep.subr.bf16.mxu0 0
    %2649 = vmatpush1.bf16.msra.mxu0 0
    %2650 = vmatprep.subr.bf16.mxu0 0
    %2651 = vmatpush1.bf16.msra.mxu0 0
    %2652 = vmatprep.subr.bf16.mxu0 0
    %2653 = vmatpush1.bf16.msra.mxu0 0
    %2654 = vmatprep.subr.bf16.mxu0 0
    %2655 = vmatpush1.bf16.msra.mxu0 0
    %2656 = vmatprep.subr.bf16.mxu0 0
    %2657 = vmatpush1.bf16.msra.mxu0 0
    %2658 = vmatprep.subr.bf16.mxu0 0
    %2659 = vmatpush1.bf16.msra.mxu0 0
    %2660 = vmatprep.subr.bf16.mxu0 0
    %2661 = vmatpush1.bf16.msra.mxu0 0
    %2662 = vmatprep.subr.bf16.mxu0 0
    %2663 = vmatpush1.bf16.msra.mxu0 0
    %2664 = vmatprep.subr.bf16.mxu0 0
    %2665 = vmatpush1.bf16.msra.mxu0 0
    %2666 = vmatprep.subr.bf16.mxu0 0
    %2667 = vmatpush1.bf16.msra.mxu0 0
    %2668 = vmatprep.subr.bf16.mxu0 0
    %2669 = vmatpush1.bf16.msra.mxu0 0
    %2670 = vmatprep.subr.bf16.mxu0 0
    %2671 = vmatpush1.bf16.msra.mxu0 0
    %2672 = vmatprep.subr.bf16.mxu0 0
    %2673 = vmatpush1.bf16.msra.mxu0 0
    %2674 = vmatprep.subr.bf16.mxu0 0
    %2675 = vmatpush1.bf16.msra.mxu0 0
    %2676 = vmatprep.subr.bf16.mxu0 0
    %2677 = vmatpush1.bf16.msra.mxu0 0
    %2678 = vmatprep.mubr.bf16.mxu0 0
    %2679 = vmatmul.mubr.bf16.gmra.mrb[0].mxu0 %v2644
    %v2680 = vpop.f32.mrb[0].mxu0
    %v2681 = vadd.f32 0.0, %v2680
    %v2682 = vpop.f32.mrb[0].mxu0
    %v2683 = vpop.f32.mrb[0].mxu0
    %v2684 = vpop.f32.mrb[0].mxu0
    %2685 = vdwg.mxu0
    %v2687 = vsel %vm266, %v2242, 0
    %2689 = vmatprep.subr.bf16.mxu0 0
    %2690 = vmatpush1.bf16.msra.mxu0 %v2254
    %2691 = vmatprep.subr.bf16.mxu0 0
    %2692 = vmatpush1.bf16.msra.mxu0 0
    %2693 = vmatprep.subr.bf16.mxu0 0
    %2694 = vmatpush1.bf16.msra.mxu0 0
    %2695 = vmatprep.subr.bf16.mxu0 0
    %2696 = vmatpush1.bf16.msra.mxu0 0
    %2697 = vmatprep.subr.bf16.mxu0 0
    %2698 = vmatpush1.bf16.msra.mxu0 0
    %2699 = vmatprep.subr.bf16.mxu0 0
    %2700 = vmatpush1.bf16.msra.mxu0 0
    %2701 = vmatprep.subr.bf16.mxu0 0
    %2702 = vmatpush1.bf16.msra.mxu0 0
    %2703 = vmatprep.subr.bf16.mxu0 0
    %2704 = vmatpush1.bf16.msra.mxu0 0
    %2705 = vmatprep.subr.bf16.mxu0 0
    %2706 = vmatpush1.bf16.msra.mxu0 0
    %2707 = vmatprep.subr.bf16.mxu0 0
    %2708 = vmatpush1.bf16.msra.mxu0 0
    %2709 = vmatprep.subr.bf16.mxu0 0
    %2710 = vmatpush1.bf16.msra.mxu0 0
    %2711 = vmatprep.subr.bf16.mxu0 0
    %2712 = vmatpush1.bf16.msra.mxu0 0
    %2713 = vmatprep.subr.bf16.mxu0 0
    %2714 = vmatpush1.bf16.msra.mxu0 0
    %2715 = vmatprep.subr.bf16.mxu0 0
    %2716 = vmatpush1.bf16.msra.mxu0 0
    %2717 = vmatprep.subr.bf16.mxu0 0
    %2718 = vmatpush1.bf16.msra.mxu0 0
    %2719 = vmatprep.subr.bf16.mxu0 0
    %2720 = vmatpush1.bf16.msra.mxu0 0
    %2721 = vmatprep.mubr.bf16.mxu0 0
    %2722 = vmatmul.mubr.bf16.gmra.mrb[0].mxu0 %v2687
    %v2723 = vpop.f32.mrb[0].mxu0
    %v2724 = vadd.f32 0.0, %v2723
    %v2725 = vpop.f32.mrb[0].mxu0
    %v2726 = vpop.f32.mrb[0].mxu0
    %v2727 = vpop.f32.mrb[0].mxu0
    %2728 = vdwg.mxu0
    %v2730 = vsel %vm266, %v2243, 0
    %2732 = vmatprep.subr.bf16.mxu0 0
    %2733 = vmatpush1.bf16.msra.mxu0 %v2254
    %2734 = vmatprep.subr.bf16.mxu0 0
    %2735 = vmatpush1.bf16.msra.mxu0 0
    %2736 = vmatprep.subr.bf16.mxu0 0
    %2737 = vmatpush1.bf16.msra.mxu0 0
    %2738 = vmatprep.subr.bf16.mxu0 0
    %2739 = vmatpush1.bf16.msra.mxu0 0
    %2740 = vmatprep.subr.bf16.mxu0 0
    %2741 = vmatpush1.bf16.msra.mxu0 0
    %2742 = vmatprep.subr.bf16.mxu0 0
    %2743 = vmatpush1.bf16.msra.mxu0 0
    %2744 = vmatprep.subr.bf16.mxu0 0
    %2745 = vmatpush1.bf16.msra.mxu0 0
    %2746 = vmatprep.subr.bf16.mxu0 0
    %2747 = vmatpush1.bf16.msra.mxu0 0
    %2748 = vmatprep.subr.bf16.mxu0 0
    %2749 = vmatpush1.bf16.msra.mxu0 0
    %2750 = vmatprep.subr.bf16.mxu0 0
    %2751 = vmatpush1.bf16.msra.mxu0 0
    %2752 = vmatprep.subr.bf16.mxu0 0
    %2753 = vmatpush1.bf16.msra.mxu0 0
    %2754 = vmatprep.subr.bf16.mxu0 0
    %2755 = vmatpush1.bf16.msra.mxu0 0
    %2756 = vmatprep.subr.bf16.mxu0 0
    %2757 = vmatpush1.bf16.msra.mxu0 0
    %2758 = vmatprep.subr.bf16.mxu0 0
    %2759 = vmatpush1.bf16.msra.mxu0 0
    %2760 = vmatprep.subr.bf16.mxu0 0
    %2761 = vmatpush1.bf16.msra.mxu0 0
    %2762 = vmatprep.subr.bf16.mxu0 0
    %2763 = vmatpush1.bf16.msra.mxu0 0
    %2764 = vmatprep.mubr.bf16.mxu0 0
    %2765 = vmatmul.mubr.bf16.gmra.mrb[0].mxu0 %v2730
    %v2766 = vpop.f32.mrb[0].mxu0
    %v2767 = vadd.f32 0.0, %v2766
    %v2768 = vpop.f32.mrb[0].mxu0
    %v2769 = vpop.f32.mrb[0].mxu0
    %v2770 = vpop.f32.mrb[0].mxu0
    %2771 = vdwg.mxu0
    %v2773 = vsel %vm266, %v2244, 0
    %2775 = vmatprep.subr.bf16.mxu0 0
    %2776 = vmatpush1.bf16.msra.mxu0 %v2254
    %2777 = vmatprep.subr.bf16.mxu0 0
    %2778 = vmatpush1.bf16.msra.mxu0 0
    %2779 = vmatprep.subr.bf16.mxu0 0
    %2780 = vmatpush1.bf16.msra.mxu0 0
    %2781 = vmatprep.subr.bf16.mxu0 0
    %2782 = vmatpush1.bf16.msra.mxu0 0
    %2783 = vmatprep.subr.bf16.mxu0 0
    %2784 = vmatpush1.bf16.msra.mxu0 0
    %2785 = vmatprep.subr.bf16.mxu0 0
    %2786 = vmatpush1.bf16.msra.mxu0 0
    %2787 = vmatprep.subr.bf16.mxu0 0
    %2788 = vmatpush1.bf16.msra.mxu0 0
    %2789 = vmatprep.subr.bf16.mxu0 0
    %2790 = vmatpush1.bf16.msra.mxu0 0
    %2791 = vmatprep.subr.bf16.mxu0 0
    %2792 = vmatpush1.bf16.msra.mxu0 0
    %2793 = vmatprep.subr.bf16.mxu0 0
    %2794 = vmatpush1.bf16.msra.mxu0 0
    %2795 = vmatprep.subr.bf16.mxu0 0
    %2796 = vmatpush1.bf16.msra.mxu0 0
    %2797 = vmatprep.subr.bf16.mxu0 0
    %2798 = vmatpush1.bf16.msra.mxu0 0
    %2799 = vmatprep.subr.bf16.mxu0 0
    %2800 = vmatpush1.bf16.msra.mxu0 0
    %2801 = vmatprep.subr.bf16.mxu0 0
    %2802 = vmatpush1.bf16.msra.mxu0 0
    %2803 = vmatprep.subr.bf16.mxu0 0
    %2804 = vmatpush1.bf16.msra.mxu0 0
    %2805 = vmatprep.subr.bf16.mxu0 0
    %2806 = vmatpush1.bf16.msra.mxu0 0
    %2807 = vmatprep.mubr.bf16.mxu0 0
    %2808 = vmatmul.mubr.bf16.gmra.mrb[0].mxu0 %v2773
    %v2809 = vpop.f32.mrb[0].mxu0
    %v2810 = vadd.f32 0.0, %v2809
    %v2811 = vpop.f32.mrb[0].mxu0
    %v2812 = vpop.f32.mrb[0].mxu0
    %v2813 = vpop.f32.mrb[0].mxu0
    %2814 = vdwg.mxu0
    %v2816 = vsel %vm266, %v2245, 0
    %2818 = vmatprep.subr.bf16.mxu0 0
    %2819 = vmatpush1.bf16.msra.mxu0 %v2254
    %2820 = vmatprep.subr.bf16.mxu0 0
    %2821 = vmatpush1.bf16.msra.mxu0 0
    %2822 = vmatprep.subr.bf16.mxu0 0
    %2823 = vmatpush1.bf16.msra.mxu0 0
    %2824 = vmatprep.subr.bf16.mxu0 0
    %2825 = vmatpush1.bf16.msra.mxu0 0
    %2826 = vmatprep.subr.bf16.mxu0 0
    %2827 = vmatpush1.bf16.msra.mxu0 0
    %2828 = vmatprep.subr.bf16.mxu0 0
    %2829 = vmatpush1.bf16.msra.mxu0 0
    %2830 = vmatprep.subr.bf16.mxu0 0
    %2831 = vmatpush1.bf16.msra.mxu0 0
    %2832 = vmatprep.subr.bf16.mxu0 0
    %2833 = vmatpush1.bf16.msra.mxu0 0
    %2834 = vmatprep.subr.bf16.mxu0 0
    %2835 = vmatpush1.bf16.msra.mxu0 0
    %2836 = vmatprep.subr.bf16.mxu0 0
    %2837 = vmatpush1.bf16.msra.mxu0 0
    %2838 = vmatprep.subr.bf16.mxu0 0
    %2839 = vmatpush1.bf16.msra.mxu0 0
    %2840 = vmatprep.subr.bf16.mxu0 0
    %2841 = vmatpush1.bf16.msra.mxu0 0
    %2842 = vmatprep.subr.bf16.mxu0 0
    %2843 = vmatpush1.bf16.msra.mxu0 0
    %2844 = vmatprep.subr.bf16.mxu0 0
    %2845 = vmatpush1.bf16.msra.mxu0 0
    %2846 = vmatprep.subr.bf16.mxu0 0
    %2847 = vmatpush1.bf16.msra.mxu0 0
    %2848 = vmatprep.subr.bf16.mxu0 0
    %2849 = vmatpush1.bf16.msra.mxu0 0
    %2850 = vmatprep.mubr.bf16.mxu0 0
    %2851 = vmatmul.mubr.bf16.gmra.mrb[0].mxu0 %v2816
    %v2852 = vpop.f32.mrb[0].mxu0
    %v2853 = vadd.f32 0.0, %v2852
    %v2854 = vpop.f32.mrb[0].mxu0
    %v2855 = vpop.f32.mrb[0].mxu0
    %v2856 = vpop.f32.mrb[0].mxu0
    %2857 = vdwg.mxu0
    %v2859 = vsel %vm266, %v2246, 0
    %2861 = vmatprep.subr.bf16.mxu0 0
    %2862 = vmatpush1.bf16.msra.mxu0 %v2254
    %2863 = vmatprep.subr.bf16.mxu0 0
    %2864 = vmatpush1.bf16.msra.mxu0 0
    %2865 = vmatprep.subr.bf16.mxu0 0
    %2866 = vmatpush1.bf16.msra.mxu0 0
    %2867 = vmatprep.subr.bf16.mxu0 0
    %2868 = vmatpush1.bf16.msra.mxu0 0
    %2869 = vmatprep.subr.bf16.mxu0 0
    %2870 = vmatpush1.bf16.msra.mxu0 0
    %2871 = vmatprep.subr.bf16.mxu0 0
    %2872 = vmatpush1.bf16.msra.mxu0 0
    %2873 = vmatprep.subr.bf16.mxu0 0
    %2874 = vmatpush1.bf16.msra.mxu0 0
    %2875 = vmatprep.subr.bf16.mxu0 0
    %2876 = vmatpush1.bf16.msra.mxu0 0
    %2877 = vmatprep.subr.bf16.mxu0 0
    %2878 = vmatpush1.bf16.msra.mxu0 0
    %2879 = vmatprep.subr.bf16.mxu0 0
    %2880 = vmatpush1.bf16.msra.mxu0 0
    %2881 = vmatprep.subr.bf16.mxu0 0
    %2882 = vmatpush1.bf16.msra.mxu0 0
    %2883 = vmatprep.subr.bf16.mxu0 0
    %2884 = vmatpush1.bf16.msra.mxu0 0
    %2885 = vmatprep.subr.bf16.mxu0 0
    %2886 = vmatpush1.bf16.msra.mxu0 0
    %2887 = vmatprep.subr.bf16.mxu0 0
    %2888 = vmatpush1.bf16.msra.mxu0 0
    %2889 = vmatprep.subr.bf16.mxu0 0
    %2890 = vmatpush1.bf16.msra.mxu0 0
    %2891 = vmatprep.subr.bf16.mxu0 0
    %2892 = vmatpush1.bf16.msra.mxu0 0
    %2893 = vmatprep.mubr.bf16.mxu0 0
    %2894 = vmatmul.mubr.bf16.gmra.mrb[0].mxu0 %v2859
    %v2895 = vpop.f32.mrb[0].mxu0
    %v2896 = vadd.f32 0.0, %v2895
    %v2897 = vpop.f32.mrb[0].mxu0
    %v2898 = vpop.f32.mrb[0].mxu0
    %v2899 = vpop.f32.mrb[0].mxu0
    %2900 = vdwg.mxu0
    %v2902 = vsel %vm266, %v2247, 0
    %2904 = vmatprep.subr.bf16.mxu0 0
    %2905 = vmatpush1.bf16.msra.mxu0 %v2254
    %2906 = vmatprep.subr.bf16.mxu0 0
    %2907 = vmatpush1.bf16.msra.mxu0 0
    %2908 = vmatprep.subr.bf16.mxu0 0
    %2909 = vmatpush1.bf16.msra.mxu0 0
    %2910 = vmatprep.subr.bf16.mxu0 0
    %2911 = vmatpush1.bf16.msra.mxu0 0
    %2912 = vmatprep.subr.bf16.mxu0 0
    %2913 = vmatpush1.bf16.msra.mxu0 0
    %2914 = vmatprep.subr.bf16.mxu0 0
    %2915 = vmatpush1.bf16.msra.mxu0 0
    %2916 = vmatprep.subr.bf16.mxu0 0
    %2917 = vmatpush1.bf16.msra.mxu0 0
    %2918 = vmatprep.subr.bf16.mxu0 0
    %2919 = vmatpush1.bf16.msra.mxu0 0
    %2920 = vmatprep.subr.bf16.mxu0 0
    %2921 = vmatpush1.bf16.msra.mxu0 0
    %2922 = vmatprep.subr.bf16.mxu0 0
    %2923 = vmatpush1.bf16.msra.mxu0 0
    %2924 = vmatprep.subr.bf16.mxu0 0
    %2925 = vmatpush1.bf16.msra.mxu0 0
    %2926 = vmatprep.subr.bf16.mxu0 0
    %2927 = vmatpush1.bf16.msra.mxu0 0
    %2928 = vmatprep.subr.bf16.mxu0 0
    %2929 = vmatpush1.bf16.msra.mxu0 0
    %2930 = vmatprep.subr.bf16.mxu0 0
    %2931 = vmatpush1.bf16.msra.mxu0 0
    %2932 = vmatprep.subr.bf16.mxu0 0
    %2933 = vmatpush1.bf16.msra.mxu0 0
    %2934 = vmatprep.subr.bf16.mxu0 0
    %2935 = vmatpush1.bf16.msra.mxu0 0
    %2936 = vmatprep.mubr.bf16.mxu0 0
    %2937 = vmatmul.mubr.bf16.gmra.mrb[0].mxu0 %v2902
    %v2938 = vpop.f32.mrb[0].mxu0
    %v2939 = vadd.f32 0.0, %v2938
    %v2940 = vpop.f32.mrb[0].mxu0
    %v2941 = vpop.f32.mrb[0].mxu0
    %v2942 = vpop.f32.mrb[0].mxu0
    %2943 = vdwg.mxu0
    %s2944 = scalar_lea.vmem [#allocation5], 8
    %v2945 = vld [vmem:[%s2944] sm:$0xf]
    %v2946 = vld [vmem:[%s2944 + $0x4] sm:$0xf]
    %v2949 = vunpack.c.l.b16 %v2945
    %v2950 = vunpack.c.l.b16 %v2946
    %v2951 = vpack.c.b16 %v2950, %v2949
    %2953 = vmatprep.subr.bf16.mxu0 0
    %2954 = vmatpush1.bf16.msra.mxu0 %v2951
    %2955 = vmatprep.subr.bf16.mxu0 0
    %2956 = vmatpush1.bf16.msra.mxu0 0
    %2957 = vmatprep.subr.bf16.mxu0 0
    %2958 = vmatpush1.bf16.msra.mxu0 0
    %2959 = vmatprep.subr.bf16.mxu0 0
    %2960 = vmatpush1.bf16.msra.mxu0 0
    %2961 = vmatprep.subr.bf16.mxu0 0
    %2962 = vmatpush1.bf16.msra.mxu0 0
    %2963 = vmatprep.subr.bf16.mxu0 0
    %2964 = vmatpush1.bf16.msra.mxu0 0
    %2965 = vmatprep.subr.bf16.mxu0 0
    %2966 = vmatpush1.bf16.msra.mxu0 0
    %2967 = vmatprep.subr.bf16.mxu0 0
    %2968 = vmatpush1.bf16.msra.mxu0 0
    %2969 = vmatprep.subr.bf16.mxu0 0
    %2970 = vmatpush1.bf16.msra.mxu0 0
    %2971 = vmatprep.subr.bf16.mxu0 0
    %2972 = vmatpush1.bf16.msra.mxu0 0
    %2973 = vmatprep.subr.bf16.mxu0 0
    %2974 = vmatpush1.bf16.msra.mxu0 0
    %2975 = vmatprep.subr.bf16.mxu0 0
    %2976 = vmatpush1.bf16.msra.mxu0 0
    %2977 = vmatprep.subr.bf16.mxu0 0
    %2978 = vmatpush1.bf16.msra.mxu0 0
    %2979 = vmatprep.subr.bf16.mxu0 0
    %2980 = vmatpush1.bf16.msra.mxu0 0
    %2981 = vmatprep.subr.bf16.mxu0 0
    %2982 = vmatpush1.bf16.msra.mxu0 0
    %2983 = vmatprep.subr.bf16.mxu0 0
    %2984 = vmatpush1.bf16.msra.mxu0 0
    %2985 = vmatprep.mubr.bf16.mxu0 0
    %2986 = vmatmul.mubr.bf16.gmra.mrb[0].mxu0 %v2257
    %v2987 = vpop.f32.mrb[0].mxu0
    %v2988 = vadd.f32 0.0, %v2987
    %v2989 = vpop.f32.mrb[0].mxu0
    %v2990 = vpop.f32.mrb[0].mxu0
    %v2991 = vpop.f32.mrb[0].mxu0
    %2992 = vdwg.mxu0
    %2993 = vmatprep.subr.bf16.mxu0 0
    %2994 = vmatpush1.bf16.msra.mxu0 %v2951
    %2995 = vmatprep.subr.bf16.mxu0 0
    %2996 = vmatpush1.bf16.msra.mxu0 0
    %2997 = vmatprep.subr.bf16.mxu0 0
    %2998 = vmatpush1.bf16.msra.mxu0 0
    %2999 = vmatprep.subr.bf16.mxu0 0
    %3000 = vmatpush1.bf16.msra.mxu0 0
    %3001 = vmatprep.subr.bf16.mxu0 0
    %3002 = vmatpush1.bf16.msra.mxu0 0
    %3003 = vmatprep.subr.bf16.mxu0 0
    %3004 = vmatpush1.bf16.msra.mxu0 0
    %3005 = vmatprep.subr.bf16.mxu0 0
    %3006 = vmatpush1.bf16.msra.mxu0 0
    %3007 = vmatprep.subr.bf16.mxu0 0
    %3008 = vmatpush1.bf16.msra.mxu0 0
    %3009 = vmatprep.subr.bf16.mxu0 0
    %3010 = vmatpush1.bf16.msra.mxu0 0
    %3011 = vmatprep.subr.bf16.mxu0 0
    %3012 = vmatpush1.bf16.msra.mxu0 0
    %3013 = vmatprep.subr.bf16.mxu0 0
    %3014 = vmatpush1.bf16.msra.mxu0 0
    %3015 = vmatprep.subr.bf16.mxu0 0
    %3016 = vmatpush1.bf16.msra.mxu0 0
    %3017 = vmatprep.subr.bf16.mxu0 0
    %3018 = vmatpush1.bf16.msra.mxu0 0
    %3019 = vmatprep.subr.bf16.mxu0 0
    %3020 = vmatpush1.bf16.msra.mxu0 0
    %3021 = vmatprep.subr.bf16.mxu0 0
    %3022 = vmatpush1.bf16.msra.mxu0 0
    %3023 = vmatprep.subr.bf16.mxu0 0
    %3024 = vmatpush1.bf16.msra.mxu0 0
    %3025 = vmatprep.mubr.bf16.mxu0 0
    %3026 = vmatmul.mubr.bf16.gmra.mrb[0].mxu0 %v2300
    %v3027 = vpop.f32.mrb[0].mxu0
    %v3028 = vadd.f32 0.0, %v3027
    %v3029 = vpop.f32.mrb[0].mxu0
    %v3030 = vpop.f32.mrb[0].mxu0
    %v3031 = vpop.f32.mrb[0].mxu0
    %3032 = vdwg.mxu0
    %3033 = vmatprep.subr.bf16.mxu0 0
    %3034 = vmatpush1.bf16.msra.mxu0 %v2951
    %3035 = vmatprep.subr.bf16.mxu0 0
    %3036 = vmatpush1.bf16.msra.mxu0 0
    %3037 = vmatprep.subr.bf16.mxu0 0
    %3038 = vmatpush1.bf16.msra.mxu0 0
    %3039 = vmatprep.subr.bf16.mxu0 0
    %3040 = vmatpush1.bf16.msra.mxu0 0
    %3041 = vmatprep.subr.bf16.mxu0 0
    %3042 = vmatpush1.bf16.msra.mxu0 0
    %3043 = vmatprep.subr.bf16.mxu0 0
    %3044 = vmatpush1.bf16.msra.mxu0 0
    %3045 = vmatprep.subr.bf16.mxu0 0
    %3046 = vmatpush1.bf16.msra.mxu0 0
    %3047 = vmatprep.subr.bf16.mxu0 0
    %3048 = vmatpush1.bf16.msra.mxu0 0
    %3049 = vmatprep.subr.bf16.mxu0 0
    %3050 = vmatpush1.bf16.msra.mxu0 0
    %3051 = vmatprep.subr.bf16.mxu0 0
    %3052 = vmatpush1.bf16.msra.mxu0 0
    %3053 = vmatprep.subr.bf16.mxu0 0
    %3054 = vmatpush1.bf16.msra.mxu0 0
    %3055 = vmatprep.subr.bf16.mxu0 0
    %3056 = vmatpush1.bf16.msra.mxu0 0
    %3057 = vmatprep.subr.bf16.mxu0 0
    %3058 = vmatpush1.bf16.msra.mxu0 0
    %3059 = vmatprep.subr.bf16.mxu0 0
    %3060 = vmatpush1.bf16.msra.mxu0 0
    %3061 = vmatprep.subr.bf16.mxu0 0
    %3062 = vmatpush1.bf16.msra.mxu0 0
    %3063 = vmatprep.subr.bf16.mxu0 0
    %3064 = vmatpush1.bf16.msra.mxu0 0
    %3065 = vmatprep.mubr.bf16.mxu0 0
    %3066 = vmatmul.mubr.bf16.gmra.mrb[0].mxu0 %v2343
    %v3067 = vpop.f32.mrb[0].mxu0
    %v3068 = vadd.f32 0.0, %v3067
    %v3069 = vpop.f32.mrb[0].mxu0
    %v3070 = vpop.f32.mrb[0].mxu0
    %v3071 = vpop.f32.mrb[0].mxu0
    %3072 = vdwg.mxu0
    %3073 = vmatprep.subr.bf16.mxu0 0
    %3074 = vmatpush1.bf16.msra.mxu0 %v2951
    %3075 = vmatprep.subr.bf16.mxu0 0
    %3076 = vmatpush1.bf16.msra.mxu0 0
    %3077 = vmatprep.subr.bf16.mxu0 0
    %3078 = vmatpush1.bf16.msra.mxu0 0
    %3079 = vmatprep.subr.bf16.mxu0 0
    %3080 = vmatpush1.bf16.msra.mxu0 0
    %3081 = vmatprep.subr.bf16.mxu0 0
    %3082 = vmatpush1.bf16.msra.mxu0 0
    %3083 = vmatprep.subr.bf16.mxu0 0
    %3084 = vmatpush1.bf16.msra.mxu0 0
    %3085 = vmatprep.subr.bf16.mxu0 0
    %3086 = vmatpush1.bf16.msra.mxu0 0
    %3087 = vmatprep.subr.bf16.mxu0 0
    %3088 = vmatpush1.bf16.msra.mxu0 0
    %3089 = vmatprep.subr.bf16.mxu0 0
    %3090 = vmatpush1.bf16.msra.mxu0 0
    %3091 = vmatprep.subr.bf16.mxu0 0
    %3092 = vmatpush1.bf16.msra.mxu0 0
    %3093 = vmatprep.subr.bf16.mxu0 0
    %3094 = vmatpush1.bf16.msra.mxu0 0
    %3095 = vmatprep.subr.bf16.mxu0 0
    %3096 = vmatpush1.bf16.msra.mxu0 0
    %3097 = vmatprep.subr.bf16.mxu0 0
    %3098 = vmatpush1.bf16.msra.mxu0 0
    %3099 = vmatprep.subr.bf16.mxu0 0
    %3100 = vmatpush1.bf16.msra.mxu0 0
    %3101 = vmatprep.subr.bf16.mxu0 0
    %3102 = vmatpush1.bf16.msra.mxu0 0
    %3103 = vmatprep.subr.bf16.mxu0 0
    %3104 = vmatpush1.bf16.msra.mxu0 0
    %3105 = vmatprep.mubr.bf16.mxu0 0
    %3106 = vmatmul.mubr.bf16.gmra.mrb[0].mxu0 %v2386
    %v3107 = vpop.f32.mrb[0].mxu0
    %v3108 = vadd.f32 0.0, %v3107
    %v3109 = vpop.f32.mrb[0].mxu0
    %v3110 = vpop.f32.mrb[0].mxu0
    %v3111 = vpop.f32.mrb[0].mxu0
    %3112 = vdwg.mxu0
    %3113 = vmatprep.subr.bf16.mxu0 0
    %3114 = vmatpush1.bf16.msra.mxu0 %v2951
    %3115 = vmatprep.subr.bf16.mxu0 0
    %3116 = vmatpush1.bf16.msra.mxu0 0
    %3117 = vmatprep.subr.bf16.mxu0 0
    %3118 = vmatpush1.bf16.msra.mxu0 0
    %3119 = vmatprep.subr.bf16.mxu0 0
    %3120 = vmatpush1.bf16.msra.mxu0 0
    %3121 = vmatprep.subr.bf16.mxu0 0
    %3122 = vmatpush1.bf16.msra.mxu0 0
    %3123 = vmatprep.subr.bf16.mxu0 0
    %3124 = vmatpush1.bf16.msra.mxu0 0
    %3125 = vmatprep.subr.bf16.mxu0 0
    %3126 = vmatpush1.bf16.msra.mxu0 0
    %3127 = vmatprep.subr.bf16.mxu0 0
    %3128 = vmatpush1.bf16.msra.mxu0 0
    %3129 = vmatprep.subr.bf16.mxu0 0
    %3130 = vmatpush1.bf16.msra.mxu0 0
    %3131 = vmatprep.subr.bf16.mxu0 0
    %3132 = vmatpush1.bf16.msra.mxu0 0
    %3133 = vmatprep.subr.bf16.mxu0 0
    %3134 = vmatpush1.bf16.msra.mxu0 0
    %3135 = vmatprep.subr.bf16.mxu0 0
    %3136 = vmatpush1.bf16.msra.mxu0 0
    %3137 = vmatprep.subr.bf16.mxu0 0
    %3138 = vmatpush1.bf16.msra.mxu0 0
    %3139 = vmatprep.subr.bf16.mxu0 0
    %3140 = vmatpush1.bf16.msra.mxu0 0
    %3141 = vmatprep.subr.bf16.mxu0 0
    %3142 = vmatpush1.bf16.msra.mxu0 0
    %3143 = vmatprep.subr.bf16.mxu0 0
    %3144 = vmatpush1.bf16.msra.mxu0 0
    %3145 = vmatprep.mubr.bf16.mxu0 0
    %3146 = vmatmul.mubr.bf16.gmra.mrb[0].mxu0 %v2429
    %v3147 = vpop.f32.mrb[0].mxu0
    %v3148 = vadd.f32 0.0, %v3147
    %v3149 = vpop.f32.mrb[0].mxu0
    %v3150 = vpop.f32.mrb[0].mxu0
    %v3151 = vpop.f32.mrb[0].mxu0
    %3152 = vdwg.mxu0
    %3153 = vmatprep.subr.bf16.mxu0 0
    %3154 = vmatpush1.bf16.msra.mxu0 %v2951
    %3155 = vmatprep.subr.bf16.mxu0 0
    %3156 = vmatpush1.bf16.msra.mxu0 0
    %3157 = vmatprep.subr.bf16.mxu0 0
    %3158 = vmatpush1.bf16.msra.mxu0 0
    %3159 = vmatprep.subr.bf16.mxu0 0
    %3160 = vmatpush1.bf16.msra.mxu0 0
    %3161 = vmatprep.subr.bf16.mxu0 0
    %3162 = vmatpush1.bf16.msra.mxu0 0
    %3163 = vmatprep.subr.bf16.mxu0 0
    %3164 = vmatpush1.bf16.msra.mxu0 0
    %3165 = vmatprep.subr.bf16.mxu0 0
    %3166 = vmatpush1.bf16.msra.mxu0 0
    %3167 = vmatprep.subr.bf16.mxu0 0
    %3168 = vmatpush1.bf16.msra.mxu0 0
    %3169 = vmatprep.subr.bf16.mxu0 0
    %3170 = vmatpush1.bf16.msra.mxu0 0
    %3171 = vmatprep.subr.bf16.mxu0 0
    %3172 = vmatpush1.bf16.msra.mxu0 0
    %3173 = vmatprep.subr.bf16.mxu0 0
    %3174 = vmatpush1.bf16.msra.mxu0 0
    %3175 = vmatprep.subr.bf16.mxu0 0
    %3176 = vmatpush1.bf16.msra.mxu0 0
    %3177 = vmatprep.subr.bf16.mxu0 0
    %3178 = vmatpush1.bf16.msra.mxu0 0
    %3179 = vmatprep.subr.bf16.mxu0 0
    %3180 = vmatpush1.bf16.msra.mxu0 0
    %3181 = vmatprep.subr.bf16.mxu0 0
    %3182 = vmatpush1.bf16.msra.mxu0 0
    %3183 = vmatprep.subr.bf16.mxu0 0
    %3184 = vmatpush1.bf16.msra.mxu0 0
    %3185 = vmatprep.mubr.bf16.mxu0 0
    %3186 = vmatmul.mubr.bf16.gmra.mrb[0].mxu0 %v2472
    %v3187 = vpop.f32.mrb[0].mxu0
    %v3188 = vadd.f32 0.0, %v3187
    %v3189 = vpop.f32.mrb[0].mxu0
    %v3190 = vpop.f32.mrb[0].mxu0
    %v3191 = vpop.f32.mrb[0].mxu0
    %3192 = vdwg.mxu0
    %3193 = vmatprep.subr.bf16.mxu0 0
    %3194 = vmatpush1.bf16.msra.mxu0 %v2951
    %3195 = vmatprep.subr.bf16.mxu0 0
    %3196 = vmatpush1.bf16.msra.mxu0 0
    %3197 = vmatprep.subr.bf16.mxu0 0
    %3198 = vmatpush1.bf16.msra.mxu0 0
    %3199 = vmatprep.subr.bf16.mxu0 0
    %3200 = vmatpush1.bf16.msra.mxu0 0
    %3201 = vmatprep.subr.bf16.mxu0 0
    %3202 = vmatpush1.bf16.msra.mxu0 0
    %3203 = vmatprep.subr.bf16.mxu0 0
    %3204 = vmatpush1.bf16.msra.mxu0 0
    %3205 = vmatprep.subr.bf16.mxu0 0
    %3206 = vmatpush1.bf16.msra.mxu0 0
    %3207 = vmatprep.subr.bf16.mxu0 0
    %3208 = vmatpush1.bf16.msra.mxu0 0
    %3209 = vmatprep.subr.bf16.mxu0 0
    %3210 = vmatpush1.bf16.msra.mxu0 0
    %3211 = vmatprep.subr.bf16.mxu0 0
    %3212 = vmatpush1.bf16.msra.mxu0 0
    %3213 = vmatprep.subr.bf16.mxu0 0
    %3214 = vmatpush1.bf16.msra.mxu0 0
    %3215 = vmatprep.subr.bf16.mxu0 0
    %3216 = vmatpush1.bf16.msra.mxu0 0
    %3217 = vmatprep.subr.bf16.mxu0 0
    %3218 = vmatpush1.bf16.msra.mxu0 0
    %3219 = vmatprep.subr.bf16.mxu0 0
    %3220 = vmatpush1.bf16.msra.mxu0 0
    %3221 = vmatprep.subr.bf16.mxu0 0
    %3222 = vmatpush1.bf16.msra.mxu0 0
    %3223 = vmatprep.subr.bf16.mxu0 0
    %3224 = vmatpush1.bf16.msra.mxu0 0
    %3225 = vmatprep.mubr.bf16.mxu0 0
    %3226 = vmatmul.mubr.bf16.gmra.mrb[0].mxu0 %v2515
    %v3227 = vpop.f32.mrb[0].mxu0
    %v3228 = vadd.f32 0.0, %v3227
    %v3229 = vpop.f32.mrb[0].mxu0
    %v3230 = vpop.f32.mrb[0].mxu0
    %v3231 = vpop.f32.mrb[0].mxu0
    %3232 = vdwg.mxu0
    %3233 = vmatprep.subr.bf16.mxu0 0
    %3234 = vmatpush1.bf16.msra.mxu0 %v2951
    %3235 = vmatprep.subr.bf16.mxu0 0
    %3236 = vmatpush1.bf16.msra.mxu0 0
    %3237 = vmatprep.subr.bf16.mxu0 0
    %3238 = vmatpush1.bf16.msra.mxu0 0
    %3239 = vmatprep.subr.bf16.mxu0 0
    %3240 = vmatpush1.bf16.msra.mxu0 0
    %3241 = vmatprep.subr.bf16.mxu0 0
    %3242 = vmatpush1.bf16.msra.mxu0 0
    %3243 = vmatprep.subr.bf16.mxu0 0
    %3244 = vmatpush1.bf16.msra.mxu0 0
    %3245 = vmatprep.subr.bf16.mxu0 0
    %3246 = vmatpush1.bf16.msra.mxu0 0
    %3247 = vmatprep.subr.bf16.mxu0 0
    %3248 = vmatpush1.bf16.msra.mxu0 0
    %3249 = vmatprep.subr.bf16.mxu0 0
    %3250 = vmatpush1.bf16.msra.mxu0 0
    %3251 = vmatprep.subr.bf16.mxu0 0
    %3252 = vmatpush1.bf16.msra.mxu0 0
    %3253 = vmatprep.subr.bf16.mxu0 0
    %3254 = vmatpush1.bf16.msra.mxu0 0
    %3255 = vmatprep.subr.bf16.mxu0 0
    %3256 = vmatpush1.bf16.msra.mxu0 0
    %3257 = vmatprep.subr.bf16.mxu0 0
    %3258 = vmatpush1.bf16.msra.mxu0 0
    %3259 = vmatprep.subr.bf16.mxu0 0
    %3260 = vmatpush1.bf16.msra.mxu0 0
    %3261 = vmatprep.subr.bf16.mxu0 0
    %3262 = vmatpush1.bf16.msra.mxu0 0
    %3263 = vmatprep.subr.bf16.mxu0 0
    %3264 = vmatpush1.bf16.msra.mxu0 0
    %3265 = vmatprep.mubr.bf16.mxu0 0
    %3266 = vmatmul.mubr.bf16.gmra.mrb[0].mxu0 %v2558
    %v3267 = vpop.f32.mrb[0].mxu0
    %v3268 = vadd.f32 0.0, %v3267
    %v3269 = vpop.f32.mrb[0].mxu0
    %v3270 = vpop.f32.mrb[0].mxu0
    %v3271 = vpop.f32.mrb[0].mxu0
    %3272 = vdwg.mxu0
    %3273 = vmatprep.subr.bf16.mxu0 0
    %3274 = vmatpush1.bf16.msra.mxu0 %v2951
    %3275 = vmatprep.subr.bf16.mxu0 0
    %3276 = vmatpush1.bf16.msra.mxu0 0
    %3277 = vmatprep.subr.bf16.mxu0 0
    %3278 = vmatpush1.bf16.msra.mxu0 0
    %3279 = vmatprep.subr.bf16.mxu0 0
    %3280 = vmatpush1.bf16.msra.mxu0 0
    %3281 = vmatprep.subr.bf16.mxu0 0
    %3282 = vmatpush1.bf16.msra.mxu0 0
    %3283 = vmatprep.subr.bf16.mxu0 0
    %3284 = vmatpush1.bf16.msra.mxu0 0
    %3285 = vmatprep.subr.bf16.mxu0 0
    %3286 = vmatpush1.bf16.msra.mxu0 0
    %3287 = vmatprep.subr.bf16.mxu0 0
    %3288 = vmatpush1.bf16.msra.mxu0 0
    %3289 = vmatprep.subr.bf16.mxu0 0
    %3290 = vmatpush1.bf16.msra.mxu0 0
    %3291 = vmatprep.subr.bf16.mxu0 0
    %3292 = vmatpush1.bf16.msra.mxu0 0
    %3293 = vmatprep.subr.bf16.mxu0 0
    %3294 = vmatpush1.bf16.msra.mxu0 0
    %3295 = vmatprep.subr.bf16.mxu0 0
    %3296 = vmatpush1.bf16.msra.mxu0 0
    %3297 = vmatprep.subr.bf16.mxu0 0
    %3298 = vmatpush1.bf16.msra.mxu0 0
    %3299 = vmatprep.subr.bf16.mxu0 0
    %3300 = vmatpush1.bf16.msra.mxu0 0
    %3301 = vmatprep.subr.bf16.mxu0 0
    %3302 = vmatpush1.bf16.msra.mxu0 0
    %3303 = vmatprep.subr.bf16.mxu0 0
    %3304 = vmatpush1.bf16.msra.mxu0 0
    %3305 = vmatprep.mubr.bf16.mxu0 0
    %3306 = vmatmul.mubr.bf16.gmra.mrb[0].mxu0 %v2601
    %v3307 = vpop.f32.mrb[0].mxu0
    %v3308 = vadd.f32 0.0, %v3307
    %v3309 = vpop.f32.mrb[0].mxu0
    %v3310 = vpop.f32.mrb[0].mxu0
    %v3311 = vpop.f32.mrb[0].mxu0
    %3312 = vdwg.mxu0
    %3313 = vmatprep.subr.bf16.mxu0 0
    %3314 = vmatpush1.bf16.msra.mxu0 %v2951
    %3315 = vmatprep.subr.bf16.mxu0 0
    %3316 = vmatpush1.bf16.msra.mxu0 0
    %3317 = vmatprep.subr.bf16.mxu0 0
    %3318 = vmatpush1.bf16.msra.mxu0 0
    %3319 = vmatprep.subr.bf16.mxu0 0
    %3320 = vmatpush1.bf16.msra.mxu0 0
    %3321 = vmatprep.subr.bf16.mxu0 0
    %3322 = vmatpush1.bf16.msra.mxu0 0
    %3323 = vmatprep.subr.bf16.mxu0 0
    %3324 = vmatpush1.bf16.msra.mxu0 0
    %3325 = vmatprep.subr.bf16.mxu0 0
    %3326 = vmatpush1.bf16.msra.mxu0 0
    %3327 = vmatprep.subr.bf16.mxu0 0
    %3328 = vmatpush1.bf16.msra.mxu0 0
    %3329 = vmatprep.subr.bf16.mxu0 0
    %3330 = vmatpush1.bf16.msra.mxu0 0
    %3331 = vmatprep.subr.bf16.mxu0 0
    %3332 = vmatpush1.bf16.msra.mxu0 0
    %3333 = vmatprep.subr.bf16.mxu0 0
    %3334 = vmatpush1.bf16.msra.mxu0 0
    %3335 = vmatprep.subr.bf16.mxu0 0
    %3336 = vmatpush1.bf16.msra.mxu0 0
    %3337 = vmatprep.subr.bf16.mxu0 0
    %3338 = vmatpush1.bf16.msra.mxu0 0
    %3339 = vmatprep.subr.bf16.mxu0 0
    %3340 = vmatpush1.bf16.msra.mxu0 0
    %3341 = vmatprep.subr.bf16.mxu0 0
    %3342 = vmatpush1.bf16.msra.mxu0 0
    %3343 = vmatprep.subr.bf16.mxu0 0
    %3344 = vmatpush1.bf16.msra.mxu0 0
    %3345 = vmatprep.mubr.bf16.mxu0 0
    %3346 = vmatmul.mubr.bf16.gmra.mrb[0].mxu0 %v2644
    %v3347 = vpop.f32.mrb[0].mxu0
    %v3348 = vadd.f32 0.0, %v3347
    %v3349 = vpop.f32.mrb[0].mxu0
    %v3350 = vpop.f32.mrb[0].mxu0
    %v3351 = vpop.f32.mrb[0].mxu0
    %3352 = vdwg.mxu0
    %3353 = vmatprep.subr.bf16.mxu0 0
    %3354 = vmatpush1.bf16.msra.mxu0 %v2951
    %3355 = vmatprep.subr.bf16.mxu0 0
    %3356 = vmatpush1.bf16.msra.mxu0 0
    %3357 = vmatprep.subr.bf16.mxu0 0
    %3358 = vmatpush1.bf16.msra.mxu0 0
    %3359 = vmatprep.subr.bf16.mxu0 0
    %3360 = vmatpush1.bf16.msra.mxu0 0
    %3361 = vmatprep.subr.bf16.mxu0 0
    %3362 = vmatpush1.bf16.msra.mxu0 0
    %3363 = vmatprep.subr.bf16.mxu0 0
    %3364 = vmatpush1.bf16.msra.mxu0 0
    %3365 = vmatprep.subr.bf16.mxu0 0
    %3366 = vmatpush1.bf16.msra.mxu0 0
    %3367 = vmatprep.subr.bf16.mxu0 0
    %3368 = vmatpush1.bf16.msra.mxu0 0
    %3369 = vmatprep.subr.bf16.mxu0 0
    %3370 = vmatpush1.bf16.msra.mxu0 0
    %3371 = vmatprep.subr.bf16.mxu0 0
    %3372 = vmatpush1.bf16.msra.mxu0 0
    %3373 = vmatprep.subr.bf16.mxu0 0
    %3374 = vmatpush1.bf16.msra.mxu0 0
    %3375 = vmatprep.subr.bf16.mxu0 0
    %3376 = vmatpush1.bf16.msra.mxu0 0
    %3377 = vmatprep.subr.bf16.mxu0 0
    %3378 = vmatpush1.bf16.msra.mxu0 0
    %3379 = vmatprep.subr.bf16.mxu0 0
    %3380 = vmatpush1.bf16.msra.mxu0 0
    %3381 = vmatprep.subr.bf16.mxu0 0
    %3382 = vmatpush1.bf16.msra.mxu0 0
    %3383 = vmatprep.subr.bf16.mxu0 0
    %3384 = vmatpush1.bf16.msra.mxu0 0
    %3385 = vmatprep.mubr.bf16.mxu0 0
    %3386 = vmatmul.mubr.bf16.gmra.mrb[0].mxu0 %v2687
    %v3387 = vpop.f32.mrb[0].mxu0
    %v3388 = vadd.f32 0.0, %v3387
    %v3389 = vpop.f32.mrb[0].mxu0
    %v3390 = vpop.f32.mrb[0].mxu0
    %v3391 = vpop.f32.mrb[0].mxu0
    %3392 = vdwg.mxu0
    %3393 = vmatprep.subr.bf16.mxu0 0
    %3394 = vmatpush1.bf16.msra.mxu0 %v2951
    %3395 = vmatprep.subr.bf16.mxu0 0
    %3396 = vmatpush1.bf16.msra.mxu0 0
    %3397 = vmatprep.subr.bf16.mxu0 0
    %3398 = vmatpush1.bf16.msra.mxu0 0
    %3399 = vmatprep.subr.bf16.mxu0 0
    %3400 = vmatpush1.bf16.msra.mxu0 0
    %3401 = vmatprep.subr.bf16.mxu0 0
    %3402 = vmatpush1.bf16.msra.mxu0 0
    %3403 = vmatprep.subr.bf16.mxu0 0
    %3404 = vmatpush1.bf16.msra.mxu0 0
    %3405 = vmatprep.subr.bf16.mxu0 0
    %3406 = vmatpush1.bf16.msra.mxu0 0
    %3407 = vmatprep.subr.bf16.mxu0 0
    %3408 = vmatpush1.bf16.msra.mxu0 0
    %3409 = vmatprep.subr.bf16.mxu0 0
    %3410 = vmatpush1.bf16.msra.mxu0 0
    %3411 = vmatprep.subr.bf16.mxu0 0
    %3412 = vmatpush1.bf16.msra.mxu0 0
    %3413 = vmatprep.subr.bf16.mxu0 0
    %3414 = vmatpush1.bf16.msra.mxu0 0
    %3415 = vmatprep.subr.bf16.mxu0 0
    %3416 = vmatpush1.bf16.msra.mxu0 0
    %3417 = vmatprep.subr.bf16.mxu0 0
    %3418 = vmatpush1.bf16.msra.mxu0 0
    %3419 = vmatprep.subr.bf16.mxu0 0
    %3420 = vmatpush1.bf16.msra.mxu0 0
    %3421 = vmatprep.subr.bf16.mxu0 0
    %3422 = vmatpush1.bf16.msra.mxu0 0
    %3423 = vmatprep.subr.bf16.mxu0 0
    %3424 = vmatpush1.bf16.msra.mxu0 0
    %3425 = vmatprep.mubr.bf16.mxu0 0
    %3426 = vmatmul.mubr.bf16.gmra.mrb[0].mxu0 %v2730
    %v3427 = vpop.f32.mrb[0].mxu0
    %v3428 = vadd.f32 0.0, %v3427
    %v3429 = vpop.f32.mrb[0].mxu0
    %v3430 = vpop.f32.mrb[0].mxu0
    %v3431 = vpop.f32.mrb[0].mxu0
    %3432 = vdwg.mxu0
    %3433 = vmatprep.subr.bf16.mxu0 0
    %3434 = vmatpush1.bf16.msra.mxu0 %v2951
    %3435 = vmatprep.subr.bf16.mxu0 0
    %3436 = vmatpush1.bf16.msra.mxu0 0
    %3437 = vmatprep.subr.bf16.mxu0 0
    %3438 = vmatpush1.bf16.msra.mxu0 0
    %3439 = vmatprep.subr.bf16.mxu0 0
    %3440 = vmatpush1.bf16.msra.mxu0 0
    %3441 = vmatprep.subr.bf16.mxu0 0
    %3442 = vmatpush1.bf16.msra.mxu0 0
    %3443 = vmatprep.subr.bf16.mxu0 0
    %3444 = vmatpush1.bf16.msra.mxu0 0
    %3445 = vmatprep.subr.bf16.mxu0 0
    %3446 = vmatpush1.bf16.msra.mxu0 0
    %3447 = vmatprep.subr.bf16.mxu0 0
    %3448 = vmatpush1.bf16.msra.mxu0 0
    %3449 = vmatprep.subr.bf16.mxu0 0
    %3450 = vmatpush1.bf16.msra.mxu0 0
    %3451 = vmatprep.subr.bf16.mxu0 0
    %3452 = vmatpush1.bf16.msra.mxu0 0
    %3453 = vmatprep.subr.bf16.mxu0 0
    %3454 = vmatpush1.bf16.msra.mxu0 0
    %3455 = vmatprep.subr.bf16.mxu0 0
    %3456 = vmatpush1.bf16.msra.mxu0 0
    %3457 = vmatprep.subr.bf16.mxu0 0
    %3458 = vmatpush1.bf16.msra.mxu0 0
    %3459 = vmatprep.subr.bf16.mxu0 0
    %3460 = vmatpush1.bf16.msra.mxu0 0
    %3461 = vmatprep.subr.bf16.mxu0 0
    %3462 = vmatpush1.bf16.msra.mxu0 0
    %3463 = vmatprep.subr.bf16.mxu0 0
    %3464 = vmatpush1.bf16.msra.mxu0 0
    %3465 = vmatprep.mubr.bf16.mxu0 0
    %3466 = vmatmul.mubr.bf16.gmra.mrb[0].mxu0 %v2773
    %v3467 = vpop.f32.mrb[0].mxu0
    %v3468 = vadd.f32 0.0, %v3467
    %v3469 = vpop.f32.mrb[0].mxu0
    %v3470 = vpop.f32.mrb[0].mxu0
    %v3471 = vpop.f32.mrb[0].mxu0
    %3472 = vdwg.mxu0
    %3473 = vmatprep.subr.bf16.mxu0 0
    %3474 = vmatpush1.bf16.msra.mxu0 %v2951
    %3475 = vmatprep.subr.bf16.mxu0 0
    %3476 = vmatpush1.bf16.msra.mxu0 0
    %3477 = vmatprep.subr.bf16.mxu0 0
    %3478 = vmatpush1.bf16.msra.mxu0 0
    %3479 = vmatprep.subr.bf16.mxu0 0
    %3480 = vmatpush1.bf16.msra.mxu0 0
    %3481 = vmatprep.subr.bf16.mxu0 0
    %3482 = vmatpush1.bf16.msra.mxu0 0
    %3483 = vmatprep.subr.bf16.mxu0 0
    %3484 = vmatpush1.bf16.msra.mxu0 0
    %3485 = vmatprep.subr.bf16.mxu0 0
    %3486 = vmatpush1.bf16.msra.mxu0 0
    %3487 = vmatprep.subr.bf16.mxu0 0
    %3488 = vmatpush1.bf16.msra.mxu0 0
    %3489 = vmatprep.subr.bf16.mxu0 0
    %3490 = vmatpush1.bf16.msra.mxu0 0
    %3491 = vmatprep.subr.bf16.mxu0 0
    %3492 = vmatpush1.bf16.msra.mxu0 0
    %3493 = vmatprep.subr.bf16.mxu0 0
    %3494 = vmatpush1.bf16.msra.mxu0 0
    %3495 = vmatprep.subr.bf16.mxu0 0
    %3496 = vmatpush1.bf16.msra.mxu0 0
    %3497 = vmatprep.subr.bf16.mxu0 0
    %3498 = vmatpush1.bf16.msra.mxu0 0
    %3499 = vmatprep.subr.bf16.mxu0 0
    %3500 = vmatpush1.bf16.msra.mxu0 0
    %3501 = vmatprep.subr.bf16.mxu0 0
    %3502 = vmatpush1.bf16.msra.mxu0 0
    %3503 = vmatprep.subr.bf16.mxu0 0
    %3504 = vmatpush1.bf16.msra.mxu0 0
    %3505 = vmatprep.mubr.bf16.mxu0 0
    %3506 = vmatmul.mubr.bf16.gmra.mrb[0].mxu0 %v2816
    %v3507 = vpop.f32.mrb[0].mxu0
    %v3508 = vadd.f32 0.0, %v3507
    %v3509 = vpop.f32.mrb[0].mxu0
    %v3510 = vpop.f32.mrb[0].mxu0
    %v3511 = vpop.f32.mrb[0].mxu0
    %3512 = vdwg.mxu0
    %3513 = vmatprep.subr.bf16.mxu0 0
    %3514 = vmatpush1.bf16.msra.mxu0 %v2951
    %3515 = vmatprep.subr.bf16.mxu0 0
    %3516 = vmatpush1.bf16.msra.mxu0 0
    %3517 = vmatprep.subr.bf16.mxu0 0
    %3518 = vmatpush1.bf16.msra.mxu0 0
    %3519 = vmatprep.subr.bf16.mxu0 0
    %3520 = vmatpush1.bf16.msra.mxu0 0
    %3521 = vmatprep.subr.bf16.mxu0 0
    %3522 = vmatpush1.bf16.msra.mxu0 0
    %3523 = vmatprep.subr.bf16.mxu0 0
    %3524 = vmatpush1.bf16.msra.mxu0 0
    %3525 = vmatprep.subr.bf16.mxu0 0
    %3526 = vmatpush1.bf16.msra.mxu0 0
    %3527 = vmatprep.subr.bf16.mxu0 0
    %3528 = vmatpush1.bf16.msra.mxu0 0
    %3529 = vmatprep.subr.bf16.mxu0 0
    %3530 = vmatpush1.bf16.msra.mxu0 0
    %3531 = vmatprep.subr.bf16.mxu0 0
    %3532 = vmatpush1.bf16.msra.mxu0 0
    %3533 = vmatprep.subr.bf16.mxu0 0
    %3534 = vmatpush1.bf16.msra.mxu0 0
    %3535 = vmatprep.subr.bf16.mxu0 0
    %3536 = vmatpush1.bf16.msra.mxu0 0
    %3537 = vmatprep.subr.bf16.mxu0 0
    %3538 = vmatpush1.bf16.msra.mxu0 0
    %3539 = vmatprep.subr.bf16.mxu0 0
    %3540 = vmatpush1.bf16.msra.mxu0 0
    %3541 = vmatprep.subr.bf16.mxu0 0
    %3542 = vmatpush1.bf16.msra.mxu0 0
    %3543 = vmatprep.subr.bf16.mxu0 0
    %3544 = vmatpush1.bf16.msra.mxu0 0
    %3545 = vmatprep.mubr.bf16.mxu0 0
    %3546 = vmatmul.mubr.bf16.gmra.mrb[0].mxu0 %v2859
    %v3547 = vpop.f32.mrb[0].mxu0
    %v3548 = vadd.f32 0.0, %v3547
    %v3549 = vpop.f32.mrb[0].mxu0
    %v3550 = vpop.f32.mrb[0].mxu0
    %v3551 = vpop.f32.mrb[0].mxu0
    %3552 = vdwg.mxu0
    %3553 = vmatprep.subr.bf16.mxu0 0
    %3554 = vmatpush1.bf16.msra.mxu0 %v2951
    %3555 = vmatprep.subr.bf16.mxu0 0
    %3556 = vmatpush1.bf16.msra.mxu0 0
    %3557 = vmatprep.subr.bf16.mxu0 0
    %3558 = vmatpush1.bf16.msra.mxu0 0
    %3559 = vmatprep.subr.bf16.mxu0 0
    %3560 = vmatpush1.bf16.msra.mxu0 0
    %3561 = vmatprep.subr.bf16.mxu0 0
    %3562 = vmatpush1.bf16.msra.mxu0 0
    %3563 = vmatprep.subr.bf16.mxu0 0
    %3564 = vmatpush1.bf16.msra.mxu0 0
    %3565 = vmatprep.subr.bf16.mxu0 0
    %3566 = vmatpush1.bf16.msra.mxu0 0
    %3567 = vmatprep.subr.bf16.mxu0 0
    %3568 = vmatpush1.bf16.msra.mxu0 0
    %3569 = vmatprep.subr.bf16.mxu0 0
    %3570 = vmatpush1.bf16.msra.mxu0 0
    %3571 = vmatprep.subr.bf16.mxu0 0
    %3572 = vmatpush1.bf16.msra.mxu0 0
    %3573 = vmatprep.subr.bf16.mxu0 0
    %3574 = vmatpush1.bf16.msra.mxu0 0
    %3575 = vmatprep.subr.bf16.mxu0 0
    %3576 = vmatpush1.bf16.msra.mxu0 0
    %3577 = vmatprep.subr.bf16.mxu0 0
    %3578 = vmatpush1.bf16.msra.mxu0 0
    %3579 = vmatprep.subr.bf16.mxu0 0
    %3580 = vmatpush1.bf16.msra.mxu0 0
    %3581 = vmatprep.subr.bf16.mxu0 0
    %3582 = vmatpush1.bf16.msra.mxu0 0
    %3583 = vmatprep.subr.bf16.mxu0 0
    %3584 = vmatpush1.bf16.msra.mxu0 0
    %3585 = vmatprep.mubr.bf16.mxu0 0
    %3586 = vmatmul.mubr.bf16.gmra.mrb[0].mxu0 %v2902
    %v3587 = vpop.f32.mrb[0].mxu0
    %v3588 = vadd.f32 0.0, %v3587
    %v3589 = vpop.f32.mrb[0].mxu0
    %v3590 = vpop.f32.mrb[0].mxu0
    %v3591 = vpop.f32.mrb[0].mxu0
    %3592 = vdwg.mxu0
    %v3593 = vmax.f32 %v2294, %v2988
    %v3594 = vmax.f32 %v2337, %v3028
    %v3595 = vmax.f32 %v2380, %v3068
    %v3596 = vmax.f32 %v2423, %v3108
    %v3597 = vmax.f32 %v2466, %v3148
    %v3598 = vmax.f32 %v2509, %v3188
    %v3599 = vmax.f32 %v2552, %v3228
    %v3600 = vmax.f32 %v2595, %v3268
    %v3601 = vmax.f32 %v2638, %v3308
    %v3602 = vmax.f32 %v2681, %v3348
    %v3603 = vmax.f32 %v2724, %v3388
    %v3604 = vmax.f32 %v2767, %v3428
    %v3605 = vmax.f32 %v2810, %v3468
    %v3606 = vmax.f32 %v2853, %v3508
    %v3607 = vmax.f32 %v2896, %v3548
    %v3608 = vmax.f32 %v2939, %v3588
    %s3609 = scalar_lea.vmem [#allocation5], 16
    %v3610 = vld [vmem:[%s3609] sm:$0xf]
    %v3611 = vld [vmem:[%s3609 + $0x4] sm:$0xf]
    %v3614 = vunpack.c.l.b16 %v3610
    %v3615 = vunpack.c.l.b16 %v3611
    %v3616 = vpack.c.b16 %v3615, %v3614
    %3618 = vmatprep.subr.bf16.mxu0 0
    %3619 = vmatpush1.bf16.msra.mxu0 %v3616
    %3620 = vmatprep.subr.bf16.mxu0 0
    %3621 = vmatpush1.bf16.msra.mxu0 0
    %3622 = vmatprep.subr.bf16.mxu0 0
    %3623 = vmatpush1.bf16.msra.mxu0 0
    %3624 = vmatprep.subr.bf16.mxu0 0
    %3625 = vmatpush1.bf16.msra.mxu0 0
    %3626 = vmatprep.subr.bf16.mxu0 0
    %3627 = vmatpush1.bf16.msra.mxu0 0
    %3628 = vmatprep.subr.bf16.mxu0 0
    %3629 = vmatpush1.bf16.msra.mxu0 0
    %3630 = vmatprep.subr.bf16.mxu0 0
    %3631 = vmatpush1.bf16.msra.mxu0 0
    %3632 = vmatprep.subr.bf16.mxu0 0
    %3633 = vmatpush1.bf16.msra.mxu0 0
    %3634 = vmatprep.subr.bf16.mxu0 0
    %3635 = vmatpush1.bf16.msra.mxu0 0
    %3636 = vmatprep.subr.bf16.mxu0 0
    %3637 = vmatpush1.bf16.msra.mxu0 0
    %3638 = vmatprep.subr.bf16.mxu0 0
    %3639 = vmatpush1.bf16.msra.mxu0 0
    %3640 = vmatprep.subr.bf16.mxu0 0
    %3641 = vmatpush1.bf16.msra.mxu0 0
    %3642 = vmatprep.subr.bf16.mxu0 0
    %3643 = vmatpush1.bf16.msra.mxu0 0
    %3644 = vmatprep.subr.bf16.mxu0 0
    %3645 = vmatpush1.bf16.msra.mxu0 0
    %3646 = vmatprep.subr.bf16.mxu0 0
    %3647 = vmatpush1.bf16.msra.mxu0 0
    %3648 = vmatprep.subr.bf16.mxu0 0
    %3649 = vmatpush1.bf16.msra.mxu0 0
    %3650 = vmatprep.mubr.bf16.mxu0 0
    %3651 = vmatmul.mubr.bf16.gmra.mrb[0].mxu0 %v2257
    %v3652 = vpop.f32.mrb[0].mxu0
    %v3653 = vadd.f32 0.0, %v3652
    %v3654 = vpop.f32.mrb[0].mxu0
    %v3655 = vpop.f32.mrb[0].mxu0
    %v3656 = vpop.f32.mrb[0].mxu0
    %3657 = vdwg.mxu0
    %3658 = vmatprep.subr.bf16.mxu0 0
    %3659 = vmatpush1.bf16.msra.mxu0 %v3616
    %3660 = vmatprep.subr.bf16.mxu0 0
    %3661 = vmatpush1.bf16.msra.mxu0 0
    %3662 = vmatprep.subr.bf16.mxu0 0
    %3663 = vmatpush1.bf16.msra.mxu0 0
    %3664 = vmatprep.subr.bf16.mxu0 0
    %3665 = vmatpush1.bf16.msra.mxu0 0
    %3666 = vmatprep.subr.bf16.mxu0 0
    %3667 = vmatpush1.bf16.msra.mxu0 0
    %3668 = vmatprep.subr.bf16.mxu0 0
    %3669 = vmatpush1.bf16.msra.mxu0 0
    %3670 = vmatprep.subr.bf16.mxu0 0
    %3671 = vmatpush1.bf16.msra.mxu0 0
    %3672 = vmatprep.subr.bf16.mxu0 0
    %3673 = vmatpush1.bf16.msra.mxu0 0
    %3674 = vmatprep.subr.bf16.mxu0 0
    %3675 = vmatpush1.bf16.msra.mxu0 0
    %3676 = vmatprep.subr.bf16.mxu0 0
    %3677 = vmatpush1.bf16.msra.mxu0 0
    %3678 = vmatprep.subr.bf16.mxu0 0
    %3679 = vmatpush1.bf16.msra.mxu0 0
    %3680 = vmatprep.subr.bf16.mxu0 0
    %3681 = vmatpush1.bf16.msra.mxu0 0
    %3682 = vmatprep.subr.bf16.mxu0 0
    %3683 = vmatpush1.bf16.msra.mxu0 0
    %3684 = vmatprep.subr.bf16.mxu0 0
    %3685 = vmatpush1.bf16.msra.mxu0 0
    %3686 = vmatprep.subr.bf16.mxu0 0
    %3687 = vmatpush1.bf16.msra.mxu0 0
    %3688 = vmatprep.subr.bf16.mxu0 0
    %3689 = vmatpush1.bf16.msra.mxu0 0
    %3690 = vmatprep.mubr.bf16.mxu0 0
    %3691 = vmatmul.mubr.bf16.gmra.mrb[0].mxu0 %v2300
    %v3692 = vpop.f32.mrb[0].mxu0
    %v3693 = vadd.f32 0.0, %v3692
    %v3694 = vpop.f32.mrb[0].mxu0
    %v3695 = vpop.f32.mrb[0].mxu0
    %v3696 = vpop.f32.mrb[0].mxu0
    %3697 = vdwg.mxu0
    %3698 = vmatprep.subr.bf16.mxu0 0
    %3699 = vmatpush1.bf16.msra.mxu0 %v3616
    %3700 = vmatprep.subr.bf16.mxu0 0
    %3701 = vmatpush1.bf16.msra.mxu0 0
    %3702 = vmatprep.subr.bf16.mxu0 0
    %3703 = vmatpush1.bf16.msra.mxu0 0
    %3704 = vmatprep.subr.bf16.mxu0 0
    %3705 = vmatpush1.bf16.msra.mxu0 0
    %3706 = vmatprep.subr.bf16.mxu0 0
    %3707 = vmatpush1.bf16.msra.mxu0 0
    %3708 = vmatprep.subr.bf16.mxu0 0
    %3709 = vmatpush1.bf16.msra.mxu0 0
    %3710 = vmatprep.subr.bf16.mxu0 0
    %3711 = vmatpush1.bf16.msra.mxu0 0
    %3712 = vmatprep.subr.bf16.mxu0 0
    %3713 = vmatpush1.bf16.msra.mxu0 0
    %3714 = vmatprep.subr.bf16.mxu0 0
    %3715 = vmatpush1.bf16.msra.mxu0 0
    %3716 = vmatprep.subr.bf16.mxu0 0
    %3717 = vmatpush1.bf16.msra.mxu0 0
    %3718 = vmatprep.subr.bf16.mxu0 0
    %3719 = vmatpush1.bf16.msra.mxu0 0
    %3720 = vmatprep.subr.bf16.mxu0 0
    %3721 = vmatpush1.bf16.msra.mxu0 0
    %3722 = vmatprep.subr.bf16.mxu0 0
    %3723 = vmatpush1.bf16.msra.mxu0 0
    %3724 = vmatprep.subr.bf16.mxu0 0
    %3725 = vmatpush1.bf16.msra.mxu0 0
    %3726 = vmatprep.subr.bf16.mxu0 0
    %3727 = vmatpush1.bf16.msra.mxu0 0
    %3728 = vmatprep.subr.bf16.mxu0 0
    %3729 = vmatpush1.bf16.msra.mxu0 0
    %3730 = vmatprep.mubr.bf16.mxu0 0
    %3731 = vmatmul.mubr.bf16.gmra.mrb[0].mxu0 %v2343
    %v3732 = vpop.f32.mrb[0].mxu0
    %v3733 = vadd.f32 0.0, %v3732
    %v3734 = vpop.f32.mrb[0].mxu0
    %v3735 = vpop.f32.mrb[0].mxu0
    %v3736 = vpop.f32.mrb[0].mxu0
    %3737 = vdwg.mxu0
    %3738 = vmatprep.subr.bf16.mxu0 0
    %3739 = vmatpush1.bf16.msra.mxu0 %v3616
    %3740 = vmatprep.subr.bf16.mxu0 0
    %3741 = vmatpush1.bf16.msra.mxu0 0
    %3742 = vmatprep.subr.bf16.mxu0 0
    %3743 = vmatpush1.bf16.msra.mxu0 0
    %3744 = vmatprep.subr.bf16.mxu0 0
    %3745 = vmatpush1.bf16.msra.mxu0 0
    %3746 = vmatprep.subr.bf16.mxu0 0
    %3747 = vmatpush1.bf16.msra.mxu0 0
    %3748 = vmatprep.subr.bf16.mxu0 0
    %3749 = vmatpush1.bf16.msra.mxu0 0
    %3750 = vmatprep.subr.bf16.mxu0 0
    %3751 = vmatpush1.bf16.msra.mxu0 0
    %3752 = vmatprep.subr.bf16.mxu0 0
    %3753 = vmatpush1.bf16.msra.mxu0 0
    %3754 = vmatprep.subr.bf16.mxu0 0
    %3755 = vmatpush1.bf16.msra.mxu0 0
    %3756 = vmatprep.subr.bf16.mxu0 0
    %3757 = vmatpush1.bf16.msra.mxu0 0
    %3758 = vmatprep.subr.bf16.mxu0 0
    %3759 = vmatpush1.bf16.msra.mxu0 0
    %3760 = vmatprep.subr.bf16.mxu0 0
    %3761 = vmatpush1.bf16.msra.mxu0 0
    %3762 = vmatprep.subr.bf16.mxu0 0
    %3763 = vmatpush1.bf16.msra.mxu0 0
    %3764 = vmatprep.subr.bf16.mxu0 0
    %3765 = vmatpush1.bf16.msra.mxu0 0
    %3766 = vmatprep.subr.bf16.mxu0 0
    %3767 = vmatpush1.bf16.msra.mxu0 0
    %3768 = vmatprep.subr.bf16.mxu0 0
    %3769 = vmatpush1.bf16.msra.mxu0 0
    %3770 = vmatprep.mubr.bf16.mxu0 0
    %3771 = vmatmul.mubr.bf16.gmra.mrb[0].mxu0 %v2386
    %v3772 = vpop.f32.mrb[0].mxu0
    %v3773 = vadd.f32 0.0, %v3772
    %v3774 = vpop.f32.mrb[0].mxu0
    %v3775 = vpop.f32.mrb[0].mxu0
    %v3776 = vpop.f32.mrb[0].mxu0
    %3777 = vdwg.mxu0
    %3778 = vmatprep.subr.bf16.mxu0 0
    %3779 = vmatpush1.bf16.msra.mxu0 %v3616
    %3780 = vmatprep.subr.bf16.mxu0 0
    %3781 = vmatpush1.bf16.msra.mxu0 0
    %3782 = vmatprep.subr.bf16.mxu0 0
    %3783 = vmatpush1.bf16.msra.mxu0 0
    %3784 = vmatprep.subr.bf16.mxu0 0
    %3785 = vmatpush1.bf16.msra.mxu0 0
    %3786 = vmatprep.subr.bf16.mxu0 0
    %3787 = vmatpush1.bf16.msra.mxu0 0
    %3788 = vmatprep.subr.bf16.mxu0 0
    %3789 = vmatpush1.bf16.msra.mxu0 0
    %3790 = vmatprep.subr.bf16.mxu0 0
    %3791 = vmatpush1.bf16.msra.mxu0 0
    %3792 = vmatprep.subr.bf16.mxu0 0
    %3793 = vmatpush1.bf16.msra.mxu0 0
    %3794 = vmatprep.subr.bf16.mxu0 0
    %3795 = vmatpush1.bf16.msra.mxu0 0
    %3796 = vmatprep.subr.bf16.mxu0 0
    %3797 = vmatpush1.bf16.msra.mxu0 0
    %3798 = vmatprep.subr.bf16.mxu0 0
    %3799 = vmatpush1.bf16.msra.mxu0 0
    %3800 = vmatprep.subr.bf16.mxu0 0
    %3801 = vmatpush1.bf16.msra.mxu0 0
    %3802 = vmatprep.subr.bf16.mxu0 0
    %3803 = vmatpush1.bf16.msra.mxu0 0
    %3804 = vmatprep.subr.bf16.mxu0 0
    %3805 = vmatpush1.bf16.msra.mxu0 0
    %3806 = vmatprep.subr.bf16.mxu0 0
    %3807 = vmatpush1.bf16.msra.mxu0 0
    %3808 = vmatprep.subr.bf16.mxu0 0
    %3809 = vmatpush1.bf16.msra.mxu0 0
    %3810 = vmatprep.mubr.bf16.mxu0 0
    %3811 = vmatmul.mubr.bf16.gmra.mrb[0].mxu0 %v2429
    %v3812 = vpop.f32.mrb[0].mxu0
    %v3813 = vadd.f32 0.0, %v3812
    %v3814 = vpop.f32.mrb[0].mxu0
    %v3815 = vpop.f32.mrb[0].mxu0
    %v3816 = vpop.f32.mrb[0].mxu0
    %3817 = vdwg.mxu0
    %3818 = vmatprep.subr.bf16.mxu0 0
    %3819 = vmatpush1.bf16.msra.mxu0 %v3616
    %3820 = vmatprep.subr.bf16.mxu0 0
    %3821 = vmatpush1.bf16.msra.mxu0 0
    %3822 = vmatprep.subr.bf16.mxu0 0
    %3823 = vmatpush1.bf16.msra.mxu0 0
    %3824 = vmatprep.subr.bf16.mxu0 0
    %3825 = vmatpush1.bf16.msra.mxu0 0
    %3826 = vmatprep.subr.bf16.mxu0 0
    %3827 = vmatpush1.bf16.msra.mxu0 0
    %3828 = vmatprep.subr.bf16.mxu0 0
    %3829 = vmatpush1.bf16.msra.mxu0 0
    %3830 = vmatprep.subr.bf16.mxu0 0
    %3831 = vmatpush1.bf16.msra.mxu0 0
    %3832 = vmatprep.subr.bf16.mxu0 0
    %3833 = vmatpush1.bf16.msra.mxu0 0
    %3834 = vmatprep.subr.bf16.mxu0 0
    %3835 = vmatpush1.bf16.msra.mxu0 0
    %3836 = vmatprep.subr.bf16.mxu0 0
    %3837 = vmatpush1.bf16.msra.mxu0 0
    %3838 = vmatprep.subr.bf16.mxu0 0
    %3839 = vmatpush1.bf16.msra.mxu0 0
    %3840 = vmatprep.subr.bf16.mxu0 0
    %3841 = vmatpush1.bf16.msra.mxu0 0
    %3842 = vmatprep.subr.bf16.mxu0 0
    %3843 = vmatpush1.bf16.msra.mxu0 0
    %3844 = vmatprep.subr.bf16.mxu0 0
    %3845 = vmatpush1.bf16.msra.mxu0 0
    %3846 = vmatprep.subr.bf16.mxu0 0
    %3847 = vmatpush1.bf16.msra.mxu0 0
    %3848 = vmatprep.subr.bf16.mxu0 0
    %3849 = vmatpush1.bf16.msra.mxu0 0
    %3850 = vmatprep.mubr.bf16.mxu0 0
    %3851 = vmatmul.mubr.bf16.gmra.mrb[0].mxu0 %v2472
    %v3852 = vpop.f32.mrb[0].mxu0
    %v3853 = vadd.f32 0.0, %v3852
    %v3854 = vpop.f32.mrb[0].mxu0
    %v3855 = vpop.f32.mrb[0].mxu0
    %v3856 = vpop.f32.mrb[0].mxu0
    %3857 = vdwg.mxu0
    %3858 = vmatprep.subr.bf16.mxu0 0
    %3859 = vmatpush1.bf16.msra.mxu0 %v3616
    %3860 = vmatprep.subr.bf16.mxu0 0
    %3861 = vmatpush1.bf16.msra.mxu0 0
    %3862 = vmatprep.subr.bf16.mxu0 0
    %3863 = vmatpush1.bf16.msra.mxu0 0
    %3864 = vmatprep.subr.bf16.mxu0 0
    %3865 = vmatpush1.bf16.msra.mxu0 0
    %3866 = vmatprep.subr.bf16.mxu0 0
    %3867 = vmatpush1.bf16.msra.mxu0 0
    %3868 = vmatprep.subr.bf16.mxu0 0
    %3869 = vmatpush1.bf16.msra.mxu0 0
    %3870 = vmatprep.subr.bf16.mxu0 0
    %3871 = vmatpush1.bf16.msra.mxu0 0
    %3872 = vmatprep.subr.bf16.mxu0 0
    %3873 = vmatpush1.bf16.msra.mxu0 0
    %3874 = vmatprep.subr.bf16.mxu0 0
    %3875 = vmatpush1.bf16.msra.mxu0 0
    %3876 = vmatprep.subr.bf16.mxu0 0
    %3877 = vmatpush1.bf16.msra.mxu0 0
    %3878 = vmatprep.subr.bf16.mxu0 0
    %3879 = vmatpush1.bf16.msra.mxu0 0
    %3880 = vmatprep.subr.bf16.mxu0 0
    %3881 = vmatpush1.bf16.msra.mxu0 0
    %3882 = vmatprep.subr.bf16.mxu0 0
    %3883 = vmatpush1.bf16.msra.mxu0 0
    %3884 = vmatprep.subr.bf16.mxu0 0
    %3885 = vmatpush1.bf16.msra.mxu0 0
    %3886 = vmatprep.subr.bf16.mxu0 0
    %3887 = vmatpush1.bf16.msra.mxu0 0
    %3888 = vmatprep.subr.bf16.mxu0 0
    %3889 = vmatpush1.bf16.msra.mxu0 0
    %3890 = vmatprep.mubr.bf16.mxu0 0
    %3891 = vmatmul.mubr.bf16.gmra.mrb[0].mxu0 %v2515
    %v3892 = vpop.f32.mrb[0].mxu0
    %v3893 = vadd.f32 0.0, %v3892
    %v3894 = vpop.f32.mrb[0].mxu0
    %v3895 = vpop.f32.mrb[0].mxu0
    %v3896 = vpop.f32.mrb[0].mxu0
    %3897 = vdwg.mxu0
    %3898 = vmatprep.subr.bf16.mxu0 0
    %3899 = vmatpush1.bf16.msra.mxu0 %v3616
    %3900 = vmatprep.subr.bf16.mxu0 0
    %3901 = vmatpush1.bf16.msra.mxu0 0
    %3902 = vmatprep.subr.bf16.mxu0 0
    %3903 = vmatpush1.bf16.msra.mxu0 0
    %3904 = vmatprep.subr.bf16.mxu0 0
    %3905 = vmatpush1.bf16.msra.mxu0 0
    %3906 = vmatprep.subr.bf16.mxu0 0
    %3907 = vmatpush1.bf16.msra.mxu0 0
    %3908 = vmatprep.subr.bf16.mxu0 0
    %3909 = vmatpush1.bf16.msra.mxu0 0
    %3910 = vmatprep.subr.bf16.mxu0 0
    %3911 = vmatpush1.bf16.msra.mxu0 0
    %3912 = vmatprep.subr.bf16.mxu0 0
    %3913 = vmatpush1.bf16.msra.mxu0 0
    %3914 = vmatprep.subr.bf16.mxu0 0
    %3915 = vmatpush1.bf16.msra.mxu0 0
    %3916 = vmatprep.subr.bf16.mxu0 0
    %3917 = vmatpush1.bf16.msra.mxu0 0
    %3918 = vmatprep.subr.bf16.mxu0 0
    %3919 = vmatpush1.bf16.msra.mxu0 0
    %3920 = vmatprep.subr.bf16.mxu0 0
    %3921 = vmatpush1.bf16.msra.mxu0 0
    %3922 = vmatprep.subr.bf16.mxu0 0
    %3923 = vmatpush1.bf16.msra.mxu0 0
    %3924 = vmatprep.subr.bf16.mxu0 0
    %3925 = vmatpush1.bf16.msra.mxu0 0
    %3926 = vmatprep.subr.bf16.mxu0 0
    %3927 = vmatpush1.bf16.msra.mxu0 0
    %3928 = vmatprep.subr.bf16.mxu0 0
    %3929 = vmatpush1.bf16.msra.mxu0 0
    %3930 = vmatprep.mubr.bf16.mxu0 0
    %3931 = vmatmul.mubr.bf16.gmra.mrb[0].mxu0 %v2558
    %v3932 = vpop.f32.mrb[0].mxu0
    %v3933 = vadd.f32 0.0, %v3932
    %v3934 = vpop.f32.mrb[0].mxu0
    %v3935 = vpop.f32.mrb[0].mxu0
    %v3936 = vpop.f32.mrb[0].mxu0
    %3937 = vdwg.mxu0
    %3938 = vmatprep.subr.bf16.mxu0 0
    %3939 = vmatpush1.bf16.msra.mxu0 %v3616
    %3940 = vmatprep.subr.bf16.mxu0 0
    %3941 = vmatpush1.bf16.msra.mxu0 0
    %3942 = vmatprep.subr.bf16.mxu0 0
    %3943 = vmatpush1.bf16.msra.mxu0 0
    %3944 = vmatprep.subr.bf16.mxu0 0
    %3945 = vmatpush1.bf16.msra.mxu0 0
    %3946 = vmatprep.subr.bf16.mxu0 0
    %3947 = vmatpush1.bf16.msra.mxu0 0
    %3948 = vmatprep.subr.bf16.mxu0 0
    %3949 = vmatpush1.bf16.msra.mxu0 0
    %3950 = vmatprep.subr.bf16.mxu0 0
    %3951 = vmatpush1.bf16.msra.mxu0 0
    %3952 = vmatprep.subr.bf16.mxu0 0
    %3953 = vmatpush1.bf16.msra.mxu0 0
    %3954 = vmatprep.subr.bf16.mxu0 0
    %3955 = vmatpush1.bf16.msra.mxu0 0
    %3956 = vmatprep.subr.bf16.mxu0 0
    %3957 = vmatpush1.bf16.msra.mxu0 0
    %3958 = vmatprep.subr.bf16.mxu0 0
    %3959 = vmatpush1.bf16.msra.mxu0 0
    %3960 = vmatprep.subr.bf16.mxu0 0
    %3961 = vmatpush1.bf16.msra.mxu0 0
    %3962 = vmatprep.subr.bf16.mxu0 0
    %3963 = vmatpush1.bf16.msra.mxu0 0
    %3964 = vmatprep.subr.bf16.mxu0 0
    %3965 = vmatpush1.bf16.msra.mxu0 0
    %3966 = vmatprep.subr.bf16.mxu0 0
    %3967 = vmatpush1.bf16.msra.mxu0 0
    %3968 = vmatprep.subr.bf16.mxu0 0
    %3969 = vmatpush1.bf16.msra.mxu0 0
    %3970 = vmatprep.mubr.bf16.mxu0 0
    %3971 = vmatmul.mubr.bf16.gmra.mrb[0].mxu0 %v2601
    %v3972 = vpop.f32.mrb[0].mxu0
    %v3973 = vadd.f32 0.0, %v3972
    %v3974 = vpop.f32.mrb[0].mxu0
    %v3975 = vpop.f32.mrb[0].mxu0
    %v3976 = vpop.f32.mrb[0].mxu0
    %3977 = vdwg.mxu0
    %3978 = vmatprep.subr.bf16.mxu0 0
    %3979 = vmatpush1.bf16.msra.mxu0 %v3616
    %3980 = vmatprep.subr.bf16.mxu0 0
    %3981 = vmatpush1.bf16.msra.mxu0 0
    %3982 = vmatprep.subr.bf16.mxu0 0
    %3983 = vmatpush1.bf16.msra.mxu0 0
    %3984 = vmatprep.subr.bf16.mxu0 0
    %3985 = vmatpush1.bf16.msra.mxu0 0
    %3986 = vmatprep.subr.bf16.mxu0 0
    %3987 = vmatpush1.bf16.msra.mxu0 0
    %3988 = vmatprep.subr.bf16.mxu0 0
    %3989 = vmatpush1.bf16.msra.mxu0 0
    %3990 = vmatprep.subr.bf16.mxu0 0
    %3991 = vmatpush1.bf16.msra.mxu0 0
    %3992 = vmatprep.subr.bf16.mxu0 0
    %3993 = vmatpush1.bf16.msra.mxu0 0
    %3994 = vmatprep.subr.bf16.mxu0 0
    %3995 = vmatpush1.bf16.msra.mxu0 0
    %3996 = vmatprep.subr.bf16.mxu0 0
    %3997 = vmatpush1.bf16.msra.mxu0 0
    %3998 = vmatprep.subr.bf16.mxu0 0
    %3999 = vmatpush1.bf16.msra.mxu0 0
    %4000 = vmatprep.subr.bf16.mxu0 0
    %4001 = vmatpush1.bf16.msra.mxu0 0
    %4002 = vmatprep.subr.bf16.mxu0 0
    %4003 = vmatpush1.bf16.msra.mxu0 0
    %4004 = vmatprep.subr.bf16.mxu0 0
    %4005 = vmatpush1.bf16.msra.mxu0 0
    %4006 = vmatprep.subr.bf16.mxu0 0
    %4007 = vmatpush1.bf16.msra.mxu0 0
    %4008 = vmatprep.subr.bf16.mxu0 0
    %4009 = vmatpush1.bf16.msra.mxu0 0
    %4010 = vmatprep.mubr.bf16.mxu0 0
    %4011 = vmatmul.mubr.bf16.gmra.mrb[0].mxu0 %v2644
    %v4012 = vpop.f32.mrb[0].mxu0
    %v4013 = vadd.f32 0.0, %v4012
    %v4014 = vpop.f32.mrb[0].mxu0
    %v4015 = vpop.f32.mrb[0].mxu0
    %v4016 = vpop.f32.mrb[0].mxu0
    %4017 = vdwg.mxu0
    %4018 = vmatprep.subr.bf16.mxu0 0
    %4019 = vmatpush1.bf16.msra.mxu0 %v3616
    %4020 = vmatprep.subr.bf16.mxu0 0
    %4021 = vmatpush1.bf16.msra.mxu0 0
    %4022 = vmatprep.subr.bf16.mxu0 0
    %4023 = vmatpush1.bf16.msra.mxu0 0
    %4024 = vmatprep.subr.bf16.mxu0 0
    %4025 = vmatpush1.bf16.msra.mxu0 0
    %4026 = vmatprep.subr.bf16.mxu0 0
    %4027 = vmatpush1.bf16.msra.mxu0 0
    %4028 = vmatprep.subr.bf16.mxu0 0
    %4029 = vmatpush1.bf16.msra.mxu0 0
    %4030 = vmatprep.subr.bf16.mxu0 0
    %4031 = vmatpush1.bf16.msra.mxu0 0
    %4032 = vmatprep.subr.bf16.mxu0 0
    %4033 = vmatpush1.bf16.msra.mxu0 0
    %4034 = vmatprep.subr.bf16.mxu0 0
    %4035 = vmatpush1.bf16.msra.mxu0 0
    %4036 = vmatprep.subr.bf16.mxu0 0
    %4037 = vmatpush1.bf16.msra.mxu0 0
    %4038 = vmatprep.subr.bf16.mxu0 0
    %4039 = vmatpush1.bf16.msra.mxu0 0
    %4040 = vmatprep.subr.bf16.mxu0 0
    %4041 = vmatpush1.bf16.msra.mxu0 0
    %4042 = vmatprep.subr.bf16.mxu0 0
    %4043 = vmatpush1.bf16.msra.mxu0 0
    %4044 = vmatprep.subr.bf16.mxu0 0
    %4045 = vmatpush1.bf16.msra.mxu0 0
    %4046 = vmatprep.subr.bf16.mxu0 0
    %4047 = vmatpush1.bf16.msra.mxu0 0
    %4048 = vmatprep.subr.bf16.mxu0 0
    %4049 = vmatpush1.bf16.msra.mxu0 0
    %4050 = vmatprep.mubr.bf16.mxu0 0
    %4051 = vmatmul.mubr.bf16.gmra.mrb[0].mxu0 %v2687
    %v4052 = vpop.f32.mrb[0].mxu0
    %v4053 = vadd.f32 0.0, %v4052
    %v4054 = vpop.f32.mrb[0].mxu0
    %v4055 = vpop.f32.mrb[0].mxu0
    %v4056 = vpop.f32.mrb[0].mxu0
    %4057 = vdwg.mxu0
    %4058 = vmatprep.subr.bf16.mxu0 0
    %4059 = vmatpush1.bf16.msra.mxu0 %v3616
    %4060 = vmatprep.subr.bf16.mxu0 0
    %4061 = vmatpush1.bf16.msra.mxu0 0
    %4062 = vmatprep.subr.bf16.mxu0 0
    %4063 = vmatpush1.bf16.msra.mxu0 0
    %4064 = vmatprep.subr.bf16.mxu0 0
    %4065 = vmatpush1.bf16.msra.mxu0 0
    %4066 = vmatprep.subr.bf16.mxu0 0
    %4067 = vmatpush1.bf16.msra.mxu0 0
    %4068 = vmatprep.subr.bf16.mxu0 0
    %4069 = vmatpush1.bf16.msra.mxu0 0
    %4070 = vmatprep.subr.bf16.mxu0 0
    %4071 = vmatpush1.bf16.msra.mxu0 0
    %4072 = vmatprep.subr.bf16.mxu0 0
    %4073 = vmatpush1.bf16.msra.mxu0 0
    %4074 = vmatprep.subr.bf16.mxu0 0
    %4075 = vmatpush1.bf16.msra.mxu0 0
    %4076 = vmatprep.subr.bf16.mxu0 0
    %4077 = vmatpush1.bf16.msra.mxu0 0
    %4078 = vmatprep.subr.bf16.mxu0 0
    %4079 = vmatpush1.bf16.msra.mxu0 0
    %4080 = vmatprep.subr.bf16.mxu0 0
    %4081 = vmatpush1.bf16.msra.mxu0 0
    %4082 = vmatprep.subr.bf16.mxu0 0
    %4083 = vmatpush1.bf16.msra.mxu0 0
    %4084 = vmatprep.subr.bf16.mxu0 0
    %4085 = vmatpush1.bf16.msra.mxu0 0
    %4086 = vmatprep.subr.bf16.mxu0 0
    %4087 = vmatpush1.bf16.msra.mxu0 0
    %4088 = vmatprep.subr.bf16.mxu0 0
    %4089 = vmatpush1.bf16.msra.mxu0 0
    %4090 = vmatprep.mubr.bf16.mxu0 0
    %4091 = vmatmul.mubr.bf16.gmra.mrb[0].mxu0 %v2730
    %v4092 = vpop.f32.mrb[0].mxu0
    %v4093 = vadd.f32 0.0, %v4092
    %v4094 = vpop.f32.mrb[0].mxu0
    %v4095 = vpop.f32.mrb[0].mxu0
    %v4096 = vpop.f32.mrb[0].mxu0
    %4097 = vdwg.mxu0
    %4098 = vmatprep.subr.bf16.mxu0 0
    %4099 = vmatpush1.bf16.msra.mxu0 %v3616
    %4100 = vmatprep.subr.bf16.mxu0 0
    %4101 = vmatpush1.bf16.msra.mxu0 0
    %4102 = vmatprep.subr.bf16.mxu0 0
    %4103 = vmatpush1.bf16.msra.mxu0 0
    %4104 = vmatprep.subr.bf16.mxu0 0
    %4105 = vmatpush1.bf16.msra.mxu0 0
    %4106 = vmatprep.subr.bf16.mxu0 0
    %4107 = vmatpush1.bf16.msra.mxu0 0
    %4108 = vmatprep.subr.bf16.mxu0 0
    %4109 = vmatpush1.bf16.msra.mxu0 0
    %4110 = vmatprep.subr.bf16.mxu0 0
    %4111 = vmatpush1.bf16.msra.mxu0 0
    %4112 = vmatprep.subr.bf16.mxu0 0
    %4113 = vmatpush1.bf16.msra.mxu0 0
    %4114 = vmatprep.subr.bf16.mxu0 0
    %4115 = vmatpush1.bf16.msra.mxu0 0
    %4116 = vmatprep.subr.bf16.mxu0 0
    %4117 = vmatpush1.bf16.msra.mxu0 0
    %4118 = vmatprep.subr.bf16.mxu0 0
    %4119 = vmatpush1.bf16.msra.mxu0 0
    %4120 = vmatprep.subr.bf16.mxu0 0
    %4121 = vmatpush1.bf16.msra.mxu0 0
    %4122 = vmatprep.subr.bf16.mxu0 0
    %4123 = vmatpush1.bf16.msra.mxu0 0
    %4124 = vmatprep.subr.bf16.mxu0 0
    %4125 = vmatpush1.bf16.msra.mxu0 0
    %4126 = vmatprep.subr.bf16.mxu0 0
    %4127 = vmatpush1.bf16.msra.mxu0 0
    %4128 = vmatprep.subr.bf16.mxu0 0
    %4129 = vmatpush1.bf16.msra.mxu0 0
    %4130 = vmatprep.mubr.bf16.mxu0 0
    %4131 = vmatmul.mubr.bf16.gmra.mrb[0].mxu0 %v2773
    %v4132 = vpop.f32.mrb[0].mxu0
    %v4133 = vadd.f32 0.0, %v4132
    %v4134 = vpop.f32.mrb[0].mxu0
    %v4135 = vpop.f32.mrb[0].mxu0
    %v4136 = vpop.f32.mrb[0].mxu0
    %4137 = vdwg.mxu0
    %4138 = vmatprep.subr.bf16.mxu0 0
    %4139 = vmatpush1.bf16.msra.mxu0 %v3616
    %4140 = vmatprep.subr.bf16.mxu0 0
    %4141 = vmatpush1.bf16.msra.mxu0 0
    %4142 = vmatprep.subr.bf16.mxu0 0
    %4143 = vmatpush1.bf16.msra.mxu0 0
    %4144 = vmatprep.subr.bf16.mxu0 0
    %4145 = vmatpush1.bf16.msra.mxu0 0
    %4146 = vmatprep.subr.bf16.mxu0 0
    %4147 = vmatpush1.bf16.msra.mxu0 0
    %4148 = vmatprep.subr.bf16.mxu0 0
    %4149 = vmatpush1.bf16.msra.mxu0 0
    %4150 = vmatprep.subr.bf16.mxu0 0
    %4151 = vmatpush1.bf16.msra.mxu0 0
    %4152 = vmatprep.subr.bf16.mxu0 0
    %4153 = vmatpush1.bf16.msra.mxu0 0
    %4154 = vmatprep.subr.bf16.mxu0 0
    %4155 = vmatpush1.bf16.msra.mxu0 0
    %4156 = vmatprep.subr.bf16.mxu0 0
    %4157 = vmatpush1.bf16.msra.mxu0 0
    %4158 = vmatprep.subr.bf16.mxu0 0
    %4159 = vmatpush1.bf16.msra.mxu0 0
    %4160 = vmatprep.subr.bf16.mxu0 0
    %4161 = vmatpush1.bf16.msra.mxu0 0
    %4162 = vmatprep.subr.bf16.mxu0 0
    %4163 = vmatpush1.bf16.msra.mxu0 0
    %4164 = vmatprep.subr.bf16.mxu0 0
    %4165 = vmatpush1.bf16.msra.mxu0 0
    %4166 = vmatprep.subr.bf16.mxu0 0
    %4167 = vmatpush1.bf16.msra.mxu0 0
    %4168 = vmatprep.subr.bf16.mxu0 0
    %4169 = vmatpush1.bf16.msra.mxu0 0
    %4170 = vmatprep.mubr.bf16.mxu0 0
    %4171 = vmatmul.mubr.bf16.gmra.mrb[0].mxu0 %v2816
    %v4172 = vpop.f32.mrb[0].mxu0
    %v4173 = vadd.f32 0.0, %v4172
    %v4174 = vpop.f32.mrb[0].mxu0
    %v4175 = vpop.f32.mrb[0].mxu0
    %v4176 = vpop.f32.mrb[0].mxu0
    %4177 = vdwg.mxu0
    %4178 = vmatprep.subr.bf16.mxu0 0
    %4179 = vmatpush1.bf16.msra.mxu0 %v3616
    %4180 = vmatprep.subr.bf16.mxu0 0
    %4181 = vmatpush1.bf16.msra.mxu0 0
    %4182 = vmatprep.subr.bf16.mxu0 0
    %4183 = vmatpush1.bf16.msra.mxu0 0
    %4184 = vmatprep.subr.bf16.mxu0 0
    %4185 = vmatpush1.bf16.msra.mxu0 0
    %4186 = vmatprep.subr.bf16.mxu0 0
    %4187 = vmatpush1.bf16.msra.mxu0 0
    %4188 = vmatprep.subr.bf16.mxu0 0
    %4189 = vmatpush1.bf16.msra.mxu0 0
    %4190 = vmatprep.subr.bf16.mxu0 0
    %4191 = vmatpush1.bf16.msra.mxu0 0
    %4192 = vmatprep.subr.bf16.mxu0 0
    %4193 = vmatpush1.bf16.msra.mxu0 0
    %4194 = vmatprep.subr.bf16.mxu0 0
    %4195 = vmatpush1.bf16.msra.mxu0 0
    %4196 = vmatprep.subr.bf16.mxu0 0
    %4197 = vmatpush1.bf16.msra.mxu0 0
    %4198 = vmatprep.subr.bf16.mxu0 0
    %4199 = vmatpush1.bf16.msra.mxu0 0
    %4200 = vmatprep.subr.bf16.mxu0 0
    %4201 = vmatpush1.bf16.msra.mxu0 0
    %4202 = vmatprep.subr.bf16.mxu0 0
    %4203 = vmatpush1.bf16.msra.mxu0 0
    %4204 = vmatprep.subr.bf16.mxu0 0
    %4205 = vmatpush1.bf16.msra.mxu0 0
    %4206 = vmatprep.subr.bf16.mxu0 0
    %4207 = vmatpush1.bf16.msra.mxu0 0
    %4208 = vmatprep.subr.bf16.mxu0 0
    %4209 = vmatpush1.bf16.msra.mxu0 0
    %4210 = vmatprep.mubr.bf16.mxu0 0
    %4211 = vmatmul.mubr.bf16.gmra.mrb[0].mxu0 %v2859
    %v4212 = vpop.f32.mrb[0].mxu0
    %v4213 = vadd.f32 0.0, %v4212
    %v4214 = vpop.f32.mrb[0].mxu0
    %v4215 = vpop.f32.mrb[0].mxu0
    %v4216 = vpop.f32.mrb[0].mxu0
    %4217 = vdwg.mxu0
    %4218 = vmatprep.subr.bf16.mxu0 0
    %4219 = vmatpush1.bf16.msra.mxu0 %v3616
    %4220 = vmatprep.subr.bf16.mxu0 0
    %4221 = vmatpush1.bf16.msra.mxu0 0
    %4222 = vmatprep.subr.bf16.mxu0 0
    %4223 = vmatpush1.bf16.msra.mxu0 0
    %4224 = vmatprep.subr.bf16.mxu0 0
    %4225 = vmatpush1.bf16.msra.mxu0 0
    %4226 = vmatprep.subr.bf16.mxu0 0
    %4227 = vmatpush1.bf16.msra.mxu0 0
    %4228 = vmatprep.subr.bf16.mxu0 0
    %4229 = vmatpush1.bf16.msra.mxu0 0
    %4230 = vmatprep.subr.bf16.mxu0 0
    %4231 = vmatpush1.bf16.msra.mxu0 0
    %4232 = vmatprep.subr.bf16.mxu0 0
    %4233 = vmatpush1.bf16.msra.mxu0 0
    %4234 = vmatprep.subr.bf16.mxu0 0
    %4235 = vmatpush1.bf16.msra.mxu0 0
    %4236 = vmatprep.subr.bf16.mxu0 0
    %4237 = vmatpush1.bf16.msra.mxu0 0
    %4238 = vmatprep.subr.bf16.mxu0 0
    %4239 = vmatpush1.bf16.msra.mxu0 0
    %4240 = vmatprep.subr.bf16.mxu0 0
    %4241 = vmatpush1.bf16.msra.mxu0 0
    %4242 = vmatprep.subr.bf16.mxu0 0
    %4243 = vmatpush1.bf16.msra.mxu0 0
    %4244 = vmatprep.subr.bf16.mxu0 0
    %4245 = vmatpush1.bf16.msra.mxu0 0
    %4246 = vmatprep.subr.bf16.mxu0 0
    %4247 = vmatpush1.bf16.msra.mxu0 0
    %4248 = vmatprep.subr.bf16.mxu0 0
    %4249 = vmatpush1.bf16.msra.mxu0 0
    %4250 = vmatprep.mubr.bf16.mxu0 0
    %4251 = vmatmul.mubr.bf16.gmra.mrb[0].mxu0 %v2902
    %v4252 = vpop.f32.mrb[0].mxu0
    %v4253 = vadd.f32 0.0, %v4252
    %v4254 = vpop.f32.mrb[0].mxu0
    %v4255 = vpop.f32.mrb[0].mxu0
    %v4256 = vpop.f32.mrb[0].mxu0
    %4257 = vdwg.mxu0
    %v4258 = vmax.f32 %v3593, %v3653
    %v4259 = vmax.f32 %v3594, %v3693
    %v4260 = vmax.f32 %v3595, %v3733
    %v4261 = vmax.f32 %v3596, %v3773
    %v4262 = vmax.f32 %v3597, %v3813
    %v4263 = vmax.f32 %v3598, %v3853
    %v4264 = vmax.f32 %v3599, %v3893
    %v4265 = vmax.f32 %v3600, %v3933
    %v4266 = vmax.f32 %v3601, %v3973
    %v4267 = vmax.f32 %v3602, %v4013
    %v4268 = vmax.f32 %v3603, %v4053
    %v4269 = vmax.f32 %v3604, %v4093
    %v4270 = vmax.f32 %v3605, %v4133
    %v4271 = vmax.f32 %v3606, %v4173
    %v4272 = vmax.f32 %v3607, %v4213
    %v4273 = vmax.f32 %v3608, %v4253
    %v4274 = vcvt.f32.s32.to.zero.pseudo %v4258
    %v4275 = vcvt.f32.s32.to.zero.pseudo %v4259
    %v4276 = vcvt.f32.s32.to.zero.pseudo %v4260
    %v4277 = vcvt.f32.s32.to.zero.pseudo %v4261
    %v4278 = vcvt.f32.s32.to.zero.pseudo %v4262
    %v4279 = vcvt.f32.s32.to.zero.pseudo %v4263
    %v4280 = vcvt.f32.s32.to.zero.pseudo %v4264
    %v4281 = vcvt.f32.s32.to.zero.pseudo %v4265
    %v4282 = vcvt.f32.s32.to.zero.pseudo %v4266
    %v4283 = vcvt.f32.s32.to.zero.pseudo %v4267
    %v4284 = vcvt.f32.s32.to.zero.pseudo %v4268
    %v4285 = vcvt.f32.s32.to.zero.pseudo %v4269
    %v4286 = vcvt.f32.s32.to.zero.pseudo %v4270
    %v4287 = vcvt.f32.s32.to.zero.pseudo %v4271
    %v4288 = vcvt.f32.s32.to.zero.pseudo %v4272
    %v4289 = vcvt.f32.s32.to.zero.pseudo %v4273
    %v4290 = vpack.c.b16 %v4274, %v4274
    %v4291 = vpack.c.b8 %v4290, %v4290
    %v4292 = vpack.c.b16 %v4275, %v4275
    %v4293 = vpack.c.b8 %v4292, %v4292
    %v4294 = vpack.c.b16 %v4276, %v4276
    %v4295 = vpack.c.b8 %v4294, %v4294
    %v4296 = vpack.c.b16 %v4277, %v4277
    %v4297 = vpack.c.b8 %v4296, %v4296
    %v4298 = vpack.c.b16 %v4278, %v4278
    %v4299 = vpack.c.b8 %v4298, %v4298
    %v4300 = vpack.c.b16 %v4279, %v4279
    %v4301 = vpack.c.b8 %v4300, %v4300
    %v4302 = vpack.c.b16 %v4280, %v4280
    %v4303 = vpack.c.b8 %v4302, %v4302
    %v4304 = vpack.c.b16 %v4281, %v4281
    %v4305 = vpack.c.b8 %v4304, %v4304
    %v4306 = vpack.c.b16 %v4282, %v4282
    %v4307 = vpack.c.b8 %v4306, %v4306
    %v4308 = vpack.c.b16 %v4283, %v4283
    %v4309 = vpack.c.b8 %v4308, %v4308
    %v4310 = vpack.c.b16 %v4284, %v4284
    %v4311 = vpack.c.b8 %v4310, %v4310
    %v4312 = vpack.c.b16 %v4285, %v4285
    %v4313 = vpack.c.b8 %v4312, %v4312
    %v4314 = vpack.c.b16 %v4286, %v4286
    %v4315 = vpack.c.b8 %v4314, %v4314
    %v4316 = vpack.c.b16 %v4287, %v4287
    %v4317 = vpack.c.b8 %v4316, %v4316
    %v4318 = vpack.c.b16 %v4288, %v4288
    %v4319 = vpack.c.b8 %v4318, %v4318
    %v4320 = vpack.c.b16 %v4289, %v4289
    %v4321 = vpack.c.b8 %v4320, %v4320
    %vm4322 = vcmask 58368
    %4323 = vst.msk [vmem:[#allocation8] sm:$0x3] %vm4322, %v4291
    %4324 = vst.msk [vmem:[#allocation8 + $0x2] sm:$0x3] %vm4322, %v4293
    %4325 = vst.msk [vmem:[#allocation8 + $0x4] sm:$0x3] %vm4322, %v4295
    %4326 = vst.msk [vmem:[#allocation8 + $0x6] sm:$0x3] %vm4322, %v4297
    %4327 = vst.msk [vmem:[#allocation8 + $0x8] sm:$0x3] %vm4322, %v4299
    %4328 = vst.msk [vmem:[#allocation8 + $0xa] sm:$0x3] %vm4322, %v4301
    %4329 = vst.msk [vmem:[#allocation8 + $0xc] sm:$0x3] %vm4322, %v4303
    %4330 = vst.msk [vmem:[#allocation8 + $0xe] sm:$0x3] %vm4322, %v4305
    %4331 = vst.msk [vmem:[#allocation8 + $0x10] sm:$0x3] %vm4322, %v4307
    %4332 = vst.msk [vmem:[#allocation8 + $0x12] sm:$0x3] %vm4322, %v4309
    %4333 = vst.msk [vmem:[#allocation8 + $0x14] sm:$0x3] %vm4322, %v4311
    %4334 = vst.msk [vmem:[#allocation8 + $0x16] sm:$0x3] %vm4322, %v4313
    %4335 = vst.msk [vmem:[#allocation8 + $0x18] sm:$0x3] %vm4322, %v4315
    %4336 = vst.msk [vmem:[#allocation8 + $0x1a] sm:$0x3] %vm4322, %v4317
    %4337 = vst.msk [vmem:[#allocation8 + $0x1c] sm:$0x3] %vm4322, %v4319
    %4338 = vst.msk [vmem:[#allocation8 + $0x1e] sm:$0x3] %vm4322, %v4321
    // Predicated region
    $region26: #{quantized_maxpool_3x3_s2_p1.1} parent=1 // pred_check
      _
    $region27: #{quantized_maxpool_3x3_s2_p1.1} parent=1 // pred_check_branch
      %4340 = sbr.rel (0) target = $region29
    $region28: #{quantized_maxpool_3x3_s2_p1.1} parent=1 // pred_region
      %s4342 = ssub.s32 512, 512
      %4343 = vsyncadd [#allocation4], %s4342
      %s4344 = sshll.u32 [#allocation8], 4
      %s4345 = int_to_ptr.vmem [resolvable:$true] %s4344
      %4350 = dma.vmem_to_hbm [thread:$0]  %s4345, 512, %s3, [#allocation4], 32, 32, 2
    $region29: #{quantized_maxpool_3x3_s2_p1.1} parent=1 // pred_fallthru
      _
    // Predicated region
    $region30: #{quantized_maxpool_3x3_s2_p1.1} parent=1 // pred_check
      _
    $region31: #{quantized_maxpool_3x3_s2_p1.1} parent=1 // pred_check_branch
      %4352 = sbr.rel (0) target = $region33
    $region32: #{quantized_maxpool_3x3_s2_p1.1} parent=1 // pred_region
      %4353 = dma.done [#allocation4], 512
    $region33: #{quantized_maxpool_3x3_s2_p1.1} parent=1 // pred_fallthru
      _
    %4354 = vsyncpa [#allocation3], 1
    %4355 = vsyncpa [#allocation6], 1
    %4356 = vsyncpa [#allocation4], 1

</llo_original>
